<compile_context>
chip_gen: v7x
topology: tpu7x:2x2x1
jax: 0.10.0
libtpu: 0.0.40
codegen_flags: <defaults>
</compile_context>

<pallas_src>
import jax
import jax.numpy as jnp
from jax.experimental import pallas as pl
from jax.experimental.pallas import tpu as pltpu


# Logical ZolfModel layer dims and which layers are followed by ReLU.
_LAYER_DIMS = [(512, 1000), (1000, 1000), (1000, 1000), (1000, 1000),
               (1000, 200), (200, 2)]
_APPLY_RELU = [True, True, True, True, True, False]
_N_LAYERS = len(_LAYER_DIMS)


def _pad_to(n, m):
    return ((n + m - 1) // m) * m


_PADDED_DIMS = [(_pad_to(k, 128), _pad_to(n, 128)) for (k, n) in _LAYER_DIMS]
_IN_PAD = _PADDED_DIMS[0][0]          # 512
_OUT_PAD = _PADDED_DIMS[-1][1]        # 128
_OUT_LOGICAL = _LAYER_DIMS[-1][1]     # 2
_BIAS_ROWS = _pad_to(_N_LAYERS, 8)    # 8 (sublane-aligned)
_BIAS_COLS = max(n for (_, n) in _PADDED_DIMS)   # 1024 (lane-aligned)


def _fused_mlp_kernel(x_ref, *rest):
    """rest = (w_hbm_0..5, bias_all, o_ref, wbuf_0..5, sems)."""
    n = _N_LAYERS
    w_hbm = rest[0:n]                   # raw HBM refs (memory_space=pl.ANY)
    b_ref = rest[n]                     # (8, 1024) f32 in VMEM, row i = bias_i
    o_ref = rest[n + 1]                 # (B_pad, 128) f32 output
    w_bufs = rest[n + 2:2 * n + 2]      # VMEM scratch, one per weight
    sems = rest[2 * n + 2]              # DMA semaphores, shape (6,)

    # Pre-issue ALL weight DMAs so HBM keeps streaming across layers.
    copies = []
    for i in range(n):
        cp = pltpu.make_async_copy(w_hbm[i], w_bufs[i], sems.at[i])
        cp.start()
        copies.append(cp)

    h = x_ref[...]                      # (B_pad, 512) bf16
    for i in range(n):
        n_pad = _PADDED_DIMS[i][1]
        copies[i].wait()                # only block on THIS layer's weights
        acc = jnp.dot(h.astype(jnp.bfloat16), w_bufs[i][...],
                      preferred_element_type=jnp.float32)
        acc = acc + b_ref[i:i + 1, :n_pad]   # (1, n_pad) f32 broadcasts over B
        if _APPLY_RELU[i]:
            acc = jnp.maximum(acc, 0.0)
        h = acc                         # padded lanes stay exactly 0
    o_ref[...] = h.astype(o_ref.dtype)


@jax.jit
def zolf_forward(x, weights, bias_all):
    B = x.shape[0]
    B_pad = max(8, _pad_to(B, 8))       # sublane-aligned batch

    x_p = x.astype(jnp.bfloat16)
    if B_pad != B:
        x_p = jnp.zeros((B_pad, _IN_PAD), jnp.bfloat16).at[:B, :].set(x_p)

    in_specs = [pl.BlockSpec((B_pad, _IN_PAD), lambda: (0, 0))]
    # Weights: leave in HBM, DMA manually inside the kernel.
    in_specs += [pl.BlockSpec(memory_space=pl.ANY) for _ in range(_N_LAYERS)]
    # All biases in one small lane/sublane-aligned block -> one prologue DMA.
    in_specs += [pl.BlockSpec((_BIAS_ROWS, _BIAS_COLS), lambda: (0, 0))]

    scratch_shapes = [pltpu.VMEM((k_pad, n_pad), jnp.bfloat16)
                      for (k_pad, n_pad) in _PADDED_DIMS]
    scratch_shapes.append(pltpu.SemaphoreType.DMA((_N_LAYERS,)))

    out_padded = pl.pallas_call(
        _fused_mlp_kernel,
        out_shape=jax.ShapeDtypeStruct((B_pad, _OUT_PAD), jnp.float32),
        in_specs=in_specs,
        out_specs=pl.BlockSpec((B_pad, _OUT_PAD), lambda: (0, 0)),
        scratch_shapes=scratch_shapes,
        compiler_params=pltpu.CompilerParams(
            vmem_limit_bytes=32 * 1024 * 1024),
    )(x_p, *weights, bias_all)
    return out_padded[:B, :_OUT_LOGICAL]


# ---------------------------------------------------------------------------
# Parameter construction (deterministic, synthetic — mirrors nn.Linear init).
# Weights stored as (in, out) = transpose of PyTorch's (out, in), zero-padded
# to lane multiples of 128 and cast to bf16.  Biases packed into one padded
# f32 block of shape (8, 1024): row i holds layer i's bias.
# ---------------------------------------------------------------------------
def init_params(key):
    weights = []
    bias_all = jnp.zeros((_BIAS_ROWS, _BIAS_COLS), jnp.float32)
    for i, ((fan_in, fan_out), (k_pad, n_pad)) in enumerate(
            zip(_LAYER_DIMS, _PADDED_DIMS)):
        key, kw, kb = jax.random.split(key, 3)
        bound = 1.0 / (fan_in ** 0.5)
        w = jax.random.uniform(kw, (fan_in, fan_out), jnp.float32, -bound, bound)
        b = jax.random.uniform(kb, (fan_out,), jnp.float32, -bound, bound)
        w_pad = jnp.zeros((k_pad, n_pad), jnp.float32).at[:fan_in, :fan_out].set(w)
        weights.append(w_pad.astype(jnp.bfloat16))
        bias_all = bias_all.at[i, :fan_out].set(b)
    return weights, bias_all


if __name__ == "__main__":
    key = jax.random.PRNGKey(0)
    key, kx = jax.random.split(key)

    batch = 8
    x = jax.random.normal(kx, (batch, 512), jnp.float32)
    weights, bias_all = init_params(key)

    out = zolf_forward(x, weights, bias_all)
    out = jax.block_until_ready(out)
    assert out.shape == (batch, _OUT_LOGICAL) and out.dtype == jnp.float32

    # Plain-JAX reference with the SAME dtype strategy (bf16 weights/inputs,
    # f32 accumulation) so the comparison isolates the Pallas kernel math.
    ref = x.astype(jnp.bfloat16)
    for i, (w, relu) in enumerate(zip(weights, _APPLY_RELU)):
        n_pad = _PADDED_DIMS[i][1]
        ref = jnp.dot(ref.astype(jnp.bfloat16), w,
                      preferred_element_type=jnp.float32)
        ref = ref + bias_all[i:i + 1, :n_pad]
        if relu:
            ref = jnp.maximum(ref, 0.0)
    ref = ref[:, :_OUT_LOGICAL]
    assert jnp.allclose(out, ref, atol=1e-3, rtol=1e-3)

    print("KERNEL_OK")
</pallas_src>

<mosaic_0001>
module attributes {stable_mosaic.version = 11 : i64} {
  func.func @_fused_mlp_kernel(%arg0: memref<8x512xbf16, #tpu.memory_space<vmem>>, %arg1: memref<512x1024xbf16, #tpu.memory_space<any>>, %arg2: memref<1024x1024xbf16, #tpu.memory_space<any>>, %arg3: memref<1024x1024xbf16, #tpu.memory_space<any>>, %arg4: memref<1024x1024xbf16, #tpu.memory_space<any>>, %arg5: memref<1024x256xbf16, #tpu.memory_space<any>>, %arg6: memref<256x128xbf16, #tpu.memory_space<any>>, %arg7: memref<8x1024xf32, #tpu.memory_space<vmem>>, %arg8: memref<8x128xf32, #tpu.memory_space<vmem>>, %arg9: memref<512x1024xbf16, #tpu.memory_space<vmem>>, %arg10: memref<1024x1024xbf16, #tpu.memory_space<vmem>>, %arg11: memref<1024x1024xbf16, #tpu.memory_space<vmem>>, %arg12: memref<1024x1024xbf16, #tpu.memory_space<vmem>>, %arg13: memref<1024x256xbf16, #tpu.memory_space<vmem>>, %arg14: memref<256x128xbf16, #tpu.memory_space<vmem>>, %arg15: memref<6x!tpu.dma_semaphore, #tpu.memory_space<semaphore_mem>>) attributes {dimension_semantics = [], scalar_prefetch = 0 : i64, scratch_operands = 7 : i64, tpu.core_type = #tpu.core_type<tc>} {
    %c0_i32 = arith.constant 0 : i32
    %0 = tpu.memref_slice %arg15[%c0_i32] : memref<6x!tpu.dma_semaphore, #tpu.memory_space<semaphore_mem>> -> memref<1x!tpu.dma_semaphore, #tpu.memory_space<semaphore_mem>>
    %1 = tpu.memref_squeeze %0 : memref<1x!tpu.dma_semaphore, #tpu.memory_space<semaphore_mem>> -> memref<!tpu.dma_semaphore, #tpu.memory_space<semaphore_mem>>
    tpu.enqueue_dma source(%arg1 : memref<512x1024xbf16, #tpu.memory_space<any>>) target(%arg9 : memref<512x1024xbf16, #tpu.memory_space<vmem>>) target_semaphore(%1 : memref<!tpu.dma_semaphore, #tpu.memory_space<semaphore_mem>>)
    %c1_i32 = arith.constant 1 : i32
    %2 = tpu.memref_slice %arg15[%c1_i32] : memref<6x!tpu.dma_semaphore, #tpu.memory_space<semaphore_mem>> -> memref<1x!tpu.dma_semaphore, #tpu.memory_space<semaphore_mem>>
    %3 = tpu.memref_squeeze %2 : memref<1x!tpu.dma_semaphore, #tpu.memory_space<semaphore_mem>> -> memref<!tpu.dma_semaphore, #tpu.memory_space<semaphore_mem>>
    tpu.enqueue_dma source(%arg2 : memref<1024x1024xbf16, #tpu.memory_space<any>>) target(%arg10 : memref<1024x1024xbf16, #tpu.memory_space<vmem>>) target_semaphore(%3 : memref<!tpu.dma_semaphore, #tpu.memory_space<semaphore_mem>>)
    %c2_i32 = arith.constant 2 : i32
    %4 = tpu.memref_slice %arg15[%c2_i32] : memref<6x!tpu.dma_semaphore, #tpu.memory_space<semaphore_mem>> -> memref<1x!tpu.dma_semaphore, #tpu.memory_space<semaphore_mem>>
    %5 = tpu.memref_squeeze %4 : memref<1x!tpu.dma_semaphore, #tpu.memory_space<semaphore_mem>> -> memref<!tpu.dma_semaphore, #tpu.memory_space<semaphore_mem>>
    tpu.enqueue_dma source(%arg3 : memref<1024x1024xbf16, #tpu.memory_space<any>>) target(%arg11 : memref<1024x1024xbf16, #tpu.memory_space<vmem>>) target_semaphore(%5 : memref<!tpu.dma_semaphore, #tpu.memory_space<semaphore_mem>>)
    %c3_i32 = arith.constant 3 : i32
    %6 = tpu.memref_slice %arg15[%c3_i32] : memref<6x!tpu.dma_semaphore, #tpu.memory_space<semaphore_mem>> -> memref<1x!tpu.dma_semaphore, #tpu.memory_space<semaphore_mem>>
    %7 = tpu.memref_squeeze %6 : memref<1x!tpu.dma_semaphore, #tpu.memory_space<semaphore_mem>> -> memref<!tpu.dma_semaphore, #tpu.memory_space<semaphore_mem>>
    tpu.enqueue_dma source(%arg4 : memref<1024x1024xbf16, #tpu.memory_space<any>>) target(%arg12 : memref<1024x1024xbf16, #tpu.memory_space<vmem>>) target_semaphore(%7 : memref<!tpu.dma_semaphore, #tpu.memory_space<semaphore_mem>>)
    %c4_i32 = arith.constant 4 : i32
    %8 = tpu.memref_slice %arg15[%c4_i32] : memref<6x!tpu.dma_semaphore, #tpu.memory_space<semaphore_mem>> -> memref<1x!tpu.dma_semaphore, #tpu.memory_space<semaphore_mem>>
    %9 = tpu.memref_squeeze %8 : memref<1x!tpu.dma_semaphore, #tpu.memory_space<semaphore_mem>> -> memref<!tpu.dma_semaphore, #tpu.memory_space<semaphore_mem>>
    tpu.enqueue_dma source(%arg5 : memref<1024x256xbf16, #tpu.memory_space<any>>) target(%arg13 : memref<1024x256xbf16, #tpu.memory_space<vmem>>) target_semaphore(%9 : memref<!tpu.dma_semaphore, #tpu.memory_space<semaphore_mem>>)
    %c5_i32 = arith.constant 5 : i32
    %10 = tpu.memref_slice %arg15[%c5_i32] : memref<6x!tpu.dma_semaphore, #tpu.memory_space<semaphore_mem>> -> memref<1x!tpu.dma_semaphore, #tpu.memory_space<semaphore_mem>>
    %11 = tpu.memref_squeeze %10 : memref<1x!tpu.dma_semaphore, #tpu.memory_space<semaphore_mem>> -> memref<!tpu.dma_semaphore, #tpu.memory_space<semaphore_mem>>
    tpu.enqueue_dma source(%arg6 : memref<256x128xbf16, #tpu.memory_space<any>>) target(%arg14 : memref<256x128xbf16, #tpu.memory_space<vmem>>) target_semaphore(%11 : memref<!tpu.dma_semaphore, #tpu.memory_space<semaphore_mem>>)
    %c0 = arith.constant 0 : index
    %c0_0 = arith.constant 0 : index
    %12 = vector.load %arg0[%c0, %c0_0] : memref<8x512xbf16, #tpu.memory_space<vmem>>, vector<8x512xbf16>
    %c0_i32_1 = arith.constant 0 : i32
    %13 = tpu.memref_slice %arg15[%c0_i32_1] : memref<6x!tpu.dma_semaphore, #tpu.memory_space<semaphore_mem>> -> memref<1x!tpu.dma_semaphore, #tpu.memory_space<semaphore_mem>>
    %14 = tpu.memref_squeeze %13 : memref<1x!tpu.dma_semaphore, #tpu.memory_space<semaphore_mem>> -> memref<!tpu.dma_semaphore, #tpu.memory_space<semaphore_mem>>
    tpu.wait_dma2 semaphore(%14 : memref<!tpu.dma_semaphore, #tpu.memory_space<semaphore_mem>>) src(%arg1 : memref<512x1024xbf16, #tpu.memory_space<any>>) dst(%arg9 : memref<512x1024xbf16, #tpu.memory_space<vmem>>)
    %c0_2 = arith.constant 0 : index
    %c0_3 = arith.constant 0 : index
    %15 = vector.load %arg9[%c0_2, %c0_3] : memref<512x1024xbf16, #tpu.memory_space<vmem>>, vector<512x1024xbf16>
    %cst = arith.constant dense<0.000000e+00> : vector<8x1024xf32>
    %16 = tpu.matmul %12, %15, %cst {dimension_numbers = #tpu.dot_dimension_numbers<[1], [0], [0], [1], [0, 0, 1, 1], [], []>} : vector<8x512xbf16>, vector<512x1024xbf16>, vector<8x1024xf32> -> vector<8x1024xf32>
    %c0_4 = arith.constant 0 : index
    %c0_5 = arith.constant 0 : index
    %17 = vector.load %arg7[%c0_4, %c0_5] : memref<8x1024xf32, #tpu.memory_space<vmem>>, vector<1x1024xf32>
    %18 = vector.broadcast %17 : vector<1x1024xf32> to vector<8x1024xf32>
    %19 = arith.addf %16, %18 : vector<8x1024xf32>
    %cst_6 = arith.constant 0.000000e+00 : f32
    %20 = vector.broadcast %cst_6 : f32 to vector<8x1024xf32>
    %21 = arith.maximumf %19, %20 : vector<8x1024xf32>
    %c1_i32_7 = arith.constant 1 : i32
    %22 = tpu.memref_slice %arg15[%c1_i32_7] : memref<6x!tpu.dma_semaphore, #tpu.memory_space<semaphore_mem>> -> memref<1x!tpu.dma_semaphore, #tpu.memory_space<semaphore_mem>>
    %23 = tpu.memref_squeeze %22 : memref<1x!tpu.dma_semaphore, #tpu.memory_space<semaphore_mem>> -> memref<!tpu.dma_semaphore, #tpu.memory_space<semaphore_mem>>
    tpu.wait_dma2 semaphore(%23 : memref<!tpu.dma_semaphore, #tpu.memory_space<semaphore_mem>>) src(%arg2 : memref<1024x1024xbf16, #tpu.memory_space<any>>) dst(%arg10 : memref<1024x1024xbf16, #tpu.memory_space<vmem>>)
    %24 = arith.truncf %21 : vector<8x1024xf32> to vector<8x1024xbf16>
    %c0_8 = arith.constant 0 : index
    %c0_9 = arith.constant 0 : index
    %25 = vector.load %arg10[%c0_8, %c0_9] : memref<1024x1024xbf16, #tpu.memory_space<vmem>>, vector<1024x1024xbf16>
    %cst_10 = arith.constant dense<0.000000e+00> : vector<8x1024xf32>
    %26 = tpu.matmul %24, %25, %cst_10 {dimension_numbers = #tpu.dot_dimension_numbers<[1], [0], [0], [1], [0, 0, 1, 1], [], []>} : vector<8x1024xbf16>, vector<1024x1024xbf16>, vector<8x1024xf32> -> vector<8x1024xf32>
    %c1 = arith.constant 1 : index
    %c0_11 = arith.constant 0 : index
    %27 = vector.load %arg7[%c1, %c0_11] : memref<8x1024xf32, #tpu.memory_space<vmem>>, vector<1x1024xf32>
    %28 = vector.broadcast %27 : vector<1x1024xf32> to vector<8x1024xf32>
    %29 = arith.addf %26, %28 : vector<8x1024xf32>
    %cst_12 = arith.constant 0.000000e+00 : f32
    %30 = vector.broadcast %cst_12 : f32 to vector<8x1024xf32>
    %31 = arith.maximumf %29, %30 : vector<8x1024xf32>
    %c2_i32_13 = arith.constant 2 : i32
    %32 = tpu.memref_slice %arg15[%c2_i32_13] : memref<6x!tpu.dma_semaphore, #tpu.memory_space<semaphore_mem>> -> memref<1x!tpu.dma_semaphore, #tpu.memory_space<semaphore_mem>>
    %33 = tpu.memref_squeeze %32 : memref<1x!tpu.dma_semaphore, #tpu.memory_space<semaphore_mem>> -> memref<!tpu.dma_semaphore, #tpu.memory_space<semaphore_mem>>
    tpu.wait_dma2 semaphore(%33 : memref<!tpu.dma_semaphore, #tpu.memory_space<semaphore_mem>>) src(%arg3 : memref<1024x1024xbf16, #tpu.memory_space<any>>) dst(%arg11 : memref<1024x1024xbf16, #tpu.memory_space<vmem>>)
    %34 = arith.truncf %31 : vector<8x1024xf32> to vector<8x1024xbf16>
    %c0_14 = arith.constant 0 : index
    %c0_15 = arith.constant 0 : index
    %35 = vector.load %arg11[%c0_14, %c0_15] : memref<1024x1024xbf16, #tpu.memory_space<vmem>>, vector<1024x1024xbf16>
    %cst_16 = arith.constant dense<0.000000e+00> : vector<8x1024xf32>
    %36 = tpu.matmul %34, %35, %cst_16 {dimension_numbers = #tpu.dot_dimension_numbers<[1], [0], [0], [1], [0, 0, 1, 1], [], []>} : vector<8x1024xbf16>, vector<1024x1024xbf16>, vector<8x1024xf32> -> vector<8x1024xf32>
    %c2 = arith.constant 2 : index
    %c0_17 = arith.constant 0 : index
    %37 = vector.load %arg7[%c2, %c0_17] : memref<8x1024xf32, #tpu.memory_space<vmem>>, vector<1x1024xf32>
    %38 = vector.broadcast %37 : vector<1x1024xf32> to vector<8x1024xf32>
    %39 = arith.addf %36, %38 : vector<8x1024xf32>
    %cst_18 = arith.constant 0.000000e+00 : f32
    %40 = vector.broadcast %cst_18 : f32 to vector<8x1024xf32>
    %41 = arith.maximumf %39, %40 : vector<8x1024xf32>
    %c3_i32_19 = arith.constant 3 : i32
    %42 = tpu.memref_slice %arg15[%c3_i32_19] : memref<6x!tpu.dma_semaphore, #tpu.memory_space<semaphore_mem>> -> memref<1x!tpu.dma_semaphore, #tpu.memory_space<semaphore_mem>>
    %43 = tpu.memref_squeeze %42 : memref<1x!tpu.dma_semaphore, #tpu.memory_space<semaphore_mem>> -> memref<!tpu.dma_semaphore, #tpu.memory_space<semaphore_mem>>
    tpu.wait_dma2 semaphore(%43 : memref<!tpu.dma_semaphore, #tpu.memory_space<semaphore_mem>>) src(%arg4 : memref<1024x1024xbf16, #tpu.memory_space<any>>) dst(%arg12 : memref<1024x1024xbf16, #tpu.memory_space<vmem>>)
    %44 = arith.truncf %41 : vector<8x1024xf32> to vector<8x1024xbf16>
    %c0_20 = arith.constant 0 : index
    %c0_21 = arith.constant 0 : index
    %45 = vector.load %arg12[%c0_20, %c0_21] : memref<1024x1024xbf16, #tpu.memory_space<vmem>>, vector<1024x1024xbf16>
    %cst_22 = arith.constant dense<0.000000e+00> : vector<8x1024xf32>
    %46 = tpu.matmul %44, %45, %cst_22 {dimension_numbers = #tpu.dot_dimension_numbers<[1], [0], [0], [1], [0, 0, 1, 1], [], []>} : vector<8x1024xbf16>, vector<1024x1024xbf16>, vector<8x1024xf32> -> vector<8x1024xf32>
    %c3 = arith.constant 3 : index
    %c0_23 = arith.constant 0 : index
    %47 = vector.load %arg7[%c3, %c0_23] : memref<8x1024xf32, #tpu.memory_space<vmem>>, vector<1x1024xf32>
    %48 = vector.broadcast %47 : vector<1x1024xf32> to vector<8x1024xf32>
    %49 = arith.addf %46, %48 : vector<8x1024xf32>
    %cst_24 = arith.constant 0.000000e+00 : f32
    %50 = vector.broadcast %cst_24 : f32 to vector<8x1024xf32>
    %51 = arith.maximumf %49, %50 : vector<8x1024xf32>
    %c4_i32_25 = arith.constant 4 : i32
    %52 = tpu.memref_slice %arg15[%c4_i32_25] : memref<6x!tpu.dma_semaphore, #tpu.memory_space<semaphore_mem>> -> memref<1x!tpu.dma_semaphore, #tpu.memory_space<semaphore_mem>>
    %53 = tpu.memref_squeeze %52 : memref<1x!tpu.dma_semaphore, #tpu.memory_space<semaphore_mem>> -> memref<!tpu.dma_semaphore, #tpu.memory_space<semaphore_mem>>
    tpu.wait_dma2 semaphore(%53 : memref<!tpu.dma_semaphore, #tpu.memory_space<semaphore_mem>>) src(%arg5 : memref<1024x256xbf16, #tpu.memory_space<any>>) dst(%arg13 : memref<1024x256xbf16, #tpu.memory_space<vmem>>)
    %54 = arith.truncf %51 : vector<8x1024xf32> to vector<8x1024xbf16>
    %c0_26 = arith.constant 0 : index
    %c0_27 = arith.constant 0 : index
    %55 = vector.load %arg13[%c0_26, %c0_27] : memref<1024x256xbf16, #tpu.memory_space<vmem>>, vector<1024x256xbf16>
    %cst_28 = arith.constant dense<0.000000e+00> : vector<8x256xf32>
    %56 = tpu.matmul %54, %55, %cst_28 {dimension_numbers = #tpu.dot_dimension_numbers<[1], [0], [0], [1], [0, 0, 1, 1], [], []>} : vector<8x1024xbf16>, vector<1024x256xbf16>, vector<8x256xf32> -> vector<8x256xf32>
    %c4 = arith.constant 4 : index
    %c0_29 = arith.constant 0 : index
    %57 = vector.load %arg7[%c4, %c0_29] : memref<8x1024xf32, #tpu.memory_space<vmem>>, vector<1x256xf32>
    %58 = vector.broadcast %57 : vector<1x256xf32> to vector<8x256xf32>
    %59 = arith.addf %56, %58 : vector<8x256xf32>
    %cst_30 = arith.constant 0.000000e+00 : f32
    %60 = vector.broadcast %cst_30 : f32 to vector<8x256xf32>
    %61 = arith.maximumf %59, %60 : vector<8x256xf32>
    %c5_i32_31 = arith.constant 5 : i32
    %62 = tpu.memref_slice %arg15[%c5_i32_31] : memref<6x!tpu.dma_semaphore, #tpu.memory_space<semaphore_mem>> -> memref<1x!tpu.dma_semaphore, #tpu.memory_space<semaphore_mem>>
    %63 = tpu.memref_squeeze %62 : memref<1x!tpu.dma_semaphore, #tpu.memory_space<semaphore_mem>> -> memref<!tpu.dma_semaphore, #tpu.memory_space<semaphore_mem>>
    tpu.wait_dma2 semaphore(%63 : memref<!tpu.dma_semaphore, #tpu.memory_space<semaphore_mem>>) src(%arg6 : memref<256x128xbf16, #tpu.memory_space<any>>) dst(%arg14 : memref<256x128xbf16, #tpu.memory_space<vmem>>)
    %64 = arith.truncf %61 : vector<8x256xf32> to vector<8x256xbf16>
    %c0_32 = arith.constant 0 : index
    %c0_33 = arith.constant 0 : index
    %65 = vector.load %arg14[%c0_32, %c0_33] : memref<256x128xbf16, #tpu.memory_space<vmem>>, vector<256x128xbf16>
    %cst_34 = arith.constant dense<0.000000e+00> : vector<8x128xf32>
    %66 = tpu.matmul %64, %65, %cst_34 {dimension_numbers = #tpu.dot_dimension_numbers<[1], [0], [0], [1], [0, 0, 1, 1], [], []>} : vector<8x256xbf16>, vector<256x128xbf16>, vector<8x128xf32> -> vector<8x128xf32>
    %c5 = arith.constant 5 : index
    %c0_35 = arith.constant 0 : index
    %67 = vector.load %arg7[%c5, %c0_35] : memref<8x1024xf32, #tpu.memory_space<vmem>>, vector<1x128xf32>
    %68 = vector.broadcast %67 : vector<1x128xf32> to vector<8x128xf32>
    %69 = arith.addf %66, %68 : vector<8x128xf32>
    %c0_36 = arith.constant 0 : index
    %c0_37 = arith.constant 0 : index
    %70 = vector.load %arg8[%c0_36, %c0_37] : memref<8x128xf32, #tpu.memory_space<vmem>>, vector<8x128xf32>
    tpu.vector_store %arg8[%c0_36, %c0_37], %69 {strides = array<i32>} : memref<8x128xf32, #tpu.memory_space<vmem>>, vector<8x128xf32>,
    return
  }
}

</mosaic_0001>

<llo_original>
// kernel: zolf_forward.1
$region0: #{zolf_forward.1}
  #allocation0 [shape = 'u32[]', space=smem, size = 0x4, offset = 0x4, fixed_abs, tag = 'smem constant byte address 0x4 - core index']
  #allocation1 [shape = 'u32[144,128]{1,0:T(1,128)}', space=vmem, size = 0x12000, scoped, tag = 'internal scratch']
  #allocation2 [shape = 'bf16[512,1024]{1,0:T(16,128)(2,1)}', space=vmem, size = 0x100000, scoped, tag = 'scratch operand']
  #allocation3 [shape = 'bf16[1024,1024]{1,0:T(16,128)(2,1)}', space=vmem, size = 0x200000, scoped, tag = 'scratch operand']
  #allocation4 [shape = 'bf16[1024,1024]{1,0:T(16,128)(2,1)}', space=vmem, size = 0x200000, scoped, tag = 'scratch operand']
  #allocation5 [shape = 'bf16[1024,1024]{1,0:T(16,128)(2,1)}', space=vmem, size = 0x200000, scoped, tag = 'scratch operand']
  #allocation6 [shape = 'bf16[1024,256]{1,0:T(16,128)(2,1)}', space=vmem, size = 0x80000, scoped, tag = 'scratch operand']
  #allocation7 [shape = 'bf16[256,128]{1,0:T(16,128)(2,1)}', space=vmem, size = 0x10000, scoped, tag = 'scratch operand']
  #allocation8 [shape = 's32[6]{0}', space=sflag, size = 0x18, scoped, tag = 'scratch operand']
  #allocation11 [shape = 's32[]', space=sflag, size = 0x4, offset = 0, fixed_abs, tag = 'sflag constant byte address 0x0 - dummy sync flag']
  #allocation13 [shape = 's32[]', space=sflag, size = 0x4, offset = 0, fixed_abs, tag = 'sflag constant byte address 0x0 - dummy sync flag']
  #allocation15 [shape = 's32[]', space=sflag, size = 0x4, offset = 0, fixed_abs, tag = 'sflag constant byte address 0x0 - dummy sync flag']
  #allocation17 [shape = 's32[]', space=sflag, size = 0x4, offset = 0, fixed_abs, tag = 'sflag constant byte address 0x0 - dummy sync flag']
  #allocation19 [shape = 's32[]', space=sflag, size = 0x4, offset = 0, fixed_abs, tag = 'sflag constant byte address 0x0 - dummy sync flag']
  #allocation21 [shape = 's32[]', space=sflag, size = 0x4, offset = 0, fixed_abs, tag = 'sflag constant byte address 0x0 - dummy sync flag']
  #allocation22 [shape = 's32[]', space=sflag, size = 0x4, offset = 0, fixed_abs, tag = 'sflag constant byte address 0x0 - dummy sync flag']
  #allocation23 [shape = 'u32[]', space=smem, size = 0x4, offset = 0x44, fixed_abs, tag = 'smem constant byte address 0x44 - assertion arg 0']
  #allocation24 [shape = 'u32[]', space=smem, size = 0x4, offset = 0x48, fixed_abs, tag = 'smem constant byte address 0x48 - assertion arg 1']
  %s0 = inlined_call_operand.vmem [shape: bf16[8,512], index: 0, kind: input, shape index: {}]
  %s1 = inlined_call_operand.hbm [shape: bf16[512,1024], index: 1, kind: input, shape index: {}]
  %s2 = inlined_call_operand.hbm [shape: bf16[1024,1024], index: 2, kind: input, shape index: {}]
  %s3 = inlined_call_operand.hbm [shape: bf16[1024,1024], index: 3, kind: input, shape index: {}]
  %s4 = inlined_call_operand.hbm [shape: bf16[1024,1024], index: 4, kind: input, shape index: {}]
  %s5 = inlined_call_operand.hbm [shape: bf16[1024,256], index: 5, kind: input, shape index: {}]
  %s6 = inlined_call_operand.hbm [shape: bf16[256,128], index: 6, kind: input, shape index: {}]
  %s7 = inlined_call_operand.hbm [shape: f32[8,1024], index: 7, kind: input, shape index: {}]
  %s8 = inlined_call_operand.vmem [shape: f32[8,128], index: 8, kind: output, shape index: {}]
  %s9 = sld [smem:[#allocation0]]
  $region26: #{zolf_forward.1} parent=0
    _
  %s11 = ssub.s32 1, %s9
  %s12 = scalar_select 0, %s11, %s9
  $region1: #{zolf_forward.1} parent=0
    #allocation9 [shape = 'u8[32768]{0}', space=vmem, size = 0x8000, scoped, tag = 'input window, operand 7, single buffered']
    #allocation10 [shape = 's32[1]{0}', space=sflag, size = 0x4, scoped, tag = 'scoped memory for zolf_forward.1']
    #allocation12 [shape = 'u32[9]{0}', space=smem, size = 0x24, scoped, tag = 'DMA stride descriptor']
    #allocation14 [shape = 'u32[9]{0}', space=smem, size = 0x24, scoped, tag = 'DMA stride descriptor']
    #allocation16 [shape = 'u32[9]{0}', space=smem, size = 0x24, scoped, tag = 'DMA stride descriptor']
    #allocation18 [shape = 'u32[9]{0}', space=smem, size = 0x24, scoped, tag = 'DMA stride descriptor']
    #allocation20 [shape = 'u32[9]{0}', space=smem, size = 0x24, scoped, tag = 'DMA stride descriptor']
    %13 = vsyncpa [#allocation10], 0
    // Predicated region
    $region2: #{zolf_forward.1} parent=1 // pred_check
      _
    $region3: #{zolf_forward.1} parent=1 // pred_check_branch
      %15 = sbr.rel (0) target = $region5
    $region4: #{zolf_forward.1} parent=1 // pred_region
      _
    $region5: #{zolf_forward.1} parent=1 // pred_fallthru
      _
    // Predicated region
    $region6: #{zolf_forward.1} parent=1 // pred_check
      _
    $region7: #{zolf_forward.1} parent=1 // pred_check_branch
      %17 = sbr.rel (0) target = $region9
    $region8: #{zolf_forward.1} parent=1 // pred_region
      %s19 = ssub.s32 1024, 1024
      %20 = vsyncadd [#allocation10], %s19
      %s22 = sshll.u32 [#allocation9], 4
      %s23 = int_to_ptr.vmem [resolvable:$true] %s22
      %25 = dma.hbm_to_vmem [thread:$0]  %s7, 1024, %s23, [#allocation10]
    $region9: #{zolf_forward.1} parent=1 // pred_fallthru
      _
    // Predicated region
    $region10: #{zolf_forward.1} parent=1 // pred_check
      _
    $region11: #{zolf_forward.1} parent=1 // pred_check_branch
      %27 = sbr.rel (0) target = $region13
    $region12: #{zolf_forward.1} parent=1 // pred_region
      %28 = dma.done [#allocation10], 1024
    $region13: #{zolf_forward.1} parent=1 // pred_fallthru
      _
    %s31 = sshll.u32 1, 14
    %s32 = sxor.u32 4294967295, %s31
    %s34 = sld [smem:[#allocation0]]
    %s35 = sadd.s32 2, %s34
    %s37 = sshll.u32 7, 26
    %s38 = sxor.u32 4294967295, %s37
    %s39 = sand.u32 0, %s38
    %s40 = sshll.u32 %s35, 26
    %s41 = sor.u32 %s39, %s40
    %s42 = sshll.u32 [#allocation2], 4
    %s43 = int_to_ptr.vmem [resolvable:$true] %s42
    %46 = sst [smem:[#allocation12]] 1024
    %s47 = scalar_lea.smem [#allocation12], 1
    %48 = sst [smem:[%s47]] 1024
    %s49 = scalar_lea.smem [#allocation12], 2
    %50 = sst [smem:[%s49]] 8
    %s51 = scalar_lea.smem [#allocation12], 3
    %52 = sst [smem:[%s51]] 64
    %s53 = scalar_lea.smem [#allocation12], 4
    %54 = sst [smem:[%s53]] 128
    %s55 = scalar_lea.smem [#allocation12], 5
    %56 = sst [smem:[%s55]] 2
    %s57 = scalar_lea.smem [#allocation12], 6
    %58 = sst [smem:[%s57]] 512
    %s59 = scalar_lea.smem [#allocation12], 7
    %60 = sst [smem:[%s59]] 64
    %s61 = scalar_lea.smem [#allocation12], 8
    %62 = sst [smem:[%s61]] 4
    %64 = dma.general %s1, 32768, %s43, [#allocation8], [#allocation11], [#allocation12], %s41, 0
    %s65 = scalar_lea.sflag [#allocation8], 1
    %s67 = sshll.u32 1, 14
    %s68 = sxor.u32 4294967295, %s67
    %s70 = sadd.s32 2, %s34
    %s72 = sshll.u32 7, 26
    %s73 = sxor.u32 4294967295, %s72
    %s74 = sand.u32 0, %s73
    %s75 = sshll.u32 %s70, 26
    %s76 = sor.u32 %s74, %s75
    %s77 = sshll.u32 [#allocation3], 4
    %s78 = int_to_ptr.vmem [resolvable:$true] %s77
    %81 = sst [smem:[#allocation14]] 1024
    %s82 = scalar_lea.smem [#allocation14], 1
    %83 = sst [smem:[%s82]] 1024
    %s84 = scalar_lea.smem [#allocation14], 2
    %85 = sst [smem:[%s84]] 8
    %s86 = scalar_lea.smem [#allocation14], 3
    %87 = sst [smem:[%s86]] 64
    %s88 = scalar_lea.smem [#allocation14], 4
    %89 = sst [smem:[%s88]] 128
    %s90 = scalar_lea.smem [#allocation14], 5
    %91 = sst [smem:[%s90]] 2
    %s92 = scalar_lea.smem [#allocation14], 6
    %93 = sst [smem:[%s92]] 512
    %s94 = scalar_lea.smem [#allocation14], 7
    %95 = sst [smem:[%s94]] 64
    %s96 = scalar_lea.smem [#allocation14], 8
    %97 = sst [smem:[%s96]] 4
    %99 = dma.general %s2, 65536, %s78, %s65, [#allocation13], [#allocation14], %s76, 0
    %s100 = scalar_lea.sflag [#allocation8], 2
    %s102 = sshll.u32 1, 14
    %s103 = sxor.u32 4294967295, %s102
    %s105 = sadd.s32 2, %s34
    %s107 = sshll.u32 7, 26
    %s108 = sxor.u32 4294967295, %s107
    %s109 = sand.u32 0, %s108
    %s110 = sshll.u32 %s105, 26
    %s111 = sor.u32 %s109, %s110
    %s112 = sshll.u32 [#allocation4], 4
    %s113 = int_to_ptr.vmem [resolvable:$true] %s112
    %116 = sst [smem:[#allocation16]] 1024
    %s117 = scalar_lea.smem [#allocation16], 1
    %118 = sst [smem:[%s117]] 1024
    %s119 = scalar_lea.smem [#allocation16], 2
    %120 = sst [smem:[%s119]] 8
    %s121 = scalar_lea.smem [#allocation16], 3
    %122 = sst [smem:[%s121]] 64
    %s123 = scalar_lea.smem [#allocation16], 4
    %124 = sst [smem:[%s123]] 128
    %s125 = scalar_lea.smem [#allocation16], 5
    %126 = sst [smem:[%s125]] 2
    %s127 = scalar_lea.smem [#allocation16], 6
    %128 = sst [smem:[%s127]] 512
    %s129 = scalar_lea.smem [#allocation16], 7
    %130 = sst [smem:[%s129]] 64
    %s131 = scalar_lea.smem [#allocation16], 8
    %132 = sst [smem:[%s131]] 4
    %134 = dma.general %s3, 65536, %s113, %s100, [#allocation15], [#allocation16], %s111, 0
    %s135 = scalar_lea.sflag [#allocation8], 3
    %s137 = sshll.u32 1, 14
    %s138 = sxor.u32 4294967295, %s137
    %s140 = sadd.s32 2, %s34
    %s142 = sshll.u32 7, 26
    %s143 = sxor.u32 4294967295, %s142
    %s144 = sand.u32 0, %s143
    %s145 = sshll.u32 %s140, 26
    %s146 = sor.u32 %s144, %s145
    %s147 = sshll.u32 [#allocation5], 4
    %s148 = int_to_ptr.vmem [resolvable:$true] %s147
    %151 = sst [smem:[#allocation18]] 1024
    %s152 = scalar_lea.smem [#allocation18], 1
    %153 = sst [smem:[%s152]] 1024
    %s154 = scalar_lea.smem [#allocation18], 2
    %155 = sst [smem:[%s154]] 8
    %s156 = scalar_lea.smem [#allocation18], 3
    %157 = sst [smem:[%s156]] 64
    %s158 = scalar_lea.smem [#allocation18], 4
    %159 = sst [smem:[%s158]] 128
    %s160 = scalar_lea.smem [#allocation18], 5
    %161 = sst [smem:[%s160]] 2
    %s162 = scalar_lea.smem [#allocation18], 6
    %163 = sst [smem:[%s162]] 512
    %s164 = scalar_lea.smem [#allocation18], 7
    %165 = sst [smem:[%s164]] 64
    %s166 = scalar_lea.smem [#allocation18], 8
    %167 = sst [smem:[%s166]] 4
    %169 = dma.general %s4, 65536, %s148, %s135, [#allocation17], [#allocation18], %s146, 0
    %s170 = scalar_lea.sflag [#allocation8], 4
    %s172 = sshll.u32 1, 14
    %s173 = sxor.u32 4294967295, %s172
    %s175 = sadd.s32 2, %s34
    %s177 = sshll.u32 7, 26
    %s178 = sxor.u32 4294967295, %s177
    %s179 = sand.u32 0, %s178
    %s180 = sshll.u32 %s175, 26
    %s181 = sor.u32 %s179, %s180
    %s182 = sshll.u32 [#allocation6], 4
    %s183 = int_to_ptr.vmem [resolvable:$true] %s182
    %186 = sst [smem:[#allocation20]] 256
    %s187 = scalar_lea.smem [#allocation20], 1
    %188 = sst [smem:[%s187]] 256
    %s189 = scalar_lea.smem [#allocation20], 2
    %190 = sst [smem:[%s189]] 2
    %s191 = scalar_lea.smem [#allocation20], 3
    %192 = sst [smem:[%s191]] 64
    %s193 = scalar_lea.smem [#allocation20], 4
    %194 = sst [smem:[%s193]] 128
    %s195 = scalar_lea.smem [#allocation20], 5
    %196 = sst [smem:[%s195]] 2
    %s197 = scalar_lea.smem [#allocation20], 6
    %198 = sst [smem:[%s197]] 128
    %s199 = scalar_lea.smem [#allocation20], 7
    %200 = sst [smem:[%s199]] 64
    %s201 = scalar_lea.smem [#allocation20], 8
    %202 = sst [smem:[%s201]] 4
    %204 = dma.general %s5, 16384, %s183, %s170, [#allocation19], [#allocation20], %s181, 0
    %s205 = scalar_lea.sflag [#allocation8], 5
    // Predicated region
    $region14: #{zolf_forward.1} parent=1 // pred_check
      _
    $region15: #{zolf_forward.1} parent=1 // pred_check_branch
      %207 = sbr.rel target = $region17
    $region16: #{zolf_forward.1} parent=1 // pred_region
      %208 = sst [smem:[#allocation23]] [#allocation22]
      %209 = sst [smem:[#allocation24]] [#allocation21]
    $region17: #{zolf_forward.1} parent=1 // pred_fallthru
      _
    %211 = shalt.err (0)
    %s213 = sshll.u32 [#allocation7], 4
    %s214 = int_to_ptr.vmem [resolvable:$true] %s213
    %216 = dma.hbm_to_vmem [thread:$0]  %s6, 2048, %s214, %s205
    %v217 = vld [vmem:[%s0] sm:$0xff]
    %v218 = vld [vmem:[%s0 + $0x8] sm:$0xff]
    %s219 = smul.u32 4, 64
    %s220 = smul.u32 %s219, 8
    %s221 = sshll.u32 %s220, 4
    %222 = dma.done [#allocation8], %s221
    %v223 = vld [vmem:[#allocation2] sm:$0xff]
    %v224 = vld [vmem:[#allocation2 + $0x8] sm:$0xff]
    %v225 = vld [vmem:[#allocation2 + $0x10] sm:$0xff]
    %v226 = vld [vmem:[#allocation2 + $0x18] sm:$0xff]
    %v227 = vld [vmem:[#allocation2 + $0x20] sm:$0xff]
    %v228 = vld [vmem:[#allocation2 + $0x28] sm:$0xff]
    %v229 = vld [vmem:[#allocation2 + $0x30] sm:$0xff]
    %v230 = vld [vmem:[#allocation2 + $0x38] sm:$0xff]
    %v231 = vld [vmem:[#allocation2 + $0x40] sm:$0xff]
    %v232 = vld [vmem:[#allocation2 + $0x48] sm:$0xff]
    %v233 = vld [vmem:[#allocation2 + $0x50] sm:$0xff]
    %v234 = vld [vmem:[#allocation2 + $0x58] sm:$0xff]
    %v235 = vld [vmem:[#allocation2 + $0x60] sm:$0xff]
    %v236 = vld [vmem:[#allocation2 + $0x68] sm:$0xff]
    %v237 = vld [vmem:[#allocation2 + $0x70] sm:$0xff]
    %v238 = vld [vmem:[#allocation2 + $0x78] sm:$0xff]
    %v239 = vld [vmem:[#allocation2 + $0x80] sm:$0xff]
    %v240 = vld [vmem:[#allocation2 + $0x88] sm:$0xff]
    %v241 = vld [vmem:[#allocation2 + $0x90] sm:$0xff]
    %v242 = vld [vmem:[#allocation2 + $0x98] sm:$0xff]
    %v243 = vld [vmem:[#allocation2 + $0xa0] sm:$0xff]
    %v244 = vld [vmem:[#allocation2 + $0xa8] sm:$0xff]
    %v245 = vld [vmem:[#allocation2 + $0xb0] sm:$0xff]
    %v246 = vld [vmem:[#allocation2 + $0xb8] sm:$0xff]
    %v247 = vld [vmem:[#allocation2 + $0xc0] sm:$0xff]
    %v248 = vld [vmem:[#allocation2 + $0xc8] sm:$0xff]
    %v249 = vld [vmem:[#allocation2 + $0xd0] sm:$0xff]
    %v250 = vld [vmem:[#allocation2 + $0xd8] sm:$0xff]
    %v251 = vld [vmem:[#allocation2 + $0xe0] sm:$0xff]
    %v252 = vld [vmem:[#allocation2 + $0xe8] sm:$0xff]
    %v253 = vld [vmem:[#allocation2 + $0xf0] sm:$0xff]
    %v254 = vld [vmem:[#allocation2 + $0xf8] sm:$0xff]
    %v255 = vld [vmem:[#allocation2 + $0x100] sm:$0xff]
    %v256 = vld [vmem:[#allocation2 + $0x108] sm:$0xff]
    %v257 = vld [vmem:[#allocation2 + $0x110] sm:$0xff]
    %v258 = vld [vmem:[#allocation2 + $0x118] sm:$0xff]
    %v259 = vld [vmem:[#allocation2 + $0x120] sm:$0xff]
    %v260 = vld [vmem:[#allocation2 + $0x128] sm:$0xff]
    %v261 = vld [vmem:[#allocation2 + $0x130] sm:$0xff]
    %v262 = vld [vmem:[#allocation2 + $0x138] sm:$0xff]
    %v263 = vld [vmem:[#allocation2 + $0x140] sm:$0xff]
    %v264 = vld [vmem:[#allocation2 + $0x148] sm:$0xff]
    %v265 = vld [vmem:[#allocation2 + $0x150] sm:$0xff]
    %v266 = vld [vmem:[#allocation2 + $0x158] sm:$0xff]
    %v267 = vld [vmem:[#allocation2 + $0x160] sm:$0xff]
    %v268 = vld [vmem:[#allocation2 + $0x168] sm:$0xff]
    %v269 = vld [vmem:[#allocation2 + $0x170] sm:$0xff]
    %v270 = vld [vmem:[#allocation2 + $0x178] sm:$0xff]
    %v271 = vld [vmem:[#allocation2 + $0x180] sm:$0xff]
    %v272 = vld [vmem:[#allocation2 + $0x188] sm:$0xff]
    %v273 = vld [vmem:[#allocation2 + $0x190] sm:$0xff]
    %v274 = vld [vmem:[#allocation2 + $0x198] sm:$0xff]
    %v275 = vld [vmem:[#allocation2 + $0x1a0] sm:$0xff]
    %v276 = vld [vmem:[#allocation2 + $0x1a8] sm:$0xff]
    %v277 = vld [vmem:[#allocation2 + $0x1b0] sm:$0xff]
    %v278 = vld [vmem:[#allocation2 + $0x1b8] sm:$0xff]
    %v279 = vld [vmem:[#allocation2 + $0x1c0] sm:$0xff]
    %v280 = vld [vmem:[#allocation2 + $0x1c8] sm:$0xff]
    %v281 = vld [vmem:[#allocation2 + $0x1d0] sm:$0xff]
    %v282 = vld [vmem:[#allocation2 + $0x1d8] sm:$0xff]
    %v283 = vld [vmem:[#allocation2 + $0x1e0] sm:$0xff]
    %v284 = vld [vmem:[#allocation2 + $0x1e8] sm:$0xff]
    %v285 = vld [vmem:[#allocation2 + $0x1f0] sm:$0xff]
    %v286 = vld [vmem:[#allocation2 + $0x1f8] sm:$0xff]
    %v287 = vld [vmem:[#allocation2 + $0x200] sm:$0xff]
    %v288 = vld [vmem:[#allocation2 + $0x208] sm:$0xff]
    %v289 = vld [vmem:[#allocation2 + $0x210] sm:$0xff]
    %v290 = vld [vmem:[#allocation2 + $0x218] sm:$0xff]
    %v291 = vld [vmem:[#allocation2 + $0x220] sm:$0xff]
    %v292 = vld [vmem:[#allocation2 + $0x228] sm:$0xff]
    %v293 = vld [vmem:[#allocation2 + $0x230] sm:$0xff]
    %v294 = vld [vmem:[#allocation2 + $0x238] sm:$0xff]
    %v295 = vld [vmem:[#allocation2 + $0x240] sm:$0xff]
    %v296 = vld [vmem:[#allocation2 + $0x248] sm:$0xff]
    %v297 = vld [vmem:[#allocation2 + $0x250] sm:$0xff]
    %v298 = vld [vmem:[#allocation2 + $0x258] sm:$0xff]
    %v299 = vld [vmem:[#allocation2 + $0x260] sm:$0xff]
    %v300 = vld [vmem:[#allocation2 + $0x268] sm:$0xff]
    %v301 = vld [vmem:[#allocation2 + $0x270] sm:$0xff]
    %v302 = vld [vmem:[#allocation2 + $0x278] sm:$0xff]
    %v303 = vld [vmem:[#allocation2 + $0x280] sm:$0xff]
    %v304 = vld [vmem:[#allocation2 + $0x288] sm:$0xff]
    %v305 = vld [vmem:[#allocation2 + $0x290] sm:$0xff]
    %v306 = vld [vmem:[#allocation2 + $0x298] sm:$0xff]
    %v307 = vld [vmem:[#allocation2 + $0x2a0] sm:$0xff]
    %v308 = vld [vmem:[#allocation2 + $0x2a8] sm:$0xff]
    %v309 = vld [vmem:[#allocation2 + $0x2b0] sm:$0xff]
    %v310 = vld [vmem:[#allocation2 + $0x2b8] sm:$0xff]
    %v311 = vld [vmem:[#allocation2 + $0x2c0] sm:$0xff]
    %v312 = vld [vmem:[#allocation2 + $0x2c8] sm:$0xff]
    %v313 = vld [vmem:[#allocation2 + $0x2d0] sm:$0xff]
    %v314 = vld [vmem:[#allocation2 + $0x2d8] sm:$0xff]
    %v315 = vld [vmem:[#allocation2 + $0x2e0] sm:$0xff]
    %v316 = vld [vmem:[#allocation2 + $0x2e8] sm:$0xff]
    %v317 = vld [vmem:[#allocation2 + $0x2f0] sm:$0xff]
    %v318 = vld [vmem:[#allocation2 + $0x2f8] sm:$0xff]
    %v319 = vld [vmem:[#allocation2 + $0x300] sm:$0xff]
    %v320 = vld [vmem:[#allocation2 + $0x308] sm:$0xff]
    %v321 = vld [vmem:[#allocation2 + $0x310] sm:$0xff]
    %v322 = vld [vmem:[#allocation2 + $0x318] sm:$0xff]
    %v323 = vld [vmem:[#allocation2 + $0x320] sm:$0xff]
    %v324 = vld [vmem:[#allocation2 + $0x328] sm:$0xff]
    %v325 = vld [vmem:[#allocation2 + $0x330] sm:$0xff]
    %v326 = vld [vmem:[#allocation2 + $0x338] sm:$0xff]
    %v327 = vld [vmem:[#allocation2 + $0x340] sm:$0xff]
    %v328 = vld [vmem:[#allocation2 + $0x348] sm:$0xff]
    %v329 = vld [vmem:[#allocation2 + $0x350] sm:$0xff]
    %v330 = vld [vmem:[#allocation2 + $0x358] sm:$0xff]
    %v331 = vld [vmem:[#allocation2 + $0x360] sm:$0xff]
    %v332 = vld [vmem:[#allocation2 + $0x368] sm:$0xff]
    %v333 = vld [vmem:[#allocation2 + $0x370] sm:$0xff]
    %v334 = vld [vmem:[#allocation2 + $0x378] sm:$0xff]
    %v335 = vld [vmem:[#allocation2 + $0x380] sm:$0xff]
    %v336 = vld [vmem:[#allocation2 + $0x388] sm:$0xff]
    %v337 = vld [vmem:[#allocation2 + $0x390] sm:$0xff]
    %v338 = vld [vmem:[#allocation2 + $0x398] sm:$0xff]
    %v339 = vld [vmem:[#allocation2 + $0x3a0] sm:$0xff]
    %v340 = vld [vmem:[#allocation2 + $0x3a8] sm:$0xff]
    %v341 = vld [vmem:[#allocation2 + $0x3b0] sm:$0xff]
    %v342 = vld [vmem:[#allocation2 + $0x3b8] sm:$0xff]
    %v343 = vld [vmem:[#allocation2 + $0x3c0] sm:$0xff]
    %v344 = vld [vmem:[#allocation2 + $0x3c8] sm:$0xff]
    %v345 = vld [vmem:[#allocation2 + $0x3d0] sm:$0xff]
    %v346 = vld [vmem:[#allocation2 + $0x3d8] sm:$0xff]
    %v347 = vld [vmem:[#allocation2 + $0x3e0] sm:$0xff]
    %v348 = vld [vmem:[#allocation2 + $0x3e8] sm:$0xff]
    %v349 = vld [vmem:[#allocation2 + $0x3f0] sm:$0xff]
    %v350 = vld [vmem:[#allocation2 + $0x3f8] sm:$0xff]
    %v351 = vld [vmem:[#allocation2 + $0x400] sm:$0xff]
    %v352 = vld [vmem:[#allocation2 + $0x408] sm:$0xff]
    %v353 = vld [vmem:[#allocation2 + $0x410] sm:$0xff]
    %v354 = vld [vmem:[#allocation2 + $0x418] sm:$0xff]
    %v355 = vld [vmem:[#allocation2 + $0x420] sm:$0xff]
    %v356 = vld [vmem:[#allocation2 + $0x428] sm:$0xff]
    %v357 = vld [vmem:[#allocation2 + $0x430] sm:$0xff]
    %v358 = vld [vmem:[#allocation2 + $0x438] sm:$0xff]
    %v359 = vld [vmem:[#allocation2 + $0x440] sm:$0xff]
    %v360 = vld [vmem:[#allocation2 + $0x448] sm:$0xff]
    %v361 = vld [vmem:[#allocation2 + $0x450] sm:$0xff]
    %v362 = vld [vmem:[#allocation2 + $0x458] sm:$0xff]
    %v363 = vld [vmem:[#allocation2 + $0x460] sm:$0xff]
    %v364 = vld [vmem:[#allocation2 + $0x468] sm:$0xff]
    %v365 = vld [vmem:[#allocation2 + $0x470] sm:$0xff]
    %v366 = vld [vmem:[#allocation2 + $0x478] sm:$0xff]
    %v367 = vld [vmem:[#allocation2 + $0x480] sm:$0xff]
    %v368 = vld [vmem:[#allocation2 + $0x488] sm:$0xff]
    %v369 = vld [vmem:[#allocation2 + $0x490] sm:$0xff]
    %v370 = vld [vmem:[#allocation2 + $0x498] sm:$0xff]
    %v371 = vld [vmem:[#allocation2 + $0x4a0] sm:$0xff]
    %v372 = vld [vmem:[#allocation2 + $0x4a8] sm:$0xff]
    %v373 = vld [vmem:[#allocation2 + $0x4b0] sm:$0xff]
    %v374 = vld [vmem:[#allocation2 + $0x4b8] sm:$0xff]
    %v375 = vld [vmem:[#allocation2 + $0x4c0] sm:$0xff]
    %v376 = vld [vmem:[#allocation2 + $0x4c8] sm:$0xff]
    %v377 = vld [vmem:[#allocation2 + $0x4d0] sm:$0xff]
    %v378 = vld [vmem:[#allocation2 + $0x4d8] sm:$0xff]
    %v379 = vld [vmem:[#allocation2 + $0x4e0] sm:$0xff]
    %v380 = vld [vmem:[#allocation2 + $0x4e8] sm:$0xff]
    %v381 = vld [vmem:[#allocation2 + $0x4f0] sm:$0xff]
    %v382 = vld [vmem:[#allocation2 + $0x4f8] sm:$0xff]
    %v383 = vld [vmem:[#allocation2 + $0x500] sm:$0xff]
    %v384 = vld [vmem:[#allocation2 + $0x508] sm:$0xff]
    %v385 = vld [vmem:[#allocation2 + $0x510] sm:$0xff]
    %v386 = vld [vmem:[#allocation2 + $0x518] sm:$0xff]
    %v387 = vld [vmem:[#allocation2 + $0x520] sm:$0xff]
    %v388 = vld [vmem:[#allocation2 + $0x528] sm:$0xff]
    %v389 = vld [vmem:[#allocation2 + $0x530] sm:$0xff]
    %v390 = vld [vmem:[#allocation2 + $0x538] sm:$0xff]
    %v391 = vld [vmem:[#allocation2 + $0x540] sm:$0xff]
    %v392 = vld [vmem:[#allocation2 + $0x548] sm:$0xff]
    %v393 = vld [vmem:[#allocation2 + $0x550] sm:$0xff]
    %v394 = vld [vmem:[#allocation2 + $0x558] sm:$0xff]
    %v395 = vld [vmem:[#allocation2 + $0x560] sm:$0xff]
    %v396 = vld [vmem:[#allocation2 + $0x568] sm:$0xff]
    %v397 = vld [vmem:[#allocation2 + $0x570] sm:$0xff]
    %v398 = vld [vmem:[#allocation2 + $0x578] sm:$0xff]
    %v399 = vld [vmem:[#allocation2 + $0x580] sm:$0xff]
    %v400 = vld [vmem:[#allocation2 + $0x588] sm:$0xff]
    %v401 = vld [vmem:[#allocation2 + $0x590] sm:$0xff]
    %v402 = vld [vmem:[#allocation2 + $0x598] sm:$0xff]
    %v403 = vld [vmem:[#allocation2 + $0x5a0] sm:$0xff]
    %v404 = vld [vmem:[#allocation2 + $0x5a8] sm:$0xff]
    %v405 = vld [vmem:[#allocation2 + $0x5b0] sm:$0xff]
    %v406 = vld [vmem:[#allocation2 + $0x5b8] sm:$0xff]
    %v407 = vld [vmem:[#allocation2 + $0x5c0] sm:$0xff]
    %v408 = vld [vmem:[#allocation2 + $0x5c8] sm:$0xff]
    %v409 = vld [vmem:[#allocation2 + $0x5d0] sm:$0xff]
    %v410 = vld [vmem:[#allocation2 + $0x5d8] sm:$0xff]
    %v411 = vld [vmem:[#allocation2 + $0x5e0] sm:$0xff]
    %v412 = vld [vmem:[#allocation2 + $0x5e8] sm:$0xff]
    %v413 = vld [vmem:[#allocation2 + $0x5f0] sm:$0xff]
    %v414 = vld [vmem:[#allocation2 + $0x5f8] sm:$0xff]
    %v415 = vld [vmem:[#allocation2 + $0x600] sm:$0xff]
    %v416 = vld [vmem:[#allocation2 + $0x608] sm:$0xff]
    %v417 = vld [vmem:[#allocation2 + $0x610] sm:$0xff]
    %v418 = vld [vmem:[#allocation2 + $0x618] sm:$0xff]
    %v419 = vld [vmem:[#allocation2 + $0x620] sm:$0xff]
    %v420 = vld [vmem:[#allocation2 + $0x628] sm:$0xff]
    %v421 = vld [vmem:[#allocation2 + $0x630] sm:$0xff]
    %v422 = vld [vmem:[#allocation2 + $0x638] sm:$0xff]
    %v423 = vld [vmem:[#allocation2 + $0x640] sm:$0xff]
    %v424 = vld [vmem:[#allocation2 + $0x648] sm:$0xff]
    %v425 = vld [vmem:[#allocation2 + $0x650] sm:$0xff]
    %v426 = vld [vmem:[#allocation2 + $0x658] sm:$0xff]
    %v427 = vld [vmem:[#allocation2 + $0x660] sm:$0xff]
    %v428 = vld [vmem:[#allocation2 + $0x668] sm:$0xff]
    %v429 = vld [vmem:[#allocation2 + $0x670] sm:$0xff]
    %v430 = vld [vmem:[#allocation2 + $0x678] sm:$0xff]
    %v431 = vld [vmem:[#allocation2 + $0x680] sm:$0xff]
    %v432 = vld [vmem:[#allocation2 + $0x688] sm:$0xff]
    %v433 = vld [vmem:[#allocation2 + $0x690] sm:$0xff]
    %v434 = vld [vmem:[#allocation2 + $0x698] sm:$0xff]
    %v435 = vld [vmem:[#allocation2 + $0x6a0] sm:$0xff]
    %v436 = vld [vmem:[#allocation2 + $0x6a8] sm:$0xff]
    %v437 = vld [vmem:[#allocation2 + $0x6b0] sm:$0xff]
    %v438 = vld [vmem:[#allocation2 + $0x6b8] sm:$0xff]
    %v439 = vld [vmem:[#allocation2 + $0x6c0] sm:$0xff]
    %v440 = vld [vmem:[#allocation2 + $0x6c8] sm:$0xff]
    %v441 = vld [vmem:[#allocation2 + $0x6d0] sm:$0xff]
    %v442 = vld [vmem:[#allocation2 + $0x6d8] sm:$0xff]
    %v443 = vld [vmem:[#allocation2 + $0x6e0] sm:$0xff]
    %v444 = vld [vmem:[#allocation2 + $0x6e8] sm:$0xff]
    %v445 = vld [vmem:[#allocation2 + $0x6f0] sm:$0xff]
    %v446 = vld [vmem:[#allocation2 + $0x6f8] sm:$0xff]
    %v447 = vld [vmem:[#allocation2 + $0x700] sm:$0xff]
    %v448 = vld [vmem:[#allocation2 + $0x708] sm:$0xff]
    %v449 = vld [vmem:[#allocation2 + $0x710] sm:$0xff]
    %v450 = vld [vmem:[#allocation2 + $0x718] sm:$0xff]
    %v451 = vld [vmem:[#allocation2 + $0x720] sm:$0xff]
    %v452 = vld [vmem:[#allocation2 + $0x728] sm:$0xff]
    %v453 = vld [vmem:[#allocation2 + $0x730] sm:$0xff]
    %v454 = vld [vmem:[#allocation2 + $0x738] sm:$0xff]
    %v455 = vld [vmem:[#allocation2 + $0x740] sm:$0xff]
    %v456 = vld [vmem:[#allocation2 + $0x748] sm:$0xff]
    %v457 = vld [vmem:[#allocation2 + $0x750] sm:$0xff]
    %v458 = vld [vmem:[#allocation2 + $0x758] sm:$0xff]
    %v459 = vld [vmem:[#allocation2 + $0x760] sm:$0xff]
    %v460 = vld [vmem:[#allocation2 + $0x768] sm:$0xff]
    %v461 = vld [vmem:[#allocation2 + $0x770] sm:$0xff]
    %v462 = vld [vmem:[#allocation2 + $0x778] sm:$0xff]
    %v463 = vld [vmem:[#allocation2 + $0x780] sm:$0xff]
    %v464 = vld [vmem:[#allocation2 + $0x788] sm:$0xff]
    %v465 = vld [vmem:[#allocation2 + $0x790] sm:$0xff]
    %v466 = vld [vmem:[#allocation2 + $0x798] sm:$0xff]
    %v467 = vld [vmem:[#allocation2 + $0x7a0] sm:$0xff]
    %v468 = vld [vmem:[#allocation2 + $0x7a8] sm:$0xff]
    %v469 = vld [vmem:[#allocation2 + $0x7b0] sm:$0xff]
    %v470 = vld [vmem:[#allocation2 + $0x7b8] sm:$0xff]
    %v471 = vld [vmem:[#allocation2 + $0x7c0] sm:$0xff]
    %v472 = vld [vmem:[#allocation2 + $0x7c8] sm:$0xff]
    %v473 = vld [vmem:[#allocation2 + $0x7d0] sm:$0xff]
    %v474 = vld [vmem:[#allocation2 + $0x7d8] sm:$0xff]
    %v475 = vld [vmem:[#allocation2 + $0x7e0] sm:$0xff]
    %v476 = vld [vmem:[#allocation2 + $0x7e8] sm:$0xff]
    %v477 = vld [vmem:[#allocation2 + $0x7f0] sm:$0xff]
    %v478 = vld [vmem:[#allocation2 + $0x7f8] sm:$0xff]
    %v479 = vld [vmem:[#allocation9] ss:$8 sm:$0xf]
    %v480 = vld [vmem:[#allocation9] ss:$8 sm:$0xf0]
    %v481 = vor.u32 %v479, %v480
    %v483 = vlaneseq
    %v484 = vshrl.u32 %v483, 7
    %v485 = vsub.s32 0, %v484
    %v486 = vrot.slane %v481, %v485
    %v487 = vlaneseq
    %v488 = vshrl.u32 %v487, 7
    %v489 = vsub.s32 1, %v488
    %v490 = vrot.slane %v481, %v489
    %v491 = vlaneseq
    %v492 = vshrl.u32 %v491, 7
    %v493 = vsub.s32 2, %v492
    %v494 = vrot.slane %v481, %v493
    %v495 = vlaneseq
    %v496 = vshrl.u32 %v495, 7
    %v497 = vsub.s32 3, %v496
    %v498 = vrot.slane %v481, %v497
    %v499 = vlaneseq
    %v500 = vshrl.u32 %v499, 7
    %v501 = vsub.s32 4, %v500
    %v502 = vrot.slane %v481, %v501
    %v503 = vlaneseq
    %v504 = vshrl.u32 %v503, 7
    %v505 = vsub.s32 5, %v504
    %v506 = vrot.slane %v481, %v505
    %v507 = vlaneseq
    %v508 = vshrl.u32 %v507, 7
    %v509 = vsub.s32 6, %v508
    %v510 = vrot.slane %v481, %v509
    %v511 = vlaneseq
    %v512 = vshrl.u32 %v511, 7
    %v513 = vsub.s32 7, %v512
    %v514 = vrot.slane %v481, %v513
    %v525 = vunpack.c.l.b16 %v217
    %v526 = vunpack.c.h.b16 %v217
    %v527 = vunpack.c.l.b16 %v218
    %v528 = vunpack.c.h.b16 %v218
    %v529 = vpack.c.b16 %v525, %v525
    %v530 = vpack.c.b16 %v526, %v526
    %v531 = vpack.c.b16 %v527, %v527
    %v532 = vpack.c.b16 %v528, %v528
    %537 = vmatprep.subr.bf16.mxu0 %v224
    %538 = vmatpush1.bf16.msra.mxu0 %v223
    %539 = vmatprep.subr.bf16.mxu0 %v232
    %540 = vmatpush1.bf16.msra.mxu0 %v231
    %541 = vmatprep.subr.bf16.mxu0 %v240
    %542 = vmatpush1.bf16.msra.mxu0 %v239
    %543 = vmatprep.subr.bf16.mxu0 %v248
    %544 = vmatpush1.bf16.msra.mxu0 %v247
    %545 = vmatprep.subr.bf16.mxu0 %v256
    %546 = vmatpush1.bf16.msra.mxu0 %v255
    %547 = vmatprep.subr.bf16.mxu0 %v264
    %548 = vmatpush1.bf16.msra.mxu0 %v263
    %549 = vmatprep.subr.bf16.mxu0 %v272
    %550 = vmatpush1.bf16.msra.mxu0 %v271
    %551 = vmatprep.subr.bf16.mxu0 %v280
    %552 = vmatpush1.bf16.msra.mxu0 %v279
    %553 = vmatprep.subr.bf16.mxu0 %v288
    %554 = vmatpush1.bf16.msra.mxu0 %v287
    %555 = vmatprep.subr.bf16.mxu0 %v296
    %556 = vmatpush1.bf16.msra.mxu0 %v295
    %557 = vmatprep.subr.bf16.mxu0 %v304
    %558 = vmatpush1.bf16.msra.mxu0 %v303
    %559 = vmatprep.subr.bf16.mxu0 %v312
    %560 = vmatpush1.bf16.msra.mxu0 %v311
    %561 = vmatprep.subr.bf16.mxu0 %v320
    %562 = vmatpush1.bf16.msra.mxu0 %v319
    %563 = vmatprep.subr.bf16.mxu0 %v328
    %564 = vmatpush1.bf16.msra.mxu0 %v327
    %565 = vmatprep.subr.bf16.mxu0 %v336
    %566 = vmatpush1.bf16.msra.mxu0 %v335
    %567 = vmatprep.subr.bf16.mxu0 %v344
    %568 = vmatpush1.bf16.msra.mxu0 %v343
    %569 = vmatprep.mubr.bf16.mxu0 %v530
    %570 = vmatmul.mubr.bf16.gmra.mrb[0].mxu0 %v529
    %v571 = vpop.f32.mrb[0].mxu0
    %v572 = vadd.f32 %v486, %v571
    %v573 = vpop.f32.mrb[0].mxu0
    %v574 = vadd.f32 %v490, %v573
    %v575 = vpop.f32.mrb[0].mxu0
    %v576 = vpop.f32.mrb[0].mxu0
    %577 = vdwg.mxu0
    %578 = vmatprep.subr.bf16.mxu0 %v352
    %579 = vmatpush1.bf16.msra.mxu0 %v351
    %580 = vmatprep.subr.bf16.mxu0 %v360
    %581 = vmatpush1.bf16.msra.mxu0 %v359
    %582 = vmatprep.subr.bf16.mxu0 %v368
    %583 = vmatpush1.bf16.msra.mxu0 %v367
    %584 = vmatprep.subr.bf16.mxu0 %v376
    %585 = vmatpush1.bf16.msra.mxu0 %v375
    %586 = vmatprep.subr.bf16.mxu0 %v384
    %587 = vmatpush1.bf16.msra.mxu0 %v383
    %588 = vmatprep.subr.bf16.mxu0 %v392
    %589 = vmatpush1.bf16.msra.mxu0 %v391
    %590 = vmatprep.subr.bf16.mxu0 %v400
    %591 = vmatpush1.bf16.msra.mxu0 %v399
    %592 = vmatprep.subr.bf16.mxu0 %v408
    %593 = vmatpush1.bf16.msra.mxu0 %v407
    %594 = vmatprep.subr.bf16.mxu0 %v416
    %595 = vmatpush1.bf16.msra.mxu0 %v415
    %596 = vmatprep.subr.bf16.mxu0 %v424
    %597 = vmatpush1.bf16.msra.mxu0 %v423
    %598 = vmatprep.subr.bf16.mxu0 %v432
    %599 = vmatpush1.bf16.msra.mxu0 %v431
    %600 = vmatprep.subr.bf16.mxu0 %v440
    %601 = vmatpush1.bf16.msra.mxu0 %v439
    %602 = vmatprep.subr.bf16.mxu0 %v448
    %603 = vmatpush1.bf16.msra.mxu0 %v447
    %604 = vmatprep.subr.bf16.mxu0 %v456
    %605 = vmatpush1.bf16.msra.mxu0 %v455
    %606 = vmatprep.subr.bf16.mxu0 %v464
    %607 = vmatpush1.bf16.msra.mxu0 %v463
    %608 = vmatprep.subr.bf16.mxu0 %v472
    %609 = vmatpush1.bf16.msra.mxu0 %v471
    %610 = vmatprep.mubr.bf16.mxu0 %v532
    %611 = vmatmul.mubr.bf16.gmra.mrb[0].mxu0 %v531
    %v612 = vpop.f32.mrb[0].mxu0
    %v613 = vadd.f32 %v572, %v612
    %v614 = vpop.f32.mrb[0].mxu0
    %v615 = vadd.f32 %v574, %v614
    %v616 = vpop.f32.mrb[0].mxu0
    %v617 = vpop.f32.mrb[0].mxu0
    %618 = vdwg.mxu0
    %619 = vmatprep.subr.bf16.mxu0 %v226
    %620 = vmatpush1.bf16.msra.mxu0 %v225
    %621 = vmatprep.subr.bf16.mxu0 %v234
    %622 = vmatpush1.bf16.msra.mxu0 %v233
    %623 = vmatprep.subr.bf16.mxu0 %v242
    %624 = vmatpush1.bf16.msra.mxu0 %v241
    %625 = vmatprep.subr.bf16.mxu0 %v250
    %626 = vmatpush1.bf16.msra.mxu0 %v249
    %627 = vmatprep.subr.bf16.mxu0 %v258
    %628 = vmatpush1.bf16.msra.mxu0 %v257
    %629 = vmatprep.subr.bf16.mxu0 %v266
    %630 = vmatpush1.bf16.msra.mxu0 %v265
    %631 = vmatprep.subr.bf16.mxu0 %v274
    %632 = vmatpush1.bf16.msra.mxu0 %v273
    %633 = vmatprep.subr.bf16.mxu0 %v282
    %634 = vmatpush1.bf16.msra.mxu0 %v281
    %635 = vmatprep.subr.bf16.mxu0 %v290
    %636 = vmatpush1.bf16.msra.mxu0 %v289
    %637 = vmatprep.subr.bf16.mxu0 %v298
    %638 = vmatpush1.bf16.msra.mxu0 %v297
    %639 = vmatprep.subr.bf16.mxu0 %v306
    %640 = vmatpush1.bf16.msra.mxu0 %v305
    %641 = vmatprep.subr.bf16.mxu0 %v314
    %642 = vmatpush1.bf16.msra.mxu0 %v313
    %643 = vmatprep.subr.bf16.mxu0 %v322
    %644 = vmatpush1.bf16.msra.mxu0 %v321
    %645 = vmatprep.subr.bf16.mxu0 %v330
    %646 = vmatpush1.bf16.msra.mxu0 %v329
    %647 = vmatprep.subr.bf16.mxu0 %v338
    %648 = vmatpush1.bf16.msra.mxu0 %v337
    %649 = vmatprep.subr.bf16.mxu0 %v346
    %650 = vmatpush1.bf16.msra.mxu0 %v345
    %651 = vmatprep.mubr.bf16.mxu0 %v530
    %652 = vmatmul.mubr.bf16.gmra.mrb[0].mxu0 %v529
    %v653 = vpop.f32.mrb[0].mxu0
    %v654 = vadd.f32 %v494, %v653
    %v655 = vpop.f32.mrb[0].mxu0
    %v656 = vadd.f32 %v498, %v655
    %v657 = vpop.f32.mrb[0].mxu0
    %v658 = vpop.f32.mrb[0].mxu0
    %659 = vdwg.mxu0
    %660 = vmatprep.subr.bf16.mxu0 %v354
    %661 = vmatpush1.bf16.msra.mxu0 %v353
    %662 = vmatprep.subr.bf16.mxu0 %v362
    %663 = vmatpush1.bf16.msra.mxu0 %v361
    %664 = vmatprep.subr.bf16.mxu0 %v370
    %665 = vmatpush1.bf16.msra.mxu0 %v369
    %666 = vmatprep.subr.bf16.mxu0 %v378
    %667 = vmatpush1.bf16.msra.mxu0 %v377
    %668 = vmatprep.subr.bf16.mxu0 %v386
    %669 = vmatpush1.bf16.msra.mxu0 %v385
    %670 = vmatprep.subr.bf16.mxu0 %v394
    %671 = vmatpush1.bf16.msra.mxu0 %v393
    %672 = vmatprep.subr.bf16.mxu0 %v402
    %673 = vmatpush1.bf16.msra.mxu0 %v401
    %674 = vmatprep.subr.bf16.mxu0 %v410
    %675 = vmatpush1.bf16.msra.mxu0 %v409
    %676 = vmatprep.subr.bf16.mxu0 %v418
    %677 = vmatpush1.bf16.msra.mxu0 %v417
    %678 = vmatprep.subr.bf16.mxu0 %v426
    %679 = vmatpush1.bf16.msra.mxu0 %v425
    %680 = vmatprep.subr.bf16.mxu0 %v434
    %681 = vmatpush1.bf16.msra.mxu0 %v433
    %682 = vmatprep.subr.bf16.mxu0 %v442
    %683 = vmatpush1.bf16.msra.mxu0 %v441
    %684 = vmatprep.subr.bf16.mxu0 %v450
    %685 = vmatpush1.bf16.msra.mxu0 %v449
    %686 = vmatprep.subr.bf16.mxu0 %v458
    %687 = vmatpush1.bf16.msra.mxu0 %v457
    %688 = vmatprep.subr.bf16.mxu0 %v466
    %689 = vmatpush1.bf16.msra.mxu0 %v465
    %690 = vmatprep.subr.bf16.mxu0 %v474
    %691 = vmatpush1.bf16.msra.mxu0 %v473
    %692 = vmatprep.mubr.bf16.mxu0 %v532
    %693 = vmatmul.mubr.bf16.gmra.mrb[0].mxu0 %v531
    %v694 = vpop.f32.mrb[0].mxu0
    %v695 = vadd.f32 %v654, %v694
    %v696 = vpop.f32.mrb[0].mxu0
    %v697 = vadd.f32 %v656, %v696
    %v698 = vpop.f32.mrb[0].mxu0
    %v699 = vpop.f32.mrb[0].mxu0
    %700 = vdwg.mxu0
    %701 = vmatprep.subr.bf16.mxu0 %v228
    %702 = vmatpush1.bf16.msra.mxu0 %v227
    %703 = vmatprep.subr.bf16.mxu0 %v236
    %704 = vmatpush1.bf16.msra.mxu0 %v235
    %705 = vmatprep.subr.bf16.mxu0 %v244
    %706 = vmatpush1.bf16.msra.mxu0 %v243
    %707 = vmatprep.subr.bf16.mxu0 %v252
    %708 = vmatpush1.bf16.msra.mxu0 %v251
    %709 = vmatprep.subr.bf16.mxu0 %v260
    %710 = vmatpush1.bf16.msra.mxu0 %v259
    %711 = vmatprep.subr.bf16.mxu0 %v268
    %712 = vmatpush1.bf16.msra.mxu0 %v267
    %713 = vmatprep.subr.bf16.mxu0 %v276
    %714 = vmatpush1.bf16.msra.mxu0 %v275
    %715 = vmatprep.subr.bf16.mxu0 %v284
    %716 = vmatpush1.bf16.msra.mxu0 %v283
    %717 = vmatprep.subr.bf16.mxu0 %v292
    %718 = vmatpush1.bf16.msra.mxu0 %v291
    %719 = vmatprep.subr.bf16.mxu0 %v300
    %720 = vmatpush1.bf16.msra.mxu0 %v299
    %721 = vmatprep.subr.bf16.mxu0 %v308
    %722 = vmatpush1.bf16.msra.mxu0 %v307
    %723 = vmatprep.subr.bf16.mxu0 %v316
    %724 = vmatpush1.bf16.msra.mxu0 %v315
    %725 = vmatprep.subr.bf16.mxu0 %v324
    %726 = vmatpush1.bf16.msra.mxu0 %v323
    %727 = vmatprep.subr.bf16.mxu0 %v332
    %728 = vmatpush1.bf16.msra.mxu0 %v331
    %729 = vmatprep.subr.bf16.mxu0 %v340
    %730 = vmatpush1.bf16.msra.mxu0 %v339
    %731 = vmatprep.subr.bf16.mxu0 %v348
    %732 = vmatpush1.bf16.msra.mxu0 %v347
    %733 = vmatprep.mubr.bf16.mxu0 %v530
    %734 = vmatmul.mubr.bf16.gmra.mrb[0].mxu0 %v529
    %v735 = vpop.f32.mrb[0].mxu0
    %v736 = vadd.f32 %v502, %v735
    %v737 = vpop.f32.mrb[0].mxu0
    %v738 = vadd.f32 %v506, %v737
    %v739 = vpop.f32.mrb[0].mxu0
    %v740 = vpop.f32.mrb[0].mxu0
    %741 = vdwg.mxu0
    %742 = vmatprep.subr.bf16.mxu0 %v356
    %743 = vmatpush1.bf16.msra.mxu0 %v355
    %744 = vmatprep.subr.bf16.mxu0 %v364
    %745 = vmatpush1.bf16.msra.mxu0 %v363
    %746 = vmatprep.subr.bf16.mxu0 %v372
    %747 = vmatpush1.bf16.msra.mxu0 %v371
    %748 = vmatprep.subr.bf16.mxu0 %v380
    %749 = vmatpush1.bf16.msra.mxu0 %v379
    %750 = vmatprep.subr.bf16.mxu0 %v388
    %751 = vmatpush1.bf16.msra.mxu0 %v387
    %752 = vmatprep.subr.bf16.mxu0 %v396
    %753 = vmatpush1.bf16.msra.mxu0 %v395
    %754 = vmatprep.subr.bf16.mxu0 %v404
    %755 = vmatpush1.bf16.msra.mxu0 %v403
    %756 = vmatprep.subr.bf16.mxu0 %v412
    %757 = vmatpush1.bf16.msra.mxu0 %v411
    %758 = vmatprep.subr.bf16.mxu0 %v420
    %759 = vmatpush1.bf16.msra.mxu0 %v419
    %760 = vmatprep.subr.bf16.mxu0 %v428
    %761 = vmatpush1.bf16.msra.mxu0 %v427
    %762 = vmatprep.subr.bf16.mxu0 %v436
    %763 = vmatpush1.bf16.msra.mxu0 %v435
    %764 = vmatprep.subr.bf16.mxu0 %v444
    %765 = vmatpush1.bf16.msra.mxu0 %v443
    %766 = vmatprep.subr.bf16.mxu0 %v452
    %767 = vmatpush1.bf16.msra.mxu0 %v451
    %768 = vmatprep.subr.bf16.mxu0 %v460
    %769 = vmatpush1.bf16.msra.mxu0 %v459
    %770 = vmatprep.subr.bf16.mxu0 %v468
    %771 = vmatpush1.bf16.msra.mxu0 %v467
    %772 = vmatprep.subr.bf16.mxu0 %v476
    %773 = vmatpush1.bf16.msra.mxu0 %v475
    %774 = vmatprep.mubr.bf16.mxu0 %v532
    %775 = vmatmul.mubr.bf16.gmra.mrb[0].mxu0 %v531
    %v776 = vpop.f32.mrb[0].mxu0
    %v777 = vadd.f32 %v736, %v776
    %v778 = vpop.f32.mrb[0].mxu0
    %v779 = vadd.f32 %v738, %v778
    %v780 = vpop.f32.mrb[0].mxu0
    %v781 = vpop.f32.mrb[0].mxu0
    %782 = vdwg.mxu0
    %783 = vmatprep.subr.bf16.mxu0 %v230
    %784 = vmatpush1.bf16.msra.mxu0 %v229
    %785 = vmatprep.subr.bf16.mxu0 %v238
    %786 = vmatpush1.bf16.msra.mxu0 %v237
    %787 = vmatprep.subr.bf16.mxu0 %v246
    %788 = vmatpush1.bf16.msra.mxu0 %v245
    %789 = vmatprep.subr.bf16.mxu0 %v254
    %790 = vmatpush1.bf16.msra.mxu0 %v253
    %791 = vmatprep.subr.bf16.mxu0 %v262
    %792 = vmatpush1.bf16.msra.mxu0 %v261
    %793 = vmatprep.subr.bf16.mxu0 %v270
    %794 = vmatpush1.bf16.msra.mxu0 %v269
    %795 = vmatprep.subr.bf16.mxu0 %v278
    %796 = vmatpush1.bf16.msra.mxu0 %v277
    %797 = vmatprep.subr.bf16.mxu0 %v286
    %798 = vmatpush1.bf16.msra.mxu0 %v285
    %799 = vmatprep.subr.bf16.mxu0 %v294
    %800 = vmatpush1.bf16.msra.mxu0 %v293
    %801 = vmatprep.subr.bf16.mxu0 %v302
    %802 = vmatpush1.bf16.msra.mxu0 %v301
    %803 = vmatprep.subr.bf16.mxu0 %v310
    %804 = vmatpush1.bf16.msra.mxu0 %v309
    %805 = vmatprep.subr.bf16.mxu0 %v318
    %806 = vmatpush1.bf16.msra.mxu0 %v317
    %807 = vmatprep.subr.bf16.mxu0 %v326
    %808 = vmatpush1.bf16.msra.mxu0 %v325
    %809 = vmatprep.subr.bf16.mxu0 %v334
    %810 = vmatpush1.bf16.msra.mxu0 %v333
    %811 = vmatprep.subr.bf16.mxu0 %v342
    %812 = vmatpush1.bf16.msra.mxu0 %v341
    %813 = vmatprep.subr.bf16.mxu0 %v350
    %814 = vmatpush1.bf16.msra.mxu0 %v349
    %815 = vmatprep.mubr.bf16.mxu0 %v530
    %816 = vmatmul.mubr.bf16.gmra.mrb[0].mxu0 %v529
    %v817 = vpop.f32.mrb[0].mxu0
    %v818 = vadd.f32 %v510, %v817
    %v819 = vpop.f32.mrb[0].mxu0
    %v820 = vadd.f32 %v514, %v819
    %v821 = vpop.f32.mrb[0].mxu0
    %v822 = vpop.f32.mrb[0].mxu0
    %823 = vdwg.mxu0
    %824 = vmatprep.subr.bf16.mxu0 %v358
    %825 = vmatpush1.bf16.msra.mxu0 %v357
    %826 = vmatprep.subr.bf16.mxu0 %v366
    %827 = vmatpush1.bf16.msra.mxu0 %v365
    %828 = vmatprep.subr.bf16.mxu0 %v374
    %829 = vmatpush1.bf16.msra.mxu0 %v373
    %830 = vmatprep.subr.bf16.mxu0 %v382
    %831 = vmatpush1.bf16.msra.mxu0 %v381
    %832 = vmatprep.subr.bf16.mxu0 %v390
    %833 = vmatpush1.bf16.msra.mxu0 %v389
    %834 = vmatprep.subr.bf16.mxu0 %v398
    %835 = vmatpush1.bf16.msra.mxu0 %v397
    %836 = vmatprep.subr.bf16.mxu0 %v406
    %837 = vmatpush1.bf16.msra.mxu0 %v405
    %838 = vmatprep.subr.bf16.mxu0 %v414
    %839 = vmatpush1.bf16.msra.mxu0 %v413
    %840 = vmatprep.subr.bf16.mxu0 %v422
    %841 = vmatpush1.bf16.msra.mxu0 %v421
    %842 = vmatprep.subr.bf16.mxu0 %v430
    %843 = vmatpush1.bf16.msra.mxu0 %v429
    %844 = vmatprep.subr.bf16.mxu0 %v438
    %845 = vmatpush1.bf16.msra.mxu0 %v437
    %846 = vmatprep.subr.bf16.mxu0 %v446
    %847 = vmatpush1.bf16.msra.mxu0 %v445
    %848 = vmatprep.subr.bf16.mxu0 %v454
    %849 = vmatpush1.bf16.msra.mxu0 %v453
    %850 = vmatprep.subr.bf16.mxu0 %v462
    %851 = vmatpush1.bf16.msra.mxu0 %v461
    %852 = vmatprep.subr.bf16.mxu0 %v470
    %853 = vmatpush1.bf16.msra.mxu0 %v469
    %854 = vmatprep.subr.bf16.mxu0 %v478
    %855 = vmatpush1.bf16.msra.mxu0 %v477
    %856 = vmatprep.mubr.bf16.mxu0 %v532
    %857 = vmatmul.mubr.bf16.gmra.mrb[0].mxu0 %v531
    %v858 = vpop.f32.mrb[0].mxu0
    %v859 = vadd.f32 %v818, %v858
    %v860 = vpop.f32.mrb[0].mxu0
    %v861 = vadd.f32 %v820, %v860
    %v862 = vpop.f32.mrb[0].mxu0
    %v863 = vpop.f32.mrb[0].mxu0
    %864 = vdwg.mxu0
    %v865 = vmax.f32 %v613, 0.0
    %v866 = vmax.f32 %v615, 0.0
    %v867 = vmax.f32 %v695, 0.0
    %v868 = vmax.f32 %v697, 0.0
    %v869 = vmax.f32 %v777, 0.0
    %v870 = vmax.f32 %v779, 0.0
    %v871 = vmax.f32 %v859, 0.0
    %v872 = vmax.f32 %v861, 0.0
    %s873 = smul.u32 4, 128
    %s874 = smul.u32 %s873, 8
    %s875 = sshll.u32 %s874, 4
    %876 = dma.done %s65, %s875
    %v877 = vpack.c.bf16 %v865, %v865
    %v878 = vpack.c.bf16 %v866, %v866
    %v879 = vpack.c.bf16 %v867, %v867
    %v880 = vpack.c.bf16 %v868, %v868
    %v881 = vpack.c.bf16 %v869, %v869
    %v882 = vpack.c.bf16 %v870, %v870
    %v883 = vpack.c.bf16 %v871, %v871
    %v884 = vpack.c.bf16 %v872, %v872
    %v885 = vld [vmem:[#allocation3] sm:$0xff]
    %v886 = vld [vmem:[#allocation3 + $0x8] sm:$0xff]
    %v887 = vld [vmem:[#allocation3 + $0x10] sm:$0xff]
    %v888 = vld [vmem:[#allocation3 + $0x18] sm:$0xff]
    %v889 = vld [vmem:[#allocation3 + $0x20] sm:$0xff]
    %v890 = vld [vmem:[#allocation3 + $0x28] sm:$0xff]
    %v891 = vld [vmem:[#allocation3 + $0x30] sm:$0xff]
    %v892 = vld [vmem:[#allocation3 + $0x38] sm:$0xff]
    %v893 = vld [vmem:[#allocation3 + $0x40] sm:$0xff]
    %v894 = vld [vmem:[#allocation3 + $0x48] sm:$0xff]
    %v895 = vld [vmem:[#allocation3 + $0x50] sm:$0xff]
    %v896 = vld [vmem:[#allocation3 + $0x58] sm:$0xff]
    %v897 = vld [vmem:[#allocation3 + $0x60] sm:$0xff]
    %v898 = vld [vmem:[#allocation3 + $0x68] sm:$0xff]
    %v899 = vld [vmem:[#allocation3 + $0x70] sm:$0xff]
    %v900 = vld [vmem:[#allocation3 + $0x78] sm:$0xff]
    %v901 = vld [vmem:[#allocation3 + $0x80] sm:$0xff]
    %v902 = vld [vmem:[#allocation3 + $0x88] sm:$0xff]
    %v903 = vld [vmem:[#allocation3 + $0x90] sm:$0xff]
    %v904 = vld [vmem:[#allocation3 + $0x98] sm:$0xff]
    %v905 = vld [vmem:[#allocation3 + $0xa0] sm:$0xff]
    %v906 = vld [vmem:[#allocation3 + $0xa8] sm:$0xff]
    %v907 = vld [vmem:[#allocation3 + $0xb0] sm:$0xff]
    %v908 = vld [vmem:[#allocation3 + $0xb8] sm:$0xff]
    %v909 = vld [vmem:[#allocation3 + $0xc0] sm:$0xff]
    %v910 = vld [vmem:[#allocation3 + $0xc8] sm:$0xff]
    %v911 = vld [vmem:[#allocation3 + $0xd0] sm:$0xff]
    %v912 = vld [vmem:[#allocation3 + $0xd8] sm:$0xff]
    %v913 = vld [vmem:[#allocation3 + $0xe0] sm:$0xff]
    %v914 = vld [vmem:[#allocation3 + $0xe8] sm:$0xff]
    %v915 = vld [vmem:[#allocation3 + $0xf0] sm:$0xff]
    %v916 = vld [vmem:[#allocation3 + $0xf8] sm:$0xff]
    %v917 = vld [vmem:[#allocation3 + $0x100] sm:$0xff]
    %v918 = vld [vmem:[#allocation3 + $0x108] sm:$0xff]
    %v919 = vld [vmem:[#allocation3 + $0x110] sm:$0xff]
    %v920 = vld [vmem:[#allocation3 + $0x118] sm:$0xff]
    %v921 = vld [vmem:[#allocation3 + $0x120] sm:$0xff]
    %v922 = vld [vmem:[#allocation3 + $0x128] sm:$0xff]
    %v923 = vld [vmem:[#allocation3 + $0x130] sm:$0xff]
    %v924 = vld [vmem:[#allocation3 + $0x138] sm:$0xff]
    %v925 = vld [vmem:[#allocation3 + $0x140] sm:$0xff]
    %v926 = vld [vmem:[#allocation3 + $0x148] sm:$0xff]
    %v927 = vld [vmem:[#allocation3 + $0x150] sm:$0xff]
    %v928 = vld [vmem:[#allocation3 + $0x158] sm:$0xff]
    %v929 = vld [vmem:[#allocation3 + $0x160] sm:$0xff]
    %v930 = vld [vmem:[#allocation3 + $0x168] sm:$0xff]
    %v931 = vld [vmem:[#allocation3 + $0x170] sm:$0xff]
    %v932 = vld [vmem:[#allocation3 + $0x178] sm:$0xff]
    %v933 = vld [vmem:[#allocation3 + $0x180] sm:$0xff]
    %v934 = vld [vmem:[#allocation3 + $0x188] sm:$0xff]
    %v935 = vld [vmem:[#allocation3 + $0x190] sm:$0xff]
    %v936 = vld [vmem:[#allocation3 + $0x198] sm:$0xff]
    %v937 = vld [vmem:[#allocation3 + $0x1a0] sm:$0xff]
    %v938 = vld [vmem:[#allocation3 + $0x1a8] sm:$0xff]
    %v939 = vld [vmem:[#allocation3 + $0x1b0] sm:$0xff]
    %v940 = vld [vmem:[#allocation3 + $0x1b8] sm:$0xff]
    %v941 = vld [vmem:[#allocation3 + $0x1c0] sm:$0xff]
    %v942 = vld [vmem:[#allocation3 + $0x1c8] sm:$0xff]
    %v943 = vld [vmem:[#allocation3 + $0x1d0] sm:$0xff]
    %v944 = vld [vmem:[#allocation3 + $0x1d8] sm:$0xff]
    %v945 = vld [vmem:[#allocation3 + $0x1e0] sm:$0xff]
    %v946 = vld [vmem:[#allocation3 + $0x1e8] sm:$0xff]
    %v947 = vld [vmem:[#allocation3 + $0x1f0] sm:$0xff]
    %v948 = vld [vmem:[#allocation3 + $0x1f8] sm:$0xff]
    %v949 = vld [vmem:[#allocation3 + $0x200] sm:$0xff]
    %v950 = vld [vmem:[#allocation3 + $0x208] sm:$0xff]
    %v951 = vld [vmem:[#allocation3 + $0x210] sm:$0xff]
    %v952 = vld [vmem:[#allocation3 + $0x218] sm:$0xff]
    %v953 = vld [vmem:[#allocation3 + $0x220] sm:$0xff]
    %v954 = vld [vmem:[#allocation3 + $0x228] sm:$0xff]
    %v955 = vld [vmem:[#allocation3 + $0x230] sm:$0xff]
    %v956 = vld [vmem:[#allocation3 + $0x238] sm:$0xff]
    %v957 = vld [vmem:[#allocation3 + $0x240] sm:$0xff]
    %v958 = vld [vmem:[#allocation3 + $0x248] sm:$0xff]
    %v959 = vld [vmem:[#allocation3 + $0x250] sm:$0xff]
    %v960 = vld [vmem:[#allocation3 + $0x258] sm:$0xff]
    %v961 = vld [vmem:[#allocation3 + $0x260] sm:$0xff]
    %v962 = vld [vmem:[#allocation3 + $0x268] sm:$0xff]
    %v963 = vld [vmem:[#allocation3 + $0x270] sm:$0xff]
    %v964 = vld [vmem:[#allocation3 + $0x278] sm:$0xff]
    %v965 = vld [vmem:[#allocation3 + $0x280] sm:$0xff]
    %v966 = vld [vmem:[#allocation3 + $0x288] sm:$0xff]
    %v967 = vld [vmem:[#allocation3 + $0x290] sm:$0xff]
    %v968 = vld [vmem:[#allocation3 + $0x298] sm:$0xff]
    %v969 = vld [vmem:[#allocation3 + $0x2a0] sm:$0xff]
    %v970 = vld [vmem:[#allocation3 + $0x2a8] sm:$0xff]
    %v971 = vld [vmem:[#allocation3 + $0x2b0] sm:$0xff]
    %v972 = vld [vmem:[#allocation3 + $0x2b8] sm:$0xff]
    %v973 = vld [vmem:[#allocation3 + $0x2c0] sm:$0xff]
    %v974 = vld [vmem:[#allocation3 + $0x2c8] sm:$0xff]
    %v975 = vld [vmem:[#allocation3 + $0x2d0] sm:$0xff]
    %v976 = vld [vmem:[#allocation3 + $0x2d8] sm:$0xff]
    %v977 = vld [vmem:[#allocation3 + $0x2e0] sm:$0xff]
    %v978 = vld [vmem:[#allocation3 + $0x2e8] sm:$0xff]
    %v979 = vld [vmem:[#allocation3 + $0x2f0] sm:$0xff]
    %v980 = vld [vmem:[#allocation3 + $0x2f8] sm:$0xff]
    %v981 = vld [vmem:[#allocation3 + $0x300] sm:$0xff]
    %v982 = vld [vmem:[#allocation3 + $0x308] sm:$0xff]
    %v983 = vld [vmem:[#allocation3 + $0x310] sm:$0xff]
    %v984 = vld [vmem:[#allocation3 + $0x318] sm:$0xff]
    %v985 = vld [vmem:[#allocation3 + $0x320] sm:$0xff]
    %v986 = vld [vmem:[#allocation3 + $0x328] sm:$0xff]
    %v987 = vld [vmem:[#allocation3 + $0x330] sm:$0xff]
    %v988 = vld [vmem:[#allocation3 + $0x338] sm:$0xff]
    %v989 = vld [vmem:[#allocation3 + $0x340] sm:$0xff]
    %v990 = vld [vmem:[#allocation3 + $0x348] sm:$0xff]
    %v991 = vld [vmem:[#allocation3 + $0x350] sm:$0xff]
    %v992 = vld [vmem:[#allocation3 + $0x358] sm:$0xff]
    %v993 = vld [vmem:[#allocation3 + $0x360] sm:$0xff]
    %v994 = vld [vmem:[#allocation3 + $0x368] sm:$0xff]
    %v995 = vld [vmem:[#allocation3 + $0x370] sm:$0xff]
    %v996 = vld [vmem:[#allocation3 + $0x378] sm:$0xff]
    %v997 = vld [vmem:[#allocation3 + $0x380] sm:$0xff]
    %v998 = vld [vmem:[#allocation3 + $0x388] sm:$0xff]
    %v999 = vld [vmem:[#allocation3 + $0x390] sm:$0xff]
    %v1000 = vld [vmem:[#allocation3 + $0x398] sm:$0xff]
    %v1001 = vld [vmem:[#allocation3 + $0x3a0] sm:$0xff]
    %v1002 = vld [vmem:[#allocation3 + $0x3a8] sm:$0xff]
    %v1003 = vld [vmem:[#allocation3 + $0x3b0] sm:$0xff]
    %v1004 = vld [vmem:[#allocation3 + $0x3b8] sm:$0xff]
    %v1005 = vld [vmem:[#allocation3 + $0x3c0] sm:$0xff]
    %v1006 = vld [vmem:[#allocation3 + $0x3c8] sm:$0xff]
    %v1007 = vld [vmem:[#allocation3 + $0x3d0] sm:$0xff]
    %v1008 = vld [vmem:[#allocation3 + $0x3d8] sm:$0xff]
    %v1009 = vld [vmem:[#allocation3 + $0x3e0] sm:$0xff]
    %v1010 = vld [vmem:[#allocation3 + $0x3e8] sm:$0xff]
    %v1011 = vld [vmem:[#allocation3 + $0x3f0] sm:$0xff]
    %v1012 = vld [vmem:[#allocation3 + $0x3f8] sm:$0xff]
    %v1013 = vld [vmem:[#allocation3 + $0x400] sm:$0xff]
    %v1014 = vld [vmem:[#allocation3 + $0x408] sm:$0xff]
    %v1015 = vld [vmem:[#allocation3 + $0x410] sm:$0xff]
    %v1016 = vld [vmem:[#allocation3 + $0x418] sm:$0xff]
    %v1017 = vld [vmem:[#allocation3 + $0x420] sm:$0xff]
    %v1018 = vld [vmem:[#allocation3 + $0x428] sm:$0xff]
    %v1019 = vld [vmem:[#allocation3 + $0x430] sm:$0xff]
    %v1020 = vld [vmem:[#allocation3 + $0x438] sm:$0xff]
    %v1021 = vld [vmem:[#allocation3 + $0x440] sm:$0xff]
    %v1022 = vld [vmem:[#allocation3 + $0x448] sm:$0xff]
    %v1023 = vld [vmem:[#allocation3 + $0x450] sm:$0xff]
    %v1024 = vld [vmem:[#allocation3 + $0x458] sm:$0xff]
    %v1025 = vld [vmem:[#allocation3 + $0x460] sm:$0xff]
    %v1026 = vld [vmem:[#allocation3 + $0x468] sm:$0xff]
    %v1027 = vld [vmem:[#allocation3 + $0x470] sm:$0xff]
    %v1028 = vld [vmem:[#allocation3 + $0x478] sm:$0xff]
    %v1029 = vld [vmem:[#allocation3 + $0x480] sm:$0xff]
    %v1030 = vld [vmem:[#allocation3 + $0x488] sm:$0xff]
    %v1031 = vld [vmem:[#allocation3 + $0x490] sm:$0xff]
    %v1032 = vld [vmem:[#allocation3 + $0x498] sm:$0xff]
    %v1033 = vld [vmem:[#allocation3 + $0x4a0] sm:$0xff]
    %v1034 = vld [vmem:[#allocation3 + $0x4a8] sm:$0xff]
    %v1035 = vld [vmem:[#allocation3 + $0x4b0] sm:$0xff]
    %v1036 = vld [vmem:[#allocation3 + $0x4b8] sm:$0xff]
    %v1037 = vld [vmem:[#allocation3 + $0x4c0] sm:$0xff]
    %v1038 = vld [vmem:[#allocation3 + $0x4c8] sm:$0xff]
    %v1039 = vld [vmem:[#allocation3 + $0x4d0] sm:$0xff]
    %v1040 = vld [vmem:[#allocation3 + $0x4d8] sm:$0xff]
    %v1041 = vld [vmem:[#allocation3 + $0x4e0] sm:$0xff]
    %v1042 = vld [vmem:[#allocation3 + $0x4e8] sm:$0xff]
    %v1043 = vld [vmem:[#allocation3 + $0x4f0] sm:$0xff]
    %v1044 = vld [vmem:[#allocation3 + $0x4f8] sm:$0xff]
    %v1045 = vld [vmem:[#allocation3 + $0x500] sm:$0xff]
    %v1046 = vld [vmem:[#allocation3 + $0x508] sm:$0xff]
    %v1047 = vld [vmem:[#allocation3 + $0x510] sm:$0xff]
    %v1048 = vld [vmem:[#allocation3 + $0x518] sm:$0xff]
    %v1049 = vld [vmem:[#allocation3 + $0x520] sm:$0xff]
    %v1050 = vld [vmem:[#allocation3 + $0x528] sm:$0xff]
    %v1051 = vld [vmem:[#allocation3 + $0x530] sm:$0xff]
    %v1052 = vld [vmem:[#allocation3 + $0x538] sm:$0xff]
    %v1053 = vld [vmem:[#allocation3 + $0x540] sm:$0xff]
    %v1054 = vld [vmem:[#allocation3 + $0x548] sm:$0xff]
    %v1055 = vld [vmem:[#allocation3 + $0x550] sm:$0xff]
    %v1056 = vld [vmem:[#allocation3 + $0x558] sm:$0xff]
    %v1057 = vld [vmem:[#allocation3 + $0x560] sm:$0xff]
    %v1058 = vld [vmem:[#allocation3 + $0x568] sm:$0xff]
    %v1059 = vld [vmem:[#allocation3 + $0x570] sm:$0xff]
    %v1060 = vld [vmem:[#allocation3 + $0x578] sm:$0xff]
    %v1061 = vld [vmem:[#allocation3 + $0x580] sm:$0xff]
    %v1062 = vld [vmem:[#allocation3 + $0x588] sm:$0xff]
    %v1063 = vld [vmem:[#allocation3 + $0x590] sm:$0xff]
    %v1064 = vld [vmem:[#allocation3 + $0x598] sm:$0xff]
    %v1065 = vld [vmem:[#allocation3 + $0x5a0] sm:$0xff]
    %v1066 = vld [vmem:[#allocation3 + $0x5a8] sm:$0xff]
    %v1067 = vld [vmem:[#allocation3 + $0x5b0] sm:$0xff]
    %v1068 = vld [vmem:[#allocation3 + $0x5b8] sm:$0xff]
    %v1069 = vld [vmem:[#allocation3 + $0x5c0] sm:$0xff]
    %v1070 = vld [vmem:[#allocation3 + $0x5c8] sm:$0xff]
    %v1071 = vld [vmem:[#allocation3 + $0x5d0] sm:$0xff]
    %v1072 = vld [vmem:[#allocation3 + $0x5d8] sm:$0xff]
    %v1073 = vld [vmem:[#allocation3 + $0x5e0] sm:$0xff]
    %v1074 = vld [vmem:[#allocation3 + $0x5e8] sm:$0xff]
    %v1075 = vld [vmem:[#allocation3 + $0x5f0] sm:$0xff]
    %v1076 = vld [vmem:[#allocation3 + $0x5f8] sm:$0xff]
    %v1077 = vld [vmem:[#allocation3 + $0x600] sm:$0xff]
    %v1078 = vld [vmem:[#allocation3 + $0x608] sm:$0xff]
    %v1079 = vld [vmem:[#allocation3 + $0x610] sm:$0xff]
    %v1080 = vld [vmem:[#allocation3 + $0x618] sm:$0xff]
    %v1081 = vld [vmem:[#allocation3 + $0x620] sm:$0xff]
    %v1082 = vld [vmem:[#allocation3 + $0x628] sm:$0xff]
    %v1083 = vld [vmem:[#allocation3 + $0x630] sm:$0xff]
    %v1084 = vld [vmem:[#allocation3 + $0x638] sm:$0xff]
    %v1085 = vld [vmem:[#allocation3 + $0x640] sm:$0xff]
    %v1086 = vld [vmem:[#allocation3 + $0x648] sm:$0xff]
    %v1087 = vld [vmem:[#allocation3 + $0x650] sm:$0xff]
    %v1088 = vld [vmem:[#allocation3 + $0x658] sm:$0xff]
    %v1089 = vld [vmem:[#allocation3 + $0x660] sm:$0xff]
    %v1090 = vld [vmem:[#allocation3 + $0x668] sm:$0xff]
    %v1091 = vld [vmem:[#allocation3 + $0x670] sm:$0xff]
    %v1092 = vld [vmem:[#allocation3 + $0x678] sm:$0xff]
    %v1093 = vld [vmem:[#allocation3 + $0x680] sm:$0xff]
    %v1094 = vld [vmem:[#allocation3 + $0x688] sm:$0xff]
    %v1095 = vld [vmem:[#allocation3 + $0x690] sm:$0xff]
    %v1096 = vld [vmem:[#allocation3 + $0x698] sm:$0xff]
    %v1097 = vld [vmem:[#allocation3 + $0x6a0] sm:$0xff]
    %v1098 = vld [vmem:[#allocation3 + $0x6a8] sm:$0xff]
    %v1099 = vld [vmem:[#allocation3 + $0x6b0] sm:$0xff]
    %v1100 = vld [vmem:[#allocation3 + $0x6b8] sm:$0xff]
    %v1101 = vld [vmem:[#allocation3 + $0x6c0] sm:$0xff]
    %v1102 = vld [vmem:[#allocation3 + $0x6c8] sm:$0xff]
    %v1103 = vld [vmem:[#allocation3 + $0x6d0] sm:$0xff]
    %v1104 = vld [vmem:[#allocation3 + $0x6d8] sm:$0xff]
    %v1105 = vld [vmem:[#allocation3 + $0x6e0] sm:$0xff]
    %v1106 = vld [vmem:[#allocation3 + $0x6e8] sm:$0xff]
    %v1107 = vld [vmem:[#allocation3 + $0x6f0] sm:$0xff]
    %v1108 = vld [vmem:[#allocation3 + $0x6f8] sm:$0xff]
    %v1109 = vld [vmem:[#allocation3 + $0x700] sm:$0xff]
    %v1110 = vld [vmem:[#allocation3 + $0x708] sm:$0xff]
    %v1111 = vld [vmem:[#allocation3 + $0x710] sm:$0xff]
    %v1112 = vld [vmem:[#allocation3 + $0x718] sm:$0xff]
    %v1113 = vld [vmem:[#allocation3 + $0x720] sm:$0xff]
    %v1114 = vld [vmem:[#allocation3 + $0x728] sm:$0xff]
    %v1115 = vld [vmem:[#allocation3 + $0x730] sm:$0xff]
    %v1116 = vld [vmem:[#allocation3 + $0x738] sm:$0xff]
    %v1117 = vld [vmem:[#allocation3 + $0x740] sm:$0xff]
    %v1118 = vld [vmem:[#allocation3 + $0x748] sm:$0xff]
    %v1119 = vld [vmem:[#allocation3 + $0x750] sm:$0xff]
    %v1120 = vld [vmem:[#allocation3 + $0x758] sm:$0xff]
    %v1121 = vld [vmem:[#allocation3 + $0x760] sm:$0xff]
    %v1122 = vld [vmem:[#allocation3 + $0x768] sm:$0xff]
    %v1123 = vld [vmem:[#allocation3 + $0x770] sm:$0xff]
    %v1124 = vld [vmem:[#allocation3 + $0x778] sm:$0xff]
    %v1125 = vld [vmem:[#allocation3 + $0x780] sm:$0xff]
    %v1126 = vld [vmem:[#allocation3 + $0x788] sm:$0xff]
    %v1127 = vld [vmem:[#allocation3 + $0x790] sm:$0xff]
    %v1128 = vld [vmem:[#allocation3 + $0x798] sm:$0xff]
    %v1129 = vld [vmem:[#allocation3 + $0x7a0] sm:$0xff]
    %v1130 = vld [vmem:[#allocation3 + $0x7a8] sm:$0xff]
    %v1131 = vld [vmem:[#allocation3 + $0x7b0] sm:$0xff]
    %v1132 = vld [vmem:[#allocation3 + $0x7b8] sm:$0xff]
    %v1133 = vld [vmem:[#allocation3 + $0x7c0] sm:$0xff]
    %v1134 = vld [vmem:[#allocation3 + $0x7c8] sm:$0xff]
    %v1135 = vld [vmem:[#allocation3 + $0x7d0] sm:$0xff]
    %v1136 = vld [vmem:[#allocation3 + $0x7d8] sm:$0xff]
    %v1137 = vld [vmem:[#allocation3 + $0x7e0] sm:$0xff]
    %v1138 = vld [vmem:[#allocation3 + $0x7e8] sm:$0xff]
    %v1139 = vld [vmem:[#allocation3 + $0x7f0] sm:$0xff]
    %v1140 = vld [vmem:[#allocation3 + $0x7f8] sm:$0xff]
    %v1141 = vld [vmem:[#allocation3 + $0x800] sm:$0xff]
    %v1142 = vld [vmem:[#allocation3 + $0x808] sm:$0xff]
    %v1143 = vld [vmem:[#allocation3 + $0x810] sm:$0xff]
    %v1144 = vld [vmem:[#allocation3 + $0x818] sm:$0xff]
    %v1145 = vld [vmem:[#allocation3 + $0x820] sm:$0xff]
    %v1146 = vld [vmem:[#allocation3 + $0x828] sm:$0xff]
    %v1147 = vld [vmem:[#allocation3 + $0x830] sm:$0xff]
    %v1148 = vld [vmem:[#allocation3 + $0x838] sm:$0xff]
    %v1149 = vld [vmem:[#allocation3 + $0x840] sm:$0xff]
    %v1150 = vld [vmem:[#allocation3 + $0x848] sm:$0xff]
    %v1151 = vld [vmem:[#allocation3 + $0x850] sm:$0xff]
    %v1152 = vld [vmem:[#allocation3 + $0x858] sm:$0xff]
    %v1153 = vld [vmem:[#allocation3 + $0x860] sm:$0xff]
    %v1154 = vld [vmem:[#allocation3 + $0x868] sm:$0xff]
    %v1155 = vld [vmem:[#allocation3 + $0x870] sm:$0xff]
    %v1156 = vld [vmem:[#allocation3 + $0x878] sm:$0xff]
    %v1157 = vld [vmem:[#allocation3 + $0x880] sm:$0xff]
    %v1158 = vld [vmem:[#allocation3 + $0x888] sm:$0xff]
    %v1159 = vld [vmem:[#allocation3 + $0x890] sm:$0xff]
    %v1160 = vld [vmem:[#allocation3 + $0x898] sm:$0xff]
    %v1161 = vld [vmem:[#allocation3 + $0x8a0] sm:$0xff]
    %v1162 = vld [vmem:[#allocation3 + $0x8a8] sm:$0xff]
    %v1163 = vld [vmem:[#allocation3 + $0x8b0] sm:$0xff]
    %v1164 = vld [vmem:[#allocation3 + $0x8b8] sm:$0xff]
    %v1165 = vld [vmem:[#allocation3 + $0x8c0] sm:$0xff]
    %v1166 = vld [vmem:[#allocation3 + $0x8c8] sm:$0xff]
    %v1167 = vld [vmem:[#allocation3 + $0x8d0] sm:$0xff]
    %v1168 = vld [vmem:[#allocation3 + $0x8d8] sm:$0xff]
    %v1169 = vld [vmem:[#allocation3 + $0x8e0] sm:$0xff]
    %v1170 = vld [vmem:[#allocation3 + $0x8e8] sm:$0xff]
    %v1171 = vld [vmem:[#allocation3 + $0x8f0] sm:$0xff]
    %v1172 = vld [vmem:[#allocation3 + $0x8f8] sm:$0xff]
    %v1173 = vld [vmem:[#allocation3 + $0x900] sm:$0xff]
    %v1174 = vld [vmem:[#allocation3 + $0x908] sm:$0xff]
    %v1175 = vld [vmem:[#allocation3 + $0x910] sm:$0xff]
    %v1176 = vld [vmem:[#allocation3 + $0x918] sm:$0xff]
    %v1177 = vld [vmem:[#allocation3 + $0x920] sm:$0xff]
    %v1178 = vld [vmem:[#allocation3 + $0x928] sm:$0xff]
    %v1179 = vld [vmem:[#allocation3 + $0x930] sm:$0xff]
    %v1180 = vld [vmem:[#allocation3 + $0x938] sm:$0xff]
    %v1181 = vld [vmem:[#allocation3 + $0x940] sm:$0xff]
    %v1182 = vld [vmem:[#allocation3 + $0x948] sm:$0xff]
    %v1183 = vld [vmem:[#allocation3 + $0x950] sm:$0xff]
    %v1184 = vld [vmem:[#allocation3 + $0x958] sm:$0xff]
    %v1185 = vld [vmem:[#allocation3 + $0x960] sm:$0xff]
    %v1186 = vld [vmem:[#allocation3 + $0x968] sm:$0xff]
    %v1187 = vld [vmem:[#allocation3 + $0x970] sm:$0xff]
    %v1188 = vld [vmem:[#allocation3 + $0x978] sm:$0xff]
    %v1189 = vld [vmem:[#allocation3 + $0x980] sm:$0xff]
    %v1190 = vld [vmem:[#allocation3 + $0x988] sm:$0xff]
    %v1191 = vld [vmem:[#allocation3 + $0x990] sm:$0xff]
    %v1192 = vld [vmem:[#allocation3 + $0x998] sm:$0xff]
    %v1193 = vld [vmem:[#allocation3 + $0x9a0] sm:$0xff]
    %v1194 = vld [vmem:[#allocation3 + $0x9a8] sm:$0xff]
    %v1195 = vld [vmem:[#allocation3 + $0x9b0] sm:$0xff]
    %v1196 = vld [vmem:[#allocation3 + $0x9b8] sm:$0xff]
    %v1197 = vld [vmem:[#allocation3 + $0x9c0] sm:$0xff]
    %v1198 = vld [vmem:[#allocation3 + $0x9c8] sm:$0xff]
    %v1199 = vld [vmem:[#allocation3 + $0x9d0] sm:$0xff]
    %v1200 = vld [vmem:[#allocation3 + $0x9d8] sm:$0xff]
    %v1201 = vld [vmem:[#allocation3 + $0x9e0] sm:$0xff]
    %v1202 = vld [vmem:[#allocation3 + $0x9e8] sm:$0xff]
    %v1203 = vld [vmem:[#allocation3 + $0x9f0] sm:$0xff]
    %v1204 = vld [vmem:[#allocation3 + $0x9f8] sm:$0xff]
    %v1205 = vld [vmem:[#allocation3 + $0xa00] sm:$0xff]
    %v1206 = vld [vmem:[#allocation3 + $0xa08] sm:$0xff]
    %v1207 = vld [vmem:[#allocation3 + $0xa10] sm:$0xff]
    %v1208 = vld [vmem:[#allocation3 + $0xa18] sm:$0xff]
    %v1209 = vld [vmem:[#allocation3 + $0xa20] sm:$0xff]
    %v1210 = vld [vmem:[#allocation3 + $0xa28] sm:$0xff]
    %v1211 = vld [vmem:[#allocation3 + $0xa30] sm:$0xff]
    %v1212 = vld [vmem:[#allocation3 + $0xa38] sm:$0xff]
    %v1213 = vld [vmem:[#allocation3 + $0xa40] sm:$0xff]
    %v1214 = vld [vmem:[#allocation3 + $0xa48] sm:$0xff]
    %v1215 = vld [vmem:[#allocation3 + $0xa50] sm:$0xff]
    %v1216 = vld [vmem:[#allocation3 + $0xa58] sm:$0xff]
    %v1217 = vld [vmem:[#allocation3 + $0xa60] sm:$0xff]
    %v1218 = vld [vmem:[#allocation3 + $0xa68] sm:$0xff]
    %v1219 = vld [vmem:[#allocation3 + $0xa70] sm:$0xff]
    %v1220 = vld [vmem:[#allocation3 + $0xa78] sm:$0xff]
    %v1221 = vld [vmem:[#allocation3 + $0xa80] sm:$0xff]
    %v1222 = vld [vmem:[#allocation3 + $0xa88] sm:$0xff]
    %v1223 = vld [vmem:[#allocation3 + $0xa90] sm:$0xff]
    %v1224 = vld [vmem:[#allocation3 + $0xa98] sm:$0xff]
    %v1225 = vld [vmem:[#allocation3 + $0xaa0] sm:$0xff]
    %v1226 = vld [vmem:[#allocation3 + $0xaa8] sm:$0xff]
    %v1227 = vld [vmem:[#allocation3 + $0xab0] sm:$0xff]
    %v1228 = vld [vmem:[#allocation3 + $0xab8] sm:$0xff]
    %v1229 = vld [vmem:[#allocation3 + $0xac0] sm:$0xff]
    %v1230 = vld [vmem:[#allocation3 + $0xac8] sm:$0xff]
    %v1231 = vld [vmem:[#allocation3 + $0xad0] sm:$0xff]
    %v1232 = vld [vmem:[#allocation3 + $0xad8] sm:$0xff]
    %v1233 = vld [vmem:[#allocation3 + $0xae0] sm:$0xff]
    %v1234 = vld [vmem:[#allocation3 + $0xae8] sm:$0xff]
    %v1235 = vld [vmem:[#allocation3 + $0xaf0] sm:$0xff]
    %v1236 = vld [vmem:[#allocation3 + $0xaf8] sm:$0xff]
    %v1237 = vld [vmem:[#allocation3 + $0xb00] sm:$0xff]
    %v1238 = vld [vmem:[#allocation3 + $0xb08] sm:$0xff]
    %v1239 = vld [vmem:[#allocation3 + $0xb10] sm:$0xff]
    %v1240 = vld [vmem:[#allocation3 + $0xb18] sm:$0xff]
    %v1241 = vld [vmem:[#allocation3 + $0xb20] sm:$0xff]
    %v1242 = vld [vmem:[#allocation3 + $0xb28] sm:$0xff]
    %v1243 = vld [vmem:[#allocation3 + $0xb30] sm:$0xff]
    %v1244 = vld [vmem:[#allocation3 + $0xb38] sm:$0xff]
    %v1245 = vld [vmem:[#allocation3 + $0xb40] sm:$0xff]
    %v1246 = vld [vmem:[#allocation3 + $0xb48] sm:$0xff]
    %v1247 = vld [vmem:[#allocation3 + $0xb50] sm:$0xff]
    %v1248 = vld [vmem:[#allocation3 + $0xb58] sm:$0xff]
    %v1249 = vld [vmem:[#allocation3 + $0xb60] sm:$0xff]
    %v1250 = vld [vmem:[#allocation3 + $0xb68] sm:$0xff]
    %v1251 = vld [vmem:[#allocation3 + $0xb70] sm:$0xff]
    %v1252 = vld [vmem:[#allocation3 + $0xb78] sm:$0xff]
    %v1253 = vld [vmem:[#allocation3 + $0xb80] sm:$0xff]
    %v1254 = vld [vmem:[#allocation3 + $0xb88] sm:$0xff]
    %v1255 = vld [vmem:[#allocation3 + $0xb90] sm:$0xff]
    %v1256 = vld [vmem:[#allocation3 + $0xb98] sm:$0xff]
    %v1257 = vld [vmem:[#allocation3 + $0xba0] sm:$0xff]
    %v1258 = vld [vmem:[#allocation3 + $0xba8] sm:$0xff]
    %v1259 = vld [vmem:[#allocation3 + $0xbb0] sm:$0xff]
    %v1260 = vld [vmem:[#allocation3 + $0xbb8] sm:$0xff]
    %v1261 = vld [vmem:[#allocation3 + $0xbc0] sm:$0xff]
    %v1262 = vld [vmem:[#allocation3 + $0xbc8] sm:$0xff]
    %v1263 = vld [vmem:[#allocation3 + $0xbd0] sm:$0xff]
    %v1264 = vld [vmem:[#allocation3 + $0xbd8] sm:$0xff]
    %v1265 = vld [vmem:[#allocation3 + $0xbe0] sm:$0xff]
    %v1266 = vld [vmem:[#allocation3 + $0xbe8] sm:$0xff]
    %v1267 = vld [vmem:[#allocation3 + $0xbf0] sm:$0xff]
    %v1268 = vld [vmem:[#allocation3 + $0xbf8] sm:$0xff]
    %v1269 = vld [vmem:[#allocation3 + $0xc00] sm:$0xff]
    %v1270 = vld [vmem:[#allocation3 + $0xc08] sm:$0xff]
    %v1271 = vld [vmem:[#allocation3 + $0xc10] sm:$0xff]
    %v1272 = vld [vmem:[#allocation3 + $0xc18] sm:$0xff]
    %v1273 = vld [vmem:[#allocation3 + $0xc20] sm:$0xff]
    %v1274 = vld [vmem:[#allocation3 + $0xc28] sm:$0xff]
    %v1275 = vld [vmem:[#allocation3 + $0xc30] sm:$0xff]
    %v1276 = vld [vmem:[#allocation3 + $0xc38] sm:$0xff]
    %v1277 = vld [vmem:[#allocation3 + $0xc40] sm:$0xff]
    %v1278 = vld [vmem:[#allocation3 + $0xc48] sm:$0xff]
    %v1279 = vld [vmem:[#allocation3 + $0xc50] sm:$0xff]
    %v1280 = vld [vmem:[#allocation3 + $0xc58] sm:$0xff]
    %v1281 = vld [vmem:[#allocation3 + $0xc60] sm:$0xff]
    %v1282 = vld [vmem:[#allocation3 + $0xc68] sm:$0xff]
    %v1283 = vld [vmem:[#allocation3 + $0xc70] sm:$0xff]
    %v1284 = vld [vmem:[#allocation3 + $0xc78] sm:$0xff]
    %v1285 = vld [vmem:[#allocation3 + $0xc80] sm:$0xff]
    %v1286 = vld [vmem:[#allocation3 + $0xc88] sm:$0xff]
    %v1287 = vld [vmem:[#allocation3 + $0xc90] sm:$0xff]
    %v1288 = vld [vmem:[#allocation3 + $0xc98] sm:$0xff]
    %v1289 = vld [vmem:[#allocation3 + $0xca0] sm:$0xff]
    %v1290 = vld [vmem:[#allocation3 + $0xca8] sm:$0xff]
    %v1291 = vld [vmem:[#allocation3 + $0xcb0] sm:$0xff]
    %v1292 = vld [vmem:[#allocation3 + $0xcb8] sm:$0xff]
    %v1293 = vld [vmem:[#allocation3 + $0xcc0] sm:$0xff]
    %v1294 = vld [vmem:[#allocation3 + $0xcc8] sm:$0xff]
    %v1295 = vld [vmem:[#allocation3 + $0xcd0] sm:$0xff]
    %v1296 = vld [vmem:[#allocation3 + $0xcd8] sm:$0xff]
    %v1297 = vld [vmem:[#allocation3 + $0xce0] sm:$0xff]
    %v1298 = vld [vmem:[#allocation3 + $0xce8] sm:$0xff]
    %v1299 = vld [vmem:[#allocation3 + $0xcf0] sm:$0xff]
    %v1300 = vld [vmem:[#allocation3 + $0xcf8] sm:$0xff]
    %v1301 = vld [vmem:[#allocation3 + $0xd00] sm:$0xff]
    %v1302 = vld [vmem:[#allocation3 + $0xd08] sm:$0xff]
    %v1303 = vld [vmem:[#allocation3 + $0xd10] sm:$0xff]
    %v1304 = vld [vmem:[#allocation3 + $0xd18] sm:$0xff]
    %v1305 = vld [vmem:[#allocation3 + $0xd20] sm:$0xff]
    %v1306 = vld [vmem:[#allocation3 + $0xd28] sm:$0xff]
    %v1307 = vld [vmem:[#allocation3 + $0xd30] sm:$0xff]
    %v1308 = vld [vmem:[#allocation3 + $0xd38] sm:$0xff]
    %v1309 = vld [vmem:[#allocation3 + $0xd40] sm:$0xff]
    %v1310 = vld [vmem:[#allocation3 + $0xd48] sm:$0xff]
    %v1311 = vld [vmem:[#allocation3 + $0xd50] sm:$0xff]
    %v1312 = vld [vmem:[#allocation3 + $0xd58] sm:$0xff]
    %v1313 = vld [vmem:[#allocation3 + $0xd60] sm:$0xff]
    %v1314 = vld [vmem:[#allocation3 + $0xd68] sm:$0xff]
    %v1315 = vld [vmem:[#allocation3 + $0xd70] sm:$0xff]
    %v1316 = vld [vmem:[#allocation3 + $0xd78] sm:$0xff]
    %v1317 = vld [vmem:[#allocation3 + $0xd80] sm:$0xff]
    %v1318 = vld [vmem:[#allocation3 + $0xd88] sm:$0xff]
    %v1319 = vld [vmem:[#allocation3 + $0xd90] sm:$0xff]
    %v1320 = vld [vmem:[#allocation3 + $0xd98] sm:$0xff]
    %v1321 = vld [vmem:[#allocation3 + $0xda0] sm:$0xff]
    %v1322 = vld [vmem:[#allocation3 + $0xda8] sm:$0xff]
    %v1323 = vld [vmem:[#allocation3 + $0xdb0] sm:$0xff]
    %v1324 = vld [vmem:[#allocation3 + $0xdb8] sm:$0xff]
    %v1325 = vld [vmem:[#allocation3 + $0xdc0] sm:$0xff]
    %v1326 = vld [vmem:[#allocation3 + $0xdc8] sm:$0xff]
    %v1327 = vld [vmem:[#allocation3 + $0xdd0] sm:$0xff]
    %v1328 = vld [vmem:[#allocation3 + $0xdd8] sm:$0xff]
    %v1329 = vld [vmem:[#allocation3 + $0xde0] sm:$0xff]
    %v1330 = vld [vmem:[#allocation3 + $0xde8] sm:$0xff]
    %v1331 = vld [vmem:[#allocation3 + $0xdf0] sm:$0xff]
    %v1332 = vld [vmem:[#allocation3 + $0xdf8] sm:$0xff]
    %v1333 = vld [vmem:[#allocation3 + $0xe00] sm:$0xff]
    %v1334 = vld [vmem:[#allocation3 + $0xe08] sm:$0xff]
    %v1335 = vld [vmem:[#allocation3 + $0xe10] sm:$0xff]
    %v1336 = vld [vmem:[#allocation3 + $0xe18] sm:$0xff]
    %v1337 = vld [vmem:[#allocation3 + $0xe20] sm:$0xff]
    %v1338 = vld [vmem:[#allocation3 + $0xe28] sm:$0xff]
    %v1339 = vld [vmem:[#allocation3 + $0xe30] sm:$0xff]
    %v1340 = vld [vmem:[#allocation3 + $0xe38] sm:$0xff]
    %v1341 = vld [vmem:[#allocation3 + $0xe40] sm:$0xff]
    %v1342 = vld [vmem:[#allocation3 + $0xe48] sm:$0xff]
    %v1343 = vld [vmem:[#allocation3 + $0xe50] sm:$0xff]
    %v1344 = vld [vmem:[#allocation3 + $0xe58] sm:$0xff]
    %v1345 = vld [vmem:[#allocation3 + $0xe60] sm:$0xff]
    %v1346 = vld [vmem:[#allocation3 + $0xe68] sm:$0xff]
    %v1347 = vld [vmem:[#allocation3 + $0xe70] sm:$0xff]
    %v1348 = vld [vmem:[#allocation3 + $0xe78] sm:$0xff]
    %v1349 = vld [vmem:[#allocation3 + $0xe80] sm:$0xff]
    %v1350 = vld [vmem:[#allocation3 + $0xe88] sm:$0xff]
    %v1351 = vld [vmem:[#allocation3 + $0xe90] sm:$0xff]
    %v1352 = vld [vmem:[#allocation3 + $0xe98] sm:$0xff]
    %v1353 = vld [vmem:[#allocation3 + $0xea0] sm:$0xff]
    %v1354 = vld [vmem:[#allocation3 + $0xea8] sm:$0xff]
    %v1355 = vld [vmem:[#allocation3 + $0xeb0] sm:$0xff]
    %v1356 = vld [vmem:[#allocation3 + $0xeb8] sm:$0xff]
    %v1357 = vld [vmem:[#allocation3 + $0xec0] sm:$0xff]
    %v1358 = vld [vmem:[#allocation3 + $0xec8] sm:$0xff]
    %v1359 = vld [vmem:[#allocation3 + $0xed0] sm:$0xff]
    %v1360 = vld [vmem:[#allocation3 + $0xed8] sm:$0xff]
    %v1361 = vld [vmem:[#allocation3 + $0xee0] sm:$0xff]
    %v1362 = vld [vmem:[#allocation3 + $0xee8] sm:$0xff]
    %v1363 = vld [vmem:[#allocation3 + $0xef0] sm:$0xff]
    %v1364 = vld [vmem:[#allocation3 + $0xef8] sm:$0xff]
    %v1365 = vld [vmem:[#allocation3 + $0xf00] sm:$0xff]
    %v1366 = vld [vmem:[#allocation3 + $0xf08] sm:$0xff]
    %v1367 = vld [vmem:[#allocation3 + $0xf10] sm:$0xff]
    %v1368 = vld [vmem:[#allocation3 + $0xf18] sm:$0xff]
    %v1369 = vld [vmem:[#allocation3 + $0xf20] sm:$0xff]
    %v1370 = vld [vmem:[#allocation3 + $0xf28] sm:$0xff]
    %v1371 = vld [vmem:[#allocation3 + $0xf30] sm:$0xff]
    %v1372 = vld [vmem:[#allocation3 + $0xf38] sm:$0xff]
    %v1373 = vld [vmem:[#allocation3 + $0xf40] sm:$0xff]
    %v1374 = vld [vmem:[#allocation3 + $0xf48] sm:$0xff]
    %v1375 = vld [vmem:[#allocation3 + $0xf50] sm:$0xff]
    %v1376 = vld [vmem:[#allocation3 + $0xf58] sm:$0xff]
    %v1377 = vld [vmem:[#allocation3 + $0xf60] sm:$0xff]
    %v1378 = vld [vmem:[#allocation3 + $0xf68] sm:$0xff]
    %v1379 = vld [vmem:[#allocation3 + $0xf70] sm:$0xff]
    %v1380 = vld [vmem:[#allocation3 + $0xf78] sm:$0xff]
    %v1381 = vld [vmem:[#allocation3 + $0xf80] sm:$0xff]
    %v1382 = vld [vmem:[#allocation3 + $0xf88] sm:$0xff]
    %v1383 = vld [vmem:[#allocation3 + $0xf90] sm:$0xff]
    %v1384 = vld [vmem:[#allocation3 + $0xf98] sm:$0xff]
    %v1385 = vld [vmem:[#allocation3 + $0xfa0] sm:$0xff]
    %v1386 = vld [vmem:[#allocation3 + $0xfa8] sm:$0xff]
    %v1387 = vld [vmem:[#allocation3 + $0xfb0] sm:$0xff]
    %v1388 = vld [vmem:[#allocation3 + $0xfb8] sm:$0xff]
    %v1389 = vld [vmem:[#allocation3 + $0xfc0] sm:$0xff]
    %v1390 = vld [vmem:[#allocation3 + $0xfc8] sm:$0xff]
    %v1391 = vld [vmem:[#allocation3 + $0xfd0] sm:$0xff]
    %v1392 = vld [vmem:[#allocation3 + $0xfd8] sm:$0xff]
    %v1393 = vld [vmem:[#allocation3 + $0xfe0] sm:$0xff]
    %v1394 = vld [vmem:[#allocation3 + $0xfe8] sm:$0xff]
    %v1395 = vld [vmem:[#allocation3 + $0xff0] sm:$0xff]
    %v1396 = vld [vmem:[#allocation3 + $0xff8] sm:$0xff]
    %s1397 = scalar_lea.vmem [#allocation9], 1
    %v1398 = vld [vmem:[%s1397] ss:$8 sm:$0xf]
    %v1399 = vld [vmem:[%s1397] ss:$8 sm:$0xf0]
    %v1400 = vor.u32 %v1398, %v1399
    %v1402 = vlaneseq
    %v1403 = vshrl.u32 %v1402, 7
    %v1404 = vsub.s32 0, %v1403
    %v1405 = vrot.slane %v1400, %v1404
    %v1406 = vlaneseq
    %v1407 = vshrl.u32 %v1406, 7
    %v1408 = vsub.s32 1, %v1407
    %v1409 = vrot.slane %v1400, %v1408
    %v1410 = vlaneseq
    %v1411 = vshrl.u32 %v1410, 7
    %v1412 = vsub.s32 2, %v1411
    %v1413 = vrot.slane %v1400, %v1412
    %v1414 = vlaneseq
    %v1415 = vshrl.u32 %v1414, 7
    %v1416 = vsub.s32 3, %v1415
    %v1417 = vrot.slane %v1400, %v1416
    %v1418 = vlaneseq
    %v1419 = vshrl.u32 %v1418, 7
    %v1420 = vsub.s32 4, %v1419
    %v1421 = vrot.slane %v1400, %v1420
    %v1422 = vlaneseq
    %v1423 = vshrl.u32 %v1422, 7
    %v1424 = vsub.s32 5, %v1423
    %v1425 = vrot.slane %v1400, %v1424
    %v1426 = vlaneseq
    %v1427 = vshrl.u32 %v1426, 7
    %v1428 = vsub.s32 6, %v1427
    %v1429 = vrot.slane %v1400, %v1428
    %v1430 = vlaneseq
    %v1431 = vshrl.u32 %v1430, 7
    %v1432 = vsub.s32 7, %v1431
    %v1433 = vrot.slane %v1400, %v1432
    %1442 = vmatprep.subr.bf16.mxu0 %v886
    %1443 = vmatpush1.bf16.msra.mxu0 %v885
    %1444 = vmatprep.subr.bf16.mxu0 %v894
    %1445 = vmatpush1.bf16.msra.mxu0 %v893
    %1446 = vmatprep.subr.bf16.mxu0 %v902
    %1447 = vmatpush1.bf16.msra.mxu0 %v901
    %1448 = vmatprep.subr.bf16.mxu0 %v910
    %1449 = vmatpush1.bf16.msra.mxu0 %v909
    %1450 = vmatprep.subr.bf16.mxu0 %v918
    %1451 = vmatpush1.bf16.msra.mxu0 %v917
    %1452 = vmatprep.subr.bf16.mxu0 %v926
    %1453 = vmatpush1.bf16.msra.mxu0 %v925
    %1454 = vmatprep.subr.bf16.mxu0 %v934
    %1455 = vmatpush1.bf16.msra.mxu0 %v933
    %1456 = vmatprep.subr.bf16.mxu0 %v942
    %1457 = vmatpush1.bf16.msra.mxu0 %v941
    %1458 = vmatprep.subr.bf16.mxu0 %v950
    %1459 = vmatpush1.bf16.msra.mxu0 %v949
    %1460 = vmatprep.subr.bf16.mxu0 %v958
    %1461 = vmatpush1.bf16.msra.mxu0 %v957
    %1462 = vmatprep.subr.bf16.mxu0 %v966
    %1463 = vmatpush1.bf16.msra.mxu0 %v965
    %1464 = vmatprep.subr.bf16.mxu0 %v974
    %1465 = vmatpush1.bf16.msra.mxu0 %v973
    %1466 = vmatprep.subr.bf16.mxu0 %v982
    %1467 = vmatpush1.bf16.msra.mxu0 %v981
    %1468 = vmatprep.subr.bf16.mxu0 %v990
    %1469 = vmatpush1.bf16.msra.mxu0 %v989
    %1470 = vmatprep.subr.bf16.mxu0 %v998
    %1471 = vmatpush1.bf16.msra.mxu0 %v997
    %1472 = vmatprep.subr.bf16.mxu0 %v1006
    %1473 = vmatpush1.bf16.msra.mxu0 %v1005
    %1474 = vmatprep.mubr.bf16.mxu0 %v878
    %1475 = vmatmul.mubr.bf16.gmra.mrb[0].mxu0 %v877
    %v1476 = vpop.f32.mrb[0].mxu0
    %v1477 = vadd.f32 %v1405, %v1476
    %v1478 = vpop.f32.mrb[0].mxu0
    %v1479 = vadd.f32 %v1409, %v1478
    %v1480 = vpop.f32.mrb[0].mxu0
    %v1481 = vpop.f32.mrb[0].mxu0
    %1482 = vdwg.mxu0
    %1483 = vmatprep.subr.bf16.mxu0 %v1014
    %1484 = vmatpush1.bf16.msra.mxu0 %v1013
    %1485 = vmatprep.subr.bf16.mxu0 %v1022
    %1486 = vmatpush1.bf16.msra.mxu0 %v1021
    %1487 = vmatprep.subr.bf16.mxu0 %v1030
    %1488 = vmatpush1.bf16.msra.mxu0 %v1029
    %1489 = vmatprep.subr.bf16.mxu0 %v1038
    %1490 = vmatpush1.bf16.msra.mxu0 %v1037
    %1491 = vmatprep.subr.bf16.mxu0 %v1046
    %1492 = vmatpush1.bf16.msra.mxu0 %v1045
    %1493 = vmatprep.subr.bf16.mxu0 %v1054
    %1494 = vmatpush1.bf16.msra.mxu0 %v1053
    %1495 = vmatprep.subr.bf16.mxu0 %v1062
    %1496 = vmatpush1.bf16.msra.mxu0 %v1061
    %1497 = vmatprep.subr.bf16.mxu0 %v1070
    %1498 = vmatpush1.bf16.msra.mxu0 %v1069
    %1499 = vmatprep.subr.bf16.mxu0 %v1078
    %1500 = vmatpush1.bf16.msra.mxu0 %v1077
    %1501 = vmatprep.subr.bf16.mxu0 %v1086
    %1502 = vmatpush1.bf16.msra.mxu0 %v1085
    %1503 = vmatprep.subr.bf16.mxu0 %v1094
    %1504 = vmatpush1.bf16.msra.mxu0 %v1093
    %1505 = vmatprep.subr.bf16.mxu0 %v1102
    %1506 = vmatpush1.bf16.msra.mxu0 %v1101
    %1507 = vmatprep.subr.bf16.mxu0 %v1110
    %1508 = vmatpush1.bf16.msra.mxu0 %v1109
    %1509 = vmatprep.subr.bf16.mxu0 %v1118
    %1510 = vmatpush1.bf16.msra.mxu0 %v1117
    %1511 = vmatprep.subr.bf16.mxu0 %v1126
    %1512 = vmatpush1.bf16.msra.mxu0 %v1125
    %1513 = vmatprep.subr.bf16.mxu0 %v1134
    %1514 = vmatpush1.bf16.msra.mxu0 %v1133
    %1515 = vmatprep.mubr.bf16.mxu0 %v880
    %1516 = vmatmul.mubr.bf16.gmra.mrb[0].mxu0 %v879
    %v1517 = vpop.f32.mrb[0].mxu0
    %v1518 = vadd.f32 %v1477, %v1517
    %v1519 = vpop.f32.mrb[0].mxu0
    %v1520 = vadd.f32 %v1479, %v1519
    %v1521 = vpop.f32.mrb[0].mxu0
    %v1522 = vpop.f32.mrb[0].mxu0
    %1523 = vdwg.mxu0
    %1524 = vmatprep.subr.bf16.mxu0 %v1142
    %1525 = vmatpush1.bf16.msra.mxu0 %v1141
    %1526 = vmatprep.subr.bf16.mxu0 %v1150
    %1527 = vmatpush1.bf16.msra.mxu0 %v1149
    %1528 = vmatprep.subr.bf16.mxu0 %v1158
    %1529 = vmatpush1.bf16.msra.mxu0 %v1157
    %1530 = vmatprep.subr.bf16.mxu0 %v1166
    %1531 = vmatpush1.bf16.msra.mxu0 %v1165
    %1532 = vmatprep.subr.bf16.mxu0 %v1174
    %1533 = vmatpush1.bf16.msra.mxu0 %v1173
    %1534 = vmatprep.subr.bf16.mxu0 %v1182
    %1535 = vmatpush1.bf16.msra.mxu0 %v1181
    %1536 = vmatprep.subr.bf16.mxu0 %v1190
    %1537 = vmatpush1.bf16.msra.mxu0 %v1189
    %1538 = vmatprep.subr.bf16.mxu0 %v1198
    %1539 = vmatpush1.bf16.msra.mxu0 %v1197
    %1540 = vmatprep.subr.bf16.mxu0 %v1206
    %1541 = vmatpush1.bf16.msra.mxu0 %v1205
    %1542 = vmatprep.subr.bf16.mxu0 %v1214
    %1543 = vmatpush1.bf16.msra.mxu0 %v1213
    %1544 = vmatprep.subr.bf16.mxu0 %v1222
    %1545 = vmatpush1.bf16.msra.mxu0 %v1221
    %1546 = vmatprep.subr.bf16.mxu0 %v1230
    %1547 = vmatpush1.bf16.msra.mxu0 %v1229
    %1548 = vmatprep.subr.bf16.mxu0 %v1238
    %1549 = vmatpush1.bf16.msra.mxu0 %v1237
    %1550 = vmatprep.subr.bf16.mxu0 %v1246
    %1551 = vmatpush1.bf16.msra.mxu0 %v1245
    %1552 = vmatprep.subr.bf16.mxu0 %v1254
    %1553 = vmatpush1.bf16.msra.mxu0 %v1253
    %1554 = vmatprep.subr.bf16.mxu0 %v1262
    %1555 = vmatpush1.bf16.msra.mxu0 %v1261
    %1556 = vmatprep.mubr.bf16.mxu0 %v882
    %1557 = vmatmul.mubr.bf16.gmra.mrb[0].mxu0 %v881
    %v1558 = vpop.f32.mrb[0].mxu0
    %v1559 = vadd.f32 %v1518, %v1558
    %v1560 = vpop.f32.mrb[0].mxu0
    %v1561 = vadd.f32 %v1520, %v1560
    %v1562 = vpop.f32.mrb[0].mxu0
    %v1563 = vpop.f32.mrb[0].mxu0
    %1564 = vdwg.mxu0
    %1565 = vmatprep.subr.bf16.mxu0 %v1270
    %1566 = vmatpush1.bf16.msra.mxu0 %v1269
    %1567 = vmatprep.subr.bf16.mxu0 %v1278
    %1568 = vmatpush1.bf16.msra.mxu0 %v1277
    %1569 = vmatprep.subr.bf16.mxu0 %v1286
    %1570 = vmatpush1.bf16.msra.mxu0 %v1285
    %1571 = vmatprep.subr.bf16.mxu0 %v1294
    %1572 = vmatpush1.bf16.msra.mxu0 %v1293
    %1573 = vmatprep.subr.bf16.mxu0 %v1302
    %1574 = vmatpush1.bf16.msra.mxu0 %v1301
    %1575 = vmatprep.subr.bf16.mxu0 %v1310
    %1576 = vmatpush1.bf16.msra.mxu0 %v1309
    %1577 = vmatprep.subr.bf16.mxu0 %v1318
    %1578 = vmatpush1.bf16.msra.mxu0 %v1317
    %1579 = vmatprep.subr.bf16.mxu0 %v1326
    %1580 = vmatpush1.bf16.msra.mxu0 %v1325
    %1581 = vmatprep.subr.bf16.mxu0 %v1334
    %1582 = vmatpush1.bf16.msra.mxu0 %v1333
    %1583 = vmatprep.subr.bf16.mxu0 %v1342
    %1584 = vmatpush1.bf16.msra.mxu0 %v1341
    %1585 = vmatprep.subr.bf16.mxu0 %v1350
    %1586 = vmatpush1.bf16.msra.mxu0 %v1349
    %1587 = vmatprep.subr.bf16.mxu0 %v1358
    %1588 = vmatpush1.bf16.msra.mxu0 %v1357
    %1589 = vmatprep.subr.bf16.mxu0 %v1366
    %1590 = vmatpush1.bf16.msra.mxu0 %v1365
    %1591 = vmatprep.subr.bf16.mxu0 %v1374
    %1592 = vmatpush1.bf16.msra.mxu0 %v1373
    %1593 = vmatprep.subr.bf16.mxu0 %v1382
    %1594 = vmatpush1.bf16.msra.mxu0 %v1381
    %1595 = vmatprep.subr.bf16.mxu0 %v1390
    %1596 = vmatpush1.bf16.msra.mxu0 %v1389
    %1597 = vmatprep.mubr.bf16.mxu0 %v884
    %1598 = vmatmul.mubr.bf16.gmra.mrb[0].mxu0 %v883
    %v1599 = vpop.f32.mrb[0].mxu0
    %v1600 = vadd.f32 %v1559, %v1599
    %v1601 = vpop.f32.mrb[0].mxu0
    %v1602 = vadd.f32 %v1561, %v1601
    %v1603 = vpop.f32.mrb[0].mxu0
    %v1604 = vpop.f32.mrb[0].mxu0
    %1605 = vdwg.mxu0
    %1606 = vmatprep.subr.bf16.mxu0 %v888
    %1607 = vmatpush1.bf16.msra.mxu0 %v887
    %1608 = vmatprep.subr.bf16.mxu0 %v896
    %1609 = vmatpush1.bf16.msra.mxu0 %v895
    %1610 = vmatprep.subr.bf16.mxu0 %v904
    %1611 = vmatpush1.bf16.msra.mxu0 %v903
    %1612 = vmatprep.subr.bf16.mxu0 %v912
    %1613 = vmatpush1.bf16.msra.mxu0 %v911
    %1614 = vmatprep.subr.bf16.mxu0 %v920
    %1615 = vmatpush1.bf16.msra.mxu0 %v919
    %1616 = vmatprep.subr.bf16.mxu0 %v928
    %1617 = vmatpush1.bf16.msra.mxu0 %v927
    %1618 = vmatprep.subr.bf16.mxu0 %v936
    %1619 = vmatpush1.bf16.msra.mxu0 %v935
    %1620 = vmatprep.subr.bf16.mxu0 %v944
    %1621 = vmatpush1.bf16.msra.mxu0 %v943
    %1622 = vmatprep.subr.bf16.mxu0 %v952
    %1623 = vmatpush1.bf16.msra.mxu0 %v951
    %1624 = vmatprep.subr.bf16.mxu0 %v960
    %1625 = vmatpush1.bf16.msra.mxu0 %v959
    %1626 = vmatprep.subr.bf16.mxu0 %v968
    %1627 = vmatpush1.bf16.msra.mxu0 %v967
    %1628 = vmatprep.subr.bf16.mxu0 %v976
    %1629 = vmatpush1.bf16.msra.mxu0 %v975
    %1630 = vmatprep.subr.bf16.mxu0 %v984
    %1631 = vmatpush1.bf16.msra.mxu0 %v983
    %1632 = vmatprep.subr.bf16.mxu0 %v992
    %1633 = vmatpush1.bf16.msra.mxu0 %v991
    %1634 = vmatprep.subr.bf16.mxu0 %v1000
    %1635 = vmatpush1.bf16.msra.mxu0 %v999
    %1636 = vmatprep.subr.bf16.mxu0 %v1008
    %1637 = vmatpush1.bf16.msra.mxu0 %v1007
    %1638 = vmatprep.mubr.bf16.mxu0 %v878
    %1639 = vmatmul.mubr.bf16.gmra.mrb[0].mxu0 %v877
    %v1640 = vpop.f32.mrb[0].mxu0
    %v1641 = vadd.f32 %v1413, %v1640
    %v1642 = vpop.f32.mrb[0].mxu0
    %v1643 = vadd.f32 %v1417, %v1642
    %v1644 = vpop.f32.mrb[0].mxu0
    %v1645 = vpop.f32.mrb[0].mxu0
    %1646 = vdwg.mxu0
    %1647 = vmatprep.subr.bf16.mxu0 %v1016
    %1648 = vmatpush1.bf16.msra.mxu0 %v1015
    %1649 = vmatprep.subr.bf16.mxu0 %v1024
    %1650 = vmatpush1.bf16.msra.mxu0 %v1023
    %1651 = vmatprep.subr.bf16.mxu0 %v1032
    %1652 = vmatpush1.bf16.msra.mxu0 %v1031
    %1653 = vmatprep.subr.bf16.mxu0 %v1040
    %1654 = vmatpush1.bf16.msra.mxu0 %v1039
    %1655 = vmatprep.subr.bf16.mxu0 %v1048
    %1656 = vmatpush1.bf16.msra.mxu0 %v1047
    %1657 = vmatprep.subr.bf16.mxu0 %v1056
    %1658 = vmatpush1.bf16.msra.mxu0 %v1055
    %1659 = vmatprep.subr.bf16.mxu0 %v1064
    %1660 = vmatpush1.bf16.msra.mxu0 %v1063
    %1661 = vmatprep.subr.bf16.mxu0 %v1072
    %1662 = vmatpush1.bf16.msra.mxu0 %v1071
    %1663 = vmatprep.subr.bf16.mxu0 %v1080
    %1664 = vmatpush1.bf16.msra.mxu0 %v1079
    %1665 = vmatprep.subr.bf16.mxu0 %v1088
    %1666 = vmatpush1.bf16.msra.mxu0 %v1087
    %1667 = vmatprep.subr.bf16.mxu0 %v1096
    %1668 = vmatpush1.bf16.msra.mxu0 %v1095
    %1669 = vmatprep.subr.bf16.mxu0 %v1104
    %1670 = vmatpush1.bf16.msra.mxu0 %v1103
    %1671 = vmatprep.subr.bf16.mxu0 %v1112
    %1672 = vmatpush1.bf16.msra.mxu0 %v1111
    %1673 = vmatprep.subr.bf16.mxu0 %v1120
    %1674 = vmatpush1.bf16.msra.mxu0 %v1119
    %1675 = vmatprep.subr.bf16.mxu0 %v1128
    %1676 = vmatpush1.bf16.msra.mxu0 %v1127
    %1677 = vmatprep.subr.bf16.mxu0 %v1136
    %1678 = vmatpush1.bf16.msra.mxu0 %v1135
    %1679 = vmatprep.mubr.bf16.mxu0 %v880
    %1680 = vmatmul.mubr.bf16.gmra.mrb[0].mxu0 %v879
    %v1681 = vpop.f32.mrb[0].mxu0
    %v1682 = vadd.f32 %v1641, %v1681
    %v1683 = vpop.f32.mrb[0].mxu0
    %v1684 = vadd.f32 %v1643, %v1683
    %v1685 = vpop.f32.mrb[0].mxu0
    %v1686 = vpop.f32.mrb[0].mxu0
    %1687 = vdwg.mxu0
    %1688 = vmatprep.subr.bf16.mxu0 %v1144
    %1689 = vmatpush1.bf16.msra.mxu0 %v1143
    %1690 = vmatprep.subr.bf16.mxu0 %v1152
    %1691 = vmatpush1.bf16.msra.mxu0 %v1151
    %1692 = vmatprep.subr.bf16.mxu0 %v1160
    %1693 = vmatpush1.bf16.msra.mxu0 %v1159
    %1694 = vmatprep.subr.bf16.mxu0 %v1168
    %1695 = vmatpush1.bf16.msra.mxu0 %v1167
    %1696 = vmatprep.subr.bf16.mxu0 %v1176
    %1697 = vmatpush1.bf16.msra.mxu0 %v1175
    %1698 = vmatprep.subr.bf16.mxu0 %v1184
    %1699 = vmatpush1.bf16.msra.mxu0 %v1183
    %1700 = vmatprep.subr.bf16.mxu0 %v1192
    %1701 = vmatpush1.bf16.msra.mxu0 %v1191
    %1702 = vmatprep.subr.bf16.mxu0 %v1200
    %1703 = vmatpush1.bf16.msra.mxu0 %v1199
    %1704 = vmatprep.subr.bf16.mxu0 %v1208
    %1705 = vmatpush1.bf16.msra.mxu0 %v1207
    %1706 = vmatprep.subr.bf16.mxu0 %v1216
    %1707 = vmatpush1.bf16.msra.mxu0 %v1215
    %1708 = vmatprep.subr.bf16.mxu0 %v1224
    %1709 = vmatpush1.bf16.msra.mxu0 %v1223
    %1710 = vmatprep.subr.bf16.mxu0 %v1232
    %1711 = vmatpush1.bf16.msra.mxu0 %v1231
    %1712 = vmatprep.subr.bf16.mxu0 %v1240
    %1713 = vmatpush1.bf16.msra.mxu0 %v1239
    %1714 = vmatprep.subr.bf16.mxu0 %v1248
    %1715 = vmatpush1.bf16.msra.mxu0 %v1247
    %1716 = vmatprep.subr.bf16.mxu0 %v1256
    %1717 = vmatpush1.bf16.msra.mxu0 %v1255
    %1718 = vmatprep.subr.bf16.mxu0 %v1264
    %1719 = vmatpush1.bf16.msra.mxu0 %v1263
    %1720 = vmatprep.mubr.bf16.mxu0 %v882
    %1721 = vmatmul.mubr.bf16.gmra.mrb[0].mxu0 %v881
    %v1722 = vpop.f32.mrb[0].mxu0
    %v1723 = vadd.f32 %v1682, %v1722
    %v1724 = vpop.f32.mrb[0].mxu0
    %v1725 = vadd.f32 %v1684, %v1724
    %v1726 = vpop.f32.mrb[0].mxu0
    %v1727 = vpop.f32.mrb[0].mxu0
    %1728 = vdwg.mxu0
    %1729 = vmatprep.subr.bf16.mxu0 %v1272
    %1730 = vmatpush1.bf16.msra.mxu0 %v1271
    %1731 = vmatprep.subr.bf16.mxu0 %v1280
    %1732 = vmatpush1.bf16.msra.mxu0 %v1279
    %1733 = vmatprep.subr.bf16.mxu0 %v1288
    %1734 = vmatpush1.bf16.msra.mxu0 %v1287
    %1735 = vmatprep.subr.bf16.mxu0 %v1296
    %1736 = vmatpush1.bf16.msra.mxu0 %v1295
    %1737 = vmatprep.subr.bf16.mxu0 %v1304
    %1738 = vmatpush1.bf16.msra.mxu0 %v1303
    %1739 = vmatprep.subr.bf16.mxu0 %v1312
    %1740 = vmatpush1.bf16.msra.mxu0 %v1311
    %1741 = vmatprep.subr.bf16.mxu0 %v1320
    %1742 = vmatpush1.bf16.msra.mxu0 %v1319
    %1743 = vmatprep.subr.bf16.mxu0 %v1328
    %1744 = vmatpush1.bf16.msra.mxu0 %v1327
    %1745 = vmatprep.subr.bf16.mxu0 %v1336
    %1746 = vmatpush1.bf16.msra.mxu0 %v1335
    %1747 = vmatprep.subr.bf16.mxu0 %v1344
    %1748 = vmatpush1.bf16.msra.mxu0 %v1343
    %1749 = vmatprep.subr.bf16.mxu0 %v1352
    %1750 = vmatpush1.bf16.msra.mxu0 %v1351
    %1751 = vmatprep.subr.bf16.mxu0 %v1360
    %1752 = vmatpush1.bf16.msra.mxu0 %v1359
    %1753 = vmatprep.subr.bf16.mxu0 %v1368
    %1754 = vmatpush1.bf16.msra.mxu0 %v1367
    %1755 = vmatprep.subr.bf16.mxu0 %v1376
    %1756 = vmatpush1.bf16.msra.mxu0 %v1375
    %1757 = vmatprep.subr.bf16.mxu0 %v1384
    %1758 = vmatpush1.bf16.msra.mxu0 %v1383
    %1759 = vmatprep.subr.bf16.mxu0 %v1392
    %1760 = vmatpush1.bf16.msra.mxu0 %v1391
    %1761 = vmatprep.mubr.bf16.mxu0 %v884
    %1762 = vmatmul.mubr.bf16.gmra.mrb[0].mxu0 %v883
    %v1763 = vpop.f32.mrb[0].mxu0
    %v1764 = vadd.f32 %v1723, %v1763
    %v1765 = vpop.f32.mrb[0].mxu0
    %v1766 = vadd.f32 %v1725, %v1765
    %v1767 = vpop.f32.mrb[0].mxu0
    %v1768 = vpop.f32.mrb[0].mxu0
    %1769 = vdwg.mxu0
    %1770 = vmatprep.subr.bf16.mxu0 %v890
    %1771 = vmatpush1.bf16.msra.mxu0 %v889
    %1772 = vmatprep.subr.bf16.mxu0 %v898
    %1773 = vmatpush1.bf16.msra.mxu0 %v897
    %1774 = vmatprep.subr.bf16.mxu0 %v906
    %1775 = vmatpush1.bf16.msra.mxu0 %v905
    %1776 = vmatprep.subr.bf16.mxu0 %v914
    %1777 = vmatpush1.bf16.msra.mxu0 %v913
    %1778 = vmatprep.subr.bf16.mxu0 %v922
    %1779 = vmatpush1.bf16.msra.mxu0 %v921
    %1780 = vmatprep.subr.bf16.mxu0 %v930
    %1781 = vmatpush1.bf16.msra.mxu0 %v929
    %1782 = vmatprep.subr.bf16.mxu0 %v938
    %1783 = vmatpush1.bf16.msra.mxu0 %v937
    %1784 = vmatprep.subr.bf16.mxu0 %v946
    %1785 = vmatpush1.bf16.msra.mxu0 %v945
    %1786 = vmatprep.subr.bf16.mxu0 %v954
    %1787 = vmatpush1.bf16.msra.mxu0 %v953
    %1788 = vmatprep.subr.bf16.mxu0 %v962
    %1789 = vmatpush1.bf16.msra.mxu0 %v961
    %1790 = vmatprep.subr.bf16.mxu0 %v970
    %1791 = vmatpush1.bf16.msra.mxu0 %v969
    %1792 = vmatprep.subr.bf16.mxu0 %v978
    %1793 = vmatpush1.bf16.msra.mxu0 %v977
    %1794 = vmatprep.subr.bf16.mxu0 %v986
    %1795 = vmatpush1.bf16.msra.mxu0 %v985
    %1796 = vmatprep.subr.bf16.mxu0 %v994
    %1797 = vmatpush1.bf16.msra.mxu0 %v993
    %1798 = vmatprep.subr.bf16.mxu0 %v1002
    %1799 = vmatpush1.bf16.msra.mxu0 %v1001
    %1800 = vmatprep.subr.bf16.mxu0 %v1010
    %1801 = vmatpush1.bf16.msra.mxu0 %v1009
    %1802 = vmatprep.mubr.bf16.mxu0 %v878
    %1803 = vmatmul.mubr.bf16.gmra.mrb[0].mxu0 %v877
    %v1804 = vpop.f32.mrb[0].mxu0
    %v1805 = vadd.f32 %v1421, %v1804
    %v1806 = vpop.f32.mrb[0].mxu0
    %v1807 = vadd.f32 %v1425, %v1806
    %v1808 = vpop.f32.mrb[0].mxu0
    %v1809 = vpop.f32.mrb[0].mxu0
    %1810 = vdwg.mxu0
    %1811 = vmatprep.subr.bf16.mxu0 %v1018
    %1812 = vmatpush1.bf16.msra.mxu0 %v1017
    %1813 = vmatprep.subr.bf16.mxu0 %v1026
    %1814 = vmatpush1.bf16.msra.mxu0 %v1025
    %1815 = vmatprep.subr.bf16.mxu0 %v1034
    %1816 = vmatpush1.bf16.msra.mxu0 %v1033
    %1817 = vmatprep.subr.bf16.mxu0 %v1042
    %1818 = vmatpush1.bf16.msra.mxu0 %v1041
    %1819 = vmatprep.subr.bf16.mxu0 %v1050
    %1820 = vmatpush1.bf16.msra.mxu0 %v1049
    %1821 = vmatprep.subr.bf16.mxu0 %v1058
    %1822 = vmatpush1.bf16.msra.mxu0 %v1057
    %1823 = vmatprep.subr.bf16.mxu0 %v1066
    %1824 = vmatpush1.bf16.msra.mxu0 %v1065
    %1825 = vmatprep.subr.bf16.mxu0 %v1074
    %1826 = vmatpush1.bf16.msra.mxu0 %v1073
    %1827 = vmatprep.subr.bf16.mxu0 %v1082
    %1828 = vmatpush1.bf16.msra.mxu0 %v1081
    %1829 = vmatprep.subr.bf16.mxu0 %v1090
    %1830 = vmatpush1.bf16.msra.mxu0 %v1089
    %1831 = vmatprep.subr.bf16.mxu0 %v1098
    %1832 = vmatpush1.bf16.msra.mxu0 %v1097
    %1833 = vmatprep.subr.bf16.mxu0 %v1106
    %1834 = vmatpush1.bf16.msra.mxu0 %v1105
    %1835 = vmatprep.subr.bf16.mxu0 %v1114
    %1836 = vmatpush1.bf16.msra.mxu0 %v1113
    %1837 = vmatprep.subr.bf16.mxu0 %v1122
    %1838 = vmatpush1.bf16.msra.mxu0 %v1121
    %1839 = vmatprep.subr.bf16.mxu0 %v1130
    %1840 = vmatpush1.bf16.msra.mxu0 %v1129
    %1841 = vmatprep.subr.bf16.mxu0 %v1138
    %1842 = vmatpush1.bf16.msra.mxu0 %v1137
    %1843 = vmatprep.mubr.bf16.mxu0 %v880
    %1844 = vmatmul.mubr.bf16.gmra.mrb[0].mxu0 %v879
    %v1845 = vpop.f32.mrb[0].mxu0
    %v1846 = vadd.f32 %v1805, %v1845
    %v1847 = vpop.f32.mrb[0].mxu0
    %v1848 = vadd.f32 %v1807, %v1847
    %v1849 = vpop.f32.mrb[0].mxu0
    %v1850 = vpop.f32.mrb[0].mxu0
    %1851 = vdwg.mxu0
    %1852 = vmatprep.subr.bf16.mxu0 %v1146
    %1853 = vmatpush1.bf16.msra.mxu0 %v1145
    %1854 = vmatprep.subr.bf16.mxu0 %v1154
    %1855 = vmatpush1.bf16.msra.mxu0 %v1153
    %1856 = vmatprep.subr.bf16.mxu0 %v1162
    %1857 = vmatpush1.bf16.msra.mxu0 %v1161
    %1858 = vmatprep.subr.bf16.mxu0 %v1170
    %1859 = vmatpush1.bf16.msra.mxu0 %v1169
    %1860 = vmatprep.subr.bf16.mxu0 %v1178
    %1861 = vmatpush1.bf16.msra.mxu0 %v1177
    %1862 = vmatprep.subr.bf16.mxu0 %v1186
    %1863 = vmatpush1.bf16.msra.mxu0 %v1185
    %1864 = vmatprep.subr.bf16.mxu0 %v1194
    %1865 = vmatpush1.bf16.msra.mxu0 %v1193
    %1866 = vmatprep.subr.bf16.mxu0 %v1202
    %1867 = vmatpush1.bf16.msra.mxu0 %v1201
    %1868 = vmatprep.subr.bf16.mxu0 %v1210
    %1869 = vmatpush1.bf16.msra.mxu0 %v1209
    %1870 = vmatprep.subr.bf16.mxu0 %v1218
    %1871 = vmatpush1.bf16.msra.mxu0 %v1217
    %1872 = vmatprep.subr.bf16.mxu0 %v1226
    %1873 = vmatpush1.bf16.msra.mxu0 %v1225
    %1874 = vmatprep.subr.bf16.mxu0 %v1234
    %1875 = vmatpush1.bf16.msra.mxu0 %v1233
    %1876 = vmatprep.subr.bf16.mxu0 %v1242
    %1877 = vmatpush1.bf16.msra.mxu0 %v1241
    %1878 = vmatprep.subr.bf16.mxu0 %v1250
    %1879 = vmatpush1.bf16.msra.mxu0 %v1249
    %1880 = vmatprep.subr.bf16.mxu0 %v1258
    %1881 = vmatpush1.bf16.msra.mxu0 %v1257
    %1882 = vmatprep.subr.bf16.mxu0 %v1266
    %1883 = vmatpush1.bf16.msra.mxu0 %v1265
    %1884 = vmatprep.mubr.bf16.mxu0 %v882
    %1885 = vmatmul.mubr.bf16.gmra.mrb[0].mxu0 %v881
    %v1886 = vpop.f32.mrb[0].mxu0
    %v1887 = vadd.f32 %v1846, %v1886
    %v1888 = vpop.f32.mrb[0].mxu0
    %v1889 = vadd.f32 %v1848, %v1888
    %v1890 = vpop.f32.mrb[0].mxu0
    %v1891 = vpop.f32.mrb[0].mxu0
    %1892 = vdwg.mxu0
    %1893 = vmatprep.subr.bf16.mxu0 %v1274
    %1894 = vmatpush1.bf16.msra.mxu0 %v1273
    %1895 = vmatprep.subr.bf16.mxu0 %v1282
    %1896 = vmatpush1.bf16.msra.mxu0 %v1281
    %1897 = vmatprep.subr.bf16.mxu0 %v1290
    %1898 = vmatpush1.bf16.msra.mxu0 %v1289
    %1899 = vmatprep.subr.bf16.mxu0 %v1298
    %1900 = vmatpush1.bf16.msra.mxu0 %v1297
    %1901 = vmatprep.subr.bf16.mxu0 %v1306
    %1902 = vmatpush1.bf16.msra.mxu0 %v1305
    %1903 = vmatprep.subr.bf16.mxu0 %v1314
    %1904 = vmatpush1.bf16.msra.mxu0 %v1313
    %1905 = vmatprep.subr.bf16.mxu0 %v1322
    %1906 = vmatpush1.bf16.msra.mxu0 %v1321
    %1907 = vmatprep.subr.bf16.mxu0 %v1330
    %1908 = vmatpush1.bf16.msra.mxu0 %v1329
    %1909 = vmatprep.subr.bf16.mxu0 %v1338
    %1910 = vmatpush1.bf16.msra.mxu0 %v1337
    %1911 = vmatprep.subr.bf16.mxu0 %v1346
    %1912 = vmatpush1.bf16.msra.mxu0 %v1345
    %1913 = vmatprep.subr.bf16.mxu0 %v1354
    %1914 = vmatpush1.bf16.msra.mxu0 %v1353
    %1915 = vmatprep.subr.bf16.mxu0 %v1362
    %1916 = vmatpush1.bf16.msra.mxu0 %v1361
    %1917 = vmatprep.subr.bf16.mxu0 %v1370
    %1918 = vmatpush1.bf16.msra.mxu0 %v1369
    %1919 = vmatprep.subr.bf16.mxu0 %v1378
    %1920 = vmatpush1.bf16.msra.mxu0 %v1377
    %1921 = vmatprep.subr.bf16.mxu0 %v1386
    %1922 = vmatpush1.bf16.msra.mxu0 %v1385
    %1923 = vmatprep.subr.bf16.mxu0 %v1394
    %1924 = vmatpush1.bf16.msra.mxu0 %v1393
    %1925 = vmatprep.mubr.bf16.mxu0 %v884
    %1926 = vmatmul.mubr.bf16.gmra.mrb[0].mxu0 %v883
    %v1927 = vpop.f32.mrb[0].mxu0
    %v1928 = vadd.f32 %v1887, %v1927
    %v1929 = vpop.f32.mrb[0].mxu0
    %v1930 = vadd.f32 %v1889, %v1929
    %v1931 = vpop.f32.mrb[0].mxu0
    %v1932 = vpop.f32.mrb[0].mxu0
    %1933 = vdwg.mxu0
    %1934 = vmatprep.subr.bf16.mxu0 %v892
    %1935 = vmatpush1.bf16.msra.mxu0 %v891
    %1936 = vmatprep.subr.bf16.mxu0 %v900
    %1937 = vmatpush1.bf16.msra.mxu0 %v899
    %1938 = vmatprep.subr.bf16.mxu0 %v908
    %1939 = vmatpush1.bf16.msra.mxu0 %v907
    %1940 = vmatprep.subr.bf16.mxu0 %v916
    %1941 = vmatpush1.bf16.msra.mxu0 %v915
    %1942 = vmatprep.subr.bf16.mxu0 %v924
    %1943 = vmatpush1.bf16.msra.mxu0 %v923
    %1944 = vmatprep.subr.bf16.mxu0 %v932
    %1945 = vmatpush1.bf16.msra.mxu0 %v931
    %1946 = vmatprep.subr.bf16.mxu0 %v940
    %1947 = vmatpush1.bf16.msra.mxu0 %v939
    %1948 = vmatprep.subr.bf16.mxu0 %v948
    %1949 = vmatpush1.bf16.msra.mxu0 %v947
    %1950 = vmatprep.subr.bf16.mxu0 %v956
    %1951 = vmatpush1.bf16.msra.mxu0 %v955
    %1952 = vmatprep.subr.bf16.mxu0 %v964
    %1953 = vmatpush1.bf16.msra.mxu0 %v963
    %1954 = vmatprep.subr.bf16.mxu0 %v972
    %1955 = vmatpush1.bf16.msra.mxu0 %v971
    %1956 = vmatprep.subr.bf16.mxu0 %v980
    %1957 = vmatpush1.bf16.msra.mxu0 %v979
    %1958 = vmatprep.subr.bf16.mxu0 %v988
    %1959 = vmatpush1.bf16.msra.mxu0 %v987
    %1960 = vmatprep.subr.bf16.mxu0 %v996
    %1961 = vmatpush1.bf16.msra.mxu0 %v995
    %1962 = vmatprep.subr.bf16.mxu0 %v1004
    %1963 = vmatpush1.bf16.msra.mxu0 %v1003
    %1964 = vmatprep.subr.bf16.mxu0 %v1012
    %1965 = vmatpush1.bf16.msra.mxu0 %v1011
    %1966 = vmatprep.mubr.bf16.mxu0 %v878
    %1967 = vmatmul.mubr.bf16.gmra.mrb[0].mxu0 %v877
    %v1968 = vpop.f32.mrb[0].mxu0
    %v1969 = vadd.f32 %v1429, %v1968
    %v1970 = vpop.f32.mrb[0].mxu0
    %v1971 = vadd.f32 %v1433, %v1970
    %v1972 = vpop.f32.mrb[0].mxu0
    %v1973 = vpop.f32.mrb[0].mxu0
    %1974 = vdwg.mxu0
    %1975 = vmatprep.subr.bf16.mxu0 %v1020
    %1976 = vmatpush1.bf16.msra.mxu0 %v1019
    %1977 = vmatprep.subr.bf16.mxu0 %v1028
    %1978 = vmatpush1.bf16.msra.mxu0 %v1027
    %1979 = vmatprep.subr.bf16.mxu0 %v1036
    %1980 = vmatpush1.bf16.msra.mxu0 %v1035
    %1981 = vmatprep.subr.bf16.mxu0 %v1044
    %1982 = vmatpush1.bf16.msra.mxu0 %v1043
    %1983 = vmatprep.subr.bf16.mxu0 %v1052
    %1984 = vmatpush1.bf16.msra.mxu0 %v1051
    %1985 = vmatprep.subr.bf16.mxu0 %v1060
    %1986 = vmatpush1.bf16.msra.mxu0 %v1059
    %1987 = vmatprep.subr.bf16.mxu0 %v1068
    %1988 = vmatpush1.bf16.msra.mxu0 %v1067
    %1989 = vmatprep.subr.bf16.mxu0 %v1076
    %1990 = vmatpush1.bf16.msra.mxu0 %v1075
    %1991 = vmatprep.subr.bf16.mxu0 %v1084
    %1992 = vmatpush1.bf16.msra.mxu0 %v1083
    %1993 = vmatprep.subr.bf16.mxu0 %v1092
    %1994 = vmatpush1.bf16.msra.mxu0 %v1091
    %1995 = vmatprep.subr.bf16.mxu0 %v1100
    %1996 = vmatpush1.bf16.msra.mxu0 %v1099
    %1997 = vmatprep.subr.bf16.mxu0 %v1108
    %1998 = vmatpush1.bf16.msra.mxu0 %v1107
    %1999 = vmatprep.subr.bf16.mxu0 %v1116
    %2000 = vmatpush1.bf16.msra.mxu0 %v1115
    %2001 = vmatprep.subr.bf16.mxu0 %v1124
    %2002 = vmatpush1.bf16.msra.mxu0 %v1123
    %2003 = vmatprep.subr.bf16.mxu0 %v1132
    %2004 = vmatpush1.bf16.msra.mxu0 %v1131
    %2005 = vmatprep.subr.bf16.mxu0 %v1140
    %2006 = vmatpush1.bf16.msra.mxu0 %v1139
    %2007 = vmatprep.mubr.bf16.mxu0 %v880
    %2008 = vmatmul.mubr.bf16.gmra.mrb[0].mxu0 %v879
    %v2009 = vpop.f32.mrb[0].mxu0
    %v2010 = vadd.f32 %v1969, %v2009
    %v2011 = vpop.f32.mrb[0].mxu0
    %v2012 = vadd.f32 %v1971, %v2011
    %v2013 = vpop.f32.mrb[0].mxu0
    %v2014 = vpop.f32.mrb[0].mxu0
    %2015 = vdwg.mxu0
    %2016 = vmatprep.subr.bf16.mxu0 %v1148
    %2017 = vmatpush1.bf16.msra.mxu0 %v1147
    %2018 = vmatprep.subr.bf16.mxu0 %v1156
    %2019 = vmatpush1.bf16.msra.mxu0 %v1155
    %2020 = vmatprep.subr.bf16.mxu0 %v1164
    %2021 = vmatpush1.bf16.msra.mxu0 %v1163
    %2022 = vmatprep.subr.bf16.mxu0 %v1172
    %2023 = vmatpush1.bf16.msra.mxu0 %v1171
    %2024 = vmatprep.subr.bf16.mxu0 %v1180
    %2025 = vmatpush1.bf16.msra.mxu0 %v1179
    %2026 = vmatprep.subr.bf16.mxu0 %v1188
    %2027 = vmatpush1.bf16.msra.mxu0 %v1187
    %2028 = vmatprep.subr.bf16.mxu0 %v1196
    %2029 = vmatpush1.bf16.msra.mxu0 %v1195
    %2030 = vmatprep.subr.bf16.mxu0 %v1204
    %2031 = vmatpush1.bf16.msra.mxu0 %v1203
    %2032 = vmatprep.subr.bf16.mxu0 %v1212
    %2033 = vmatpush1.bf16.msra.mxu0 %v1211
    %2034 = vmatprep.subr.bf16.mxu0 %v1220
    %2035 = vmatpush1.bf16.msra.mxu0 %v1219
    %2036 = vmatprep.subr.bf16.mxu0 %v1228
    %2037 = vmatpush1.bf16.msra.mxu0 %v1227
    %2038 = vmatprep.subr.bf16.mxu0 %v1236
    %2039 = vmatpush1.bf16.msra.mxu0 %v1235
    %2040 = vmatprep.subr.bf16.mxu0 %v1244
    %2041 = vmatpush1.bf16.msra.mxu0 %v1243
    %2042 = vmatprep.subr.bf16.mxu0 %v1252
    %2043 = vmatpush1.bf16.msra.mxu0 %v1251
    %2044 = vmatprep.subr.bf16.mxu0 %v1260
    %2045 = vmatpush1.bf16.msra.mxu0 %v1259
    %2046 = vmatprep.subr.bf16.mxu0 %v1268
    %2047 = vmatpush1.bf16.msra.mxu0 %v1267
    %2048 = vmatprep.mubr.bf16.mxu0 %v882
    %2049 = vmatmul.mubr.bf16.gmra.mrb[0].mxu0 %v881
    %v2050 = vpop.f32.mrb[0].mxu0
    %v2051 = vadd.f32 %v2010, %v2050
    %v2052 = vpop.f32.mrb[0].mxu0
    %v2053 = vadd.f32 %v2012, %v2052
    %v2054 = vpop.f32.mrb[0].mxu0
    %v2055 = vpop.f32.mrb[0].mxu0
    %2056 = vdwg.mxu0
    %2057 = vmatprep.subr.bf16.mxu0 %v1276
    %2058 = vmatpush1.bf16.msra.mxu0 %v1275
    %2059 = vmatprep.subr.bf16.mxu0 %v1284
    %2060 = vmatpush1.bf16.msra.mxu0 %v1283
    %2061 = vmatprep.subr.bf16.mxu0 %v1292
    %2062 = vmatpush1.bf16.msra.mxu0 %v1291
    %2063 = vmatprep.subr.bf16.mxu0 %v1300
    %2064 = vmatpush1.bf16.msra.mxu0 %v1299
    %2065 = vmatprep.subr.bf16.mxu0 %v1308
    %2066 = vmatpush1.bf16.msra.mxu0 %v1307
    %2067 = vmatprep.subr.bf16.mxu0 %v1316
    %2068 = vmatpush1.bf16.msra.mxu0 %v1315
    %2069 = vmatprep.subr.bf16.mxu0 %v1324
    %2070 = vmatpush1.bf16.msra.mxu0 %v1323
    %2071 = vmatprep.subr.bf16.mxu0 %v1332
    %2072 = vmatpush1.bf16.msra.mxu0 %v1331
    %2073 = vmatprep.subr.bf16.mxu0 %v1340
    %2074 = vmatpush1.bf16.msra.mxu0 %v1339
    %2075 = vmatprep.subr.bf16.mxu0 %v1348
    %2076 = vmatpush1.bf16.msra.mxu0 %v1347
    %2077 = vmatprep.subr.bf16.mxu0 %v1356
    %2078 = vmatpush1.bf16.msra.mxu0 %v1355
    %2079 = vmatprep.subr.bf16.mxu0 %v1364
    %2080 = vmatpush1.bf16.msra.mxu0 %v1363
    %2081 = vmatprep.subr.bf16.mxu0 %v1372
    %2082 = vmatpush1.bf16.msra.mxu0 %v1371
    %2083 = vmatprep.subr.bf16.mxu0 %v1380
    %2084 = vmatpush1.bf16.msra.mxu0 %v1379
    %2085 = vmatprep.subr.bf16.mxu0 %v1388
    %2086 = vmatpush1.bf16.msra.mxu0 %v1387
    %2087 = vmatprep.subr.bf16.mxu0 %v1396
    %2088 = vmatpush1.bf16.msra.mxu0 %v1395
    %2089 = vmatprep.mubr.bf16.mxu0 %v884
    %2090 = vmatmul.mubr.bf16.gmra.mrb[0].mxu0 %v883
    %v2091 = vpop.f32.mrb[0].mxu0
    %v2092 = vadd.f32 %v2051, %v2091
    %v2093 = vpop.f32.mrb[0].mxu0
    %v2094 = vadd.f32 %v2053, %v2093
    %v2095 = vpop.f32.mrb[0].mxu0
    %v2096 = vpop.f32.mrb[0].mxu0
    %2097 = vdwg.mxu0
    %v2098 = vmax.f32 %v1600, 0.0
    %v2099 = vmax.f32 %v1602, 0.0
    %v2100 = vmax.f32 %v1764, 0.0
    %v2101 = vmax.f32 %v1766, 0.0
    %v2102 = vmax.f32 %v1928, 0.0
    %v2103 = vmax.f32 %v1930, 0.0
    %v2104 = vmax.f32 %v2092, 0.0
    %v2105 = vmax.f32 %v2094, 0.0
    %s2106 = sshll.u32 %s874, 4
    %2107 = dma.done %s100, %s2106
    %v2108 = vpack.c.bf16 %v2098, %v2098
    %v2109 = vpack.c.bf16 %v2099, %v2099
    %v2110 = vpack.c.bf16 %v2100, %v2100
    %v2111 = vpack.c.bf16 %v2101, %v2101
    %v2112 = vpack.c.bf16 %v2102, %v2102
    %v2113 = vpack.c.bf16 %v2103, %v2103
    %v2114 = vpack.c.bf16 %v2104, %v2104
    %v2115 = vpack.c.bf16 %v2105, %v2105
    %v2116 = vld [vmem:[#allocation4] sm:$0xff]
    %v2117 = vld [vmem:[#allocation4 + $0x8] sm:$0xff]
    %v2118 = vld [vmem:[#allocation4 + $0x10] sm:$0xff]
    %v2119 = vld [vmem:[#allocation4 + $0x18] sm:$0xff]
    %v2120 = vld [vmem:[#allocation4 + $0x20] sm:$0xff]
    %v2121 = vld [vmem:[#allocation4 + $0x28] sm:$0xff]
    %v2122 = vld [vmem:[#allocation4 + $0x30] sm:$0xff]
    %v2123 = vld [vmem:[#allocation4 + $0x38] sm:$0xff]
    %v2124 = vld [vmem:[#allocation4 + $0x40] sm:$0xff]
    %v2125 = vld [vmem:[#allocation4 + $0x48] sm:$0xff]
    %v2126 = vld [vmem:[#allocation4 + $0x50] sm:$0xff]
    %v2127 = vld [vmem:[#allocation4 + $0x58] sm:$0xff]
    %v2128 = vld [vmem:[#allocation4 + $0x60] sm:$0xff]
    %v2129 = vld [vmem:[#allocation4 + $0x68] sm:$0xff]
    %v2130 = vld [vmem:[#allocation4 + $0x70] sm:$0xff]
    %v2131 = vld [vmem:[#allocation4 + $0x78] sm:$0xff]
    %v2132 = vld [vmem:[#allocation4 + $0x80] sm:$0xff]
    %v2133 = vld [vmem:[#allocation4 + $0x88] sm:$0xff]
    %v2134 = vld [vmem:[#allocation4 + $0x90] sm:$0xff]
    %v2135 = vld [vmem:[#allocation4 + $0x98] sm:$0xff]
    %v2136 = vld [vmem:[#allocation4 + $0xa0] sm:$0xff]
    %v2137 = vld [vmem:[#allocation4 + $0xa8] sm:$0xff]
    %v2138 = vld [vmem:[#allocation4 + $0xb0] sm:$0xff]
    %v2139 = vld [vmem:[#allocation4 + $0xb8] sm:$0xff]
    %v2140 = vld [vmem:[#allocation4 + $0xc0] sm:$0xff]
    %v2141 = vld [vmem:[#allocation4 + $0xc8] sm:$0xff]
    %v2142 = vld [vmem:[#allocation4 + $0xd0] sm:$0xff]
    %v2143 = vld [vmem:[#allocation4 + $0xd8] sm:$0xff]
    %v2144 = vld [vmem:[#allocation4 + $0xe0] sm:$0xff]
    %v2145 = vld [vmem:[#allocation4 + $0xe8] sm:$0xff]
    %v2146 = vld [vmem:[#allocation4 + $0xf0] sm:$0xff]
    %v2147 = vld [vmem:[#allocation4 + $0xf8] sm:$0xff]
    %v2148 = vld [vmem:[#allocation4 + $0x100] sm:$0xff]
    %v2149 = vld [vmem:[#allocation4 + $0x108] sm:$0xff]
    %v2150 = vld [vmem:[#allocation4 + $0x110] sm:$0xff]
    %v2151 = vld [vmem:[#allocation4 + $0x118] sm:$0xff]
    %v2152 = vld [vmem:[#allocation4 + $0x120] sm:$0xff]
    %v2153 = vld [vmem:[#allocation4 + $0x128] sm:$0xff]
    %v2154 = vld [vmem:[#allocation4 + $0x130] sm:$0xff]
    %v2155 = vld [vmem:[#allocation4 + $0x138] sm:$0xff]
    %v2156 = vld [vmem:[#allocation4 + $0x140] sm:$0xff]
    %v2157 = vld [vmem:[#allocation4 + $0x148] sm:$0xff]
    %v2158 = vld [vmem:[#allocation4 + $0x150] sm:$0xff]
    %v2159 = vld [vmem:[#allocation4 + $0x158] sm:$0xff]
    %v2160 = vld [vmem:[#allocation4 + $0x160] sm:$0xff]
    %v2161 = vld [vmem:[#allocation4 + $0x168] sm:$0xff]
    %v2162 = vld [vmem:[#allocation4 + $0x170] sm:$0xff]
    %v2163 = vld [vmem:[#allocation4 + $0x178] sm:$0xff]
    %v2164 = vld [vmem:[#allocation4 + $0x180] sm:$0xff]
    %v2165 = vld [vmem:[#allocation4 + $0x188] sm:$0xff]
    %v2166 = vld [vmem:[#allocation4 + $0x190] sm:$0xff]
    %v2167 = vld [vmem:[#allocation4 + $0x198] sm:$0xff]
    %v2168 = vld [vmem:[#allocation4 + $0x1a0] sm:$0xff]
    %v2169 = vld [vmem:[#allocation4 + $0x1a8] sm:$0xff]
    %v2170 = vld [vmem:[#allocation4 + $0x1b0] sm:$0xff]
    %v2171 = vld [vmem:[#allocation4 + $0x1b8] sm:$0xff]
    %v2172 = vld [vmem:[#allocation4 + $0x1c0] sm:$0xff]
    %v2173 = vld [vmem:[#allocation4 + $0x1c8] sm:$0xff]
    %v2174 = vld [vmem:[#allocation4 + $0x1d0] sm:$0xff]
    %v2175 = vld [vmem:[#allocation4 + $0x1d8] sm:$0xff]
    %v2176 = vld [vmem:[#allocation4 + $0x1e0] sm:$0xff]
    %v2177 = vld [vmem:[#allocation4 + $0x1e8] sm:$0xff]
    %v2178 = vld [vmem:[#allocation4 + $0x1f0] sm:$0xff]
    %v2179 = vld [vmem:[#allocation4 + $0x1f8] sm:$0xff]
    %v2180 = vld [vmem:[#allocation4 + $0x200] sm:$0xff]
    %v2181 = vld [vmem:[#allocation4 + $0x208] sm:$0xff]
    %v2182 = vld [vmem:[#allocation4 + $0x210] sm:$0xff]
    %v2183 = vld [vmem:[#allocation4 + $0x218] sm:$0xff]
    %v2184 = vld [vmem:[#allocation4 + $0x220] sm:$0xff]
    %v2185 = vld [vmem:[#allocation4 + $0x228] sm:$0xff]
    %v2186 = vld [vmem:[#allocation4 + $0x230] sm:$0xff]
    %v2187 = vld [vmem:[#allocation4 + $0x238] sm:$0xff]
    %v2188 = vld [vmem:[#allocation4 + $0x240] sm:$0xff]
    %v2189 = vld [vmem:[#allocation4 + $0x248] sm:$0xff]
    %v2190 = vld [vmem:[#allocation4 + $0x250] sm:$0xff]
    %v2191 = vld [vmem:[#allocation4 + $0x258] sm:$0xff]
    %v2192 = vld [vmem:[#allocation4 + $0x260] sm:$0xff]
    %v2193 = vld [vmem:[#allocation4 + $0x268] sm:$0xff]
    %v2194 = vld [vmem:[#allocation4 + $0x270] sm:$0xff]
    %v2195 = vld [vmem:[#allocation4 + $0x278] sm:$0xff]
    %v2196 = vld [vmem:[#allocation4 + $0x280] sm:$0xff]
    %v2197 = vld [vmem:[#allocation4 + $0x288] sm:$0xff]
    %v2198 = vld [vmem:[#allocation4 + $0x290] sm:$0xff]
    %v2199 = vld [vmem:[#allocation4 + $0x298] sm:$0xff]
    %v2200 = vld [vmem:[#allocation4 + $0x2a0] sm:$0xff]
    %v2201 = vld [vmem:[#allocation4 + $0x2a8] sm:$0xff]
    %v2202 = vld [vmem:[#allocation4 + $0x2b0] sm:$0xff]
    %v2203 = vld [vmem:[#allocation4 + $0x2b8] sm:$0xff]
    %v2204 = vld [vmem:[#allocation4 + $0x2c0] sm:$0xff]
    %v2205 = vld [vmem:[#allocation4 + $0x2c8] sm:$0xff]
    %v2206 = vld [vmem:[#allocation4 + $0x2d0] sm:$0xff]
    %v2207 = vld [vmem:[#allocation4 + $0x2d8] sm:$0xff]
    %v2208 = vld [vmem:[#allocation4 + $0x2e0] sm:$0xff]
    %v2209 = vld [vmem:[#allocation4 + $0x2e8] sm:$0xff]
    %v2210 = vld [vmem:[#allocation4 + $0x2f0] sm:$0xff]
    %v2211 = vld [vmem:[#allocation4 + $0x2f8] sm:$0xff]
    %v2212 = vld [vmem:[#allocation4 + $0x300] sm:$0xff]
    %v2213 = vld [vmem:[#allocation4 + $0x308] sm:$0xff]
    %v2214 = vld [vmem:[#allocation4 + $0x310] sm:$0xff]
    %v2215 = vld [vmem:[#allocation4 + $0x318] sm:$0xff]
    %v2216 = vld [vmem:[#allocation4 + $0x320] sm:$0xff]
    %v2217 = vld [vmem:[#allocation4 + $0x328] sm:$0xff]
    %v2218 = vld [vmem:[#allocation4 + $0x330] sm:$0xff]
    %v2219 = vld [vmem:[#allocation4 + $0x338] sm:$0xff]
    %v2220 = vld [vmem:[#allocation4 + $0x340] sm:$0xff]
    %v2221 = vld [vmem:[#allocation4 + $0x348] sm:$0xff]
    %v2222 = vld [vmem:[#allocation4 + $0x350] sm:$0xff]
    %v2223 = vld [vmem:[#allocation4 + $0x358] sm:$0xff]
    %v2224 = vld [vmem:[#allocation4 + $0x360] sm:$0xff]
    %v2225 = vld [vmem:[#allocation4 + $0x368] sm:$0xff]
    %v2226 = vld [vmem:[#allocation4 + $0x370] sm:$0xff]
    %v2227 = vld [vmem:[#allocation4 + $0x378] sm:$0xff]
    %v2228 = vld [vmem:[#allocation4 + $0x380] sm:$0xff]
    %v2229 = vld [vmem:[#allocation4 + $0x388] sm:$0xff]
    %v2230 = vld [vmem:[#allocation4 + $0x390] sm:$0xff]
    %v2231 = vld [vmem:[#allocation4 + $0x398] sm:$0xff]
    %v2232 = vld [vmem:[#allocation4 + $0x3a0] sm:$0xff]
    %v2233 = vld [vmem:[#allocation4 + $0x3a8] sm:$0xff]
    %v2234 = vld [vmem:[#allocation4 + $0x3b0] sm:$0xff]
    %v2235 = vld [vmem:[#allocation4 + $0x3b8] sm:$0xff]
    %v2236 = vld [vmem:[#allocation4 + $0x3c0] sm:$0xff]
    %v2237 = vld [vmem:[#allocation4 + $0x3c8] sm:$0xff]
    %v2238 = vld [vmem:[#allocation4 + $0x3d0] sm:$0xff]
    %v2239 = vld [vmem:[#allocation4 + $0x3d8] sm:$0xff]
    %v2240 = vld [vmem:[#allocation4 + $0x3e0] sm:$0xff]
    %v2241 = vld [vmem:[#allocation4 + $0x3e8] sm:$0xff]
    %v2242 = vld [vmem:[#allocation4 + $0x3f0] sm:$0xff]
    %v2243 = vld [vmem:[#allocation4 + $0x3f8] sm:$0xff]
    %v2244 = vld [vmem:[#allocation4 + $0x400] sm:$0xff]
    %v2245 = vld [vmem:[#allocation4 + $0x408] sm:$0xff]
    %v2246 = vld [vmem:[#allocation4 + $0x410] sm:$0xff]
    %v2247 = vld [vmem:[#allocation4 + $0x418] sm:$0xff]
    %v2248 = vld [vmem:[#allocation4 + $0x420] sm:$0xff]
    %v2249 = vld [vmem:[#allocation4 + $0x428] sm:$0xff]
    %v2250 = vld [vmem:[#allocation4 + $0x430] sm:$0xff]
    %v2251 = vld [vmem:[#allocation4 + $0x438] sm:$0xff]
    %v2252 = vld [vmem:[#allocation4 + $0x440] sm:$0xff]
    %v2253 = vld [vmem:[#allocation4 + $0x448] sm:$0xff]
    %v2254 = vld [vmem:[#allocation4 + $0x450] sm:$0xff]
    %v2255 = vld [vmem:[#allocation4 + $0x458] sm:$0xff]
    %v2256 = vld [vmem:[#allocation4 + $0x460] sm:$0xff]
    %v2257 = vld [vmem:[#allocation4 + $0x468] sm:$0xff]
    %v2258 = vld [vmem:[#allocation4 + $0x470] sm:$0xff]
    %v2259 = vld [vmem:[#allocation4 + $0x478] sm:$0xff]
    %v2260 = vld [vmem:[#allocation4 + $0x480] sm:$0xff]
    %v2261 = vld [vmem:[#allocation4 + $0x488] sm:$0xff]
    %v2262 = vld [vmem:[#allocation4 + $0x490] sm:$0xff]
    %v2263 = vld [vmem:[#allocation4 + $0x498] sm:$0xff]
    %v2264 = vld [vmem:[#allocation4 + $0x4a0] sm:$0xff]
    %v2265 = vld [vmem:[#allocation4 + $0x4a8] sm:$0xff]
    %v2266 = vld [vmem:[#allocation4 + $0x4b0] sm:$0xff]
    %v2267 = vld [vmem:[#allocation4 + $0x4b8] sm:$0xff]
    %v2268 = vld [vmem:[#allocation4 + $0x4c0] sm:$0xff]
    %v2269 = vld [vmem:[#allocation4 + $0x4c8] sm:$0xff]
    %v2270 = vld [vmem:[#allocation4 + $0x4d0] sm:$0xff]
    %v2271 = vld [vmem:[#allocation4 + $0x4d8] sm:$0xff]
    %v2272 = vld [vmem:[#allocation4 + $0x4e0] sm:$0xff]
    %v2273 = vld [vmem:[#allocation4 + $0x4e8] sm:$0xff]
    %v2274 = vld [vmem:[#allocation4 + $0x4f0] sm:$0xff]
    %v2275 = vld [vmem:[#allocation4 + $0x4f8] sm:$0xff]
    %v2276 = vld [vmem:[#allocation4 + $0x500] sm:$0xff]
    %v2277 = vld [vmem:[#allocation4 + $0x508] sm:$0xff]
    %v2278 = vld [vmem:[#allocation4 + $0x510] sm:$0xff]
    %v2279 = vld [vmem:[#allocation4 + $0x518] sm:$0xff]
    %v2280 = vld [vmem:[#allocation4 + $0x520] sm:$0xff]
    %v2281 = vld [vmem:[#allocation4 + $0x528] sm:$0xff]
    %v2282 = vld [vmem:[#allocation4 + $0x530] sm:$0xff]
    %v2283 = vld [vmem:[#allocation4 + $0x538] sm:$0xff]
    %v2284 = vld [vmem:[#allocation4 + $0x540] sm:$0xff]
    %v2285 = vld [vmem:[#allocation4 + $0x548] sm:$0xff]
    %v2286 = vld [vmem:[#allocation4 + $0x550] sm:$0xff]
    %v2287 = vld [vmem:[#allocation4 + $0x558] sm:$0xff]
    %v2288 = vld [vmem:[#allocation4 + $0x560] sm:$0xff]
    %v2289 = vld [vmem:[#allocation4 + $0x568] sm:$0xff]
    %v2290 = vld [vmem:[#allocation4 + $0x570] sm:$0xff]
    %v2291 = vld [vmem:[#allocation4 + $0x578] sm:$0xff]
    %v2292 = vld [vmem:[#allocation4 + $0x580] sm:$0xff]
    %v2293 = vld [vmem:[#allocation4 + $0x588] sm:$0xff]
    %v2294 = vld [vmem:[#allocation4 + $0x590] sm:$0xff]
    %v2295 = vld [vmem:[#allocation4 + $0x598] sm:$0xff]
    %v2296 = vld [vmem:[#allocation4 + $0x5a0] sm:$0xff]
    %v2297 = vld [vmem:[#allocation4 + $0x5a8] sm:$0xff]
    %v2298 = vld [vmem:[#allocation4 + $0x5b0] sm:$0xff]
    %v2299 = vld [vmem:[#allocation4 + $0x5b8] sm:$0xff]
    %v2300 = vld [vmem:[#allocation4 + $0x5c0] sm:$0xff]
    %v2301 = vld [vmem:[#allocation4 + $0x5c8] sm:$0xff]
    %v2302 = vld [vmem:[#allocation4 + $0x5d0] sm:$0xff]
    %v2303 = vld [vmem:[#allocation4 + $0x5d8] sm:$0xff]
    %v2304 = vld [vmem:[#allocation4 + $0x5e0] sm:$0xff]
    %v2305 = vld [vmem:[#allocation4 + $0x5e8] sm:$0xff]
    %v2306 = vld [vmem:[#allocation4 + $0x5f0] sm:$0xff]
    %v2307 = vld [vmem:[#allocation4 + $0x5f8] sm:$0xff]
    %v2308 = vld [vmem:[#allocation4 + $0x600] sm:$0xff]
    %v2309 = vld [vmem:[#allocation4 + $0x608] sm:$0xff]
    %v2310 = vld [vmem:[#allocation4 + $0x610] sm:$0xff]
    %v2311 = vld [vmem:[#allocation4 + $0x618] sm:$0xff]
    %v2312 = vld [vmem:[#allocation4 + $0x620] sm:$0xff]
    %v2313 = vld [vmem:[#allocation4 + $0x628] sm:$0xff]
    %v2314 = vld [vmem:[#allocation4 + $0x630] sm:$0xff]
    %v2315 = vld [vmem:[#allocation4 + $0x638] sm:$0xff]
    %v2316 = vld [vmem:[#allocation4 + $0x640] sm:$0xff]
    %v2317 = vld [vmem:[#allocation4 + $0x648] sm:$0xff]
    %v2318 = vld [vmem:[#allocation4 + $0x650] sm:$0xff]
    %v2319 = vld [vmem:[#allocation4 + $0x658] sm:$0xff]
    %v2320 = vld [vmem:[#allocation4 + $0x660] sm:$0xff]
    %v2321 = vld [vmem:[#allocation4 + $0x668] sm:$0xff]
    %v2322 = vld [vmem:[#allocation4 + $0x670] sm:$0xff]
    %v2323 = vld [vmem:[#allocation4 + $0x678] sm:$0xff]
    %v2324 = vld [vmem:[#allocation4 + $0x680] sm:$0xff]
    %v2325 = vld [vmem:[#allocation4 + $0x688] sm:$0xff]
    %v2326 = vld [vmem:[#allocation4 + $0x690] sm:$0xff]
    %v2327 = vld [vmem:[#allocation4 + $0x698] sm:$0xff]
    %v2328 = vld [vmem:[#allocation4 + $0x6a0] sm:$0xff]
    %v2329 = vld [vmem:[#allocation4 + $0x6a8] sm:$0xff]
    %v2330 = vld [vmem:[#allocation4 + $0x6b0] sm:$0xff]
    %v2331 = vld [vmem:[#allocation4 + $0x6b8] sm:$0xff]
    %v2332 = vld [vmem:[#allocation4 + $0x6c0] sm:$0xff]
    %v2333 = vld [vmem:[#allocation4 + $0x6c8] sm:$0xff]
    %v2334 = vld [vmem:[#allocation4 + $0x6d0] sm:$0xff]
    %v2335 = vld [vmem:[#allocation4 + $0x6d8] sm:$0xff]
    %v2336 = vld [vmem:[#allocation4 + $0x6e0] sm:$0xff]
    %v2337 = vld [vmem:[#allocation4 + $0x6e8] sm:$0xff]
    %v2338 = vld [vmem:[#allocation4 + $0x6f0] sm:$0xff]
    %v2339 = vld [vmem:[#allocation4 + $0x6f8] sm:$0xff]
    %v2340 = vld [vmem:[#allocation4 + $0x700] sm:$0xff]
    %v2341 = vld [vmem:[#allocation4 + $0x708] sm:$0xff]
    %v2342 = vld [vmem:[#allocation4 + $0x710] sm:$0xff]
    %v2343 = vld [vmem:[#allocation4 + $0x718] sm:$0xff]
    %v2344 = vld [vmem:[#allocation4 + $0x720] sm:$0xff]
    %v2345 = vld [vmem:[#allocation4 + $0x728] sm:$0xff]
    %v2346 = vld [vmem:[#allocation4 + $0x730] sm:$0xff]
    %v2347 = vld [vmem:[#allocation4 + $0x738] sm:$0xff]
    %v2348 = vld [vmem:[#allocation4 + $0x740] sm:$0xff]
    %v2349 = vld [vmem:[#allocation4 + $0x748] sm:$0xff]
    %v2350 = vld [vmem:[#allocation4 + $0x750] sm:$0xff]
    %v2351 = vld [vmem:[#allocation4 + $0x758] sm:$0xff]
    %v2352 = vld [vmem:[#allocation4 + $0x760] sm:$0xff]
    %v2353 = vld [vmem:[#allocation4 + $0x768] sm:$0xff]
    %v2354 = vld [vmem:[#allocation4 + $0x770] sm:$0xff]
    %v2355 = vld [vmem:[#allocation4 + $0x778] sm:$0xff]
    %v2356 = vld [vmem:[#allocation4 + $0x780] sm:$0xff]
    %v2357 = vld [vmem:[#allocation4 + $0x788] sm:$0xff]
    %v2358 = vld [vmem:[#allocation4 + $0x790] sm:$0xff]
    %v2359 = vld [vmem:[#allocation4 + $0x798] sm:$0xff]
    %v2360 = vld [vmem:[#allocation4 + $0x7a0] sm:$0xff]
    %v2361 = vld [vmem:[#allocation4 + $0x7a8] sm:$0xff]
    %v2362 = vld [vmem:[#allocation4 + $0x7b0] sm:$0xff]
    %v2363 = vld [vmem:[#allocation4 + $0x7b8] sm:$0xff]
    %v2364 = vld [vmem:[#allocation4 + $0x7c0] sm:$0xff]
    %v2365 = vld [vmem:[#allocation4 + $0x7c8] sm:$0xff]
    %v2366 = vld [vmem:[#allocation4 + $0x7d0] sm:$0xff]
    %v2367 = vld [vmem:[#allocation4 + $0x7d8] sm:$0xff]
    %v2368 = vld [vmem:[#allocation4 + $0x7e0] sm:$0xff]
    %v2369 = vld [vmem:[#allocation4 + $0x7e8] sm:$0xff]
    %v2370 = vld [vmem:[#allocation4 + $0x7f0] sm:$0xff]
    %v2371 = vld [vmem:[#allocation4 + $0x7f8] sm:$0xff]
    %v2372 = vld [vmem:[#allocation4 + $0x800] sm:$0xff]
    %v2373 = vld [vmem:[#allocation4 + $0x808] sm:$0xff]
    %v2374 = vld [vmem:[#allocation4 + $0x810] sm:$0xff]
    %v2375 = vld [vmem:[#allocation4 + $0x818] sm:$0xff]
    %v2376 = vld [vmem:[#allocation4 + $0x820] sm:$0xff]
    %v2377 = vld [vmem:[#allocation4 + $0x828] sm:$0xff]
    %v2378 = vld [vmem:[#allocation4 + $0x830] sm:$0xff]
    %v2379 = vld [vmem:[#allocation4 + $0x838] sm:$0xff]
    %v2380 = vld [vmem:[#allocation4 + $0x840] sm:$0xff]
    %v2381 = vld [vmem:[#allocation4 + $0x848] sm:$0xff]
    %v2382 = vld [vmem:[#allocation4 + $0x850] sm:$0xff]
    %v2383 = vld [vmem:[#allocation4 + $0x858] sm:$0xff]
    %v2384 = vld [vmem:[#allocation4 + $0x860] sm:$0xff]
    %v2385 = vld [vmem:[#allocation4 + $0x868] sm:$0xff]
    %v2386 = vld [vmem:[#allocation4 + $0x870] sm:$0xff]
    %v2387 = vld [vmem:[#allocation4 + $0x878] sm:$0xff]
    %v2388 = vld [vmem:[#allocation4 + $0x880] sm:$0xff]
    %v2389 = vld [vmem:[#allocation4 + $0x888] sm:$0xff]
    %v2390 = vld [vmem:[#allocation4 + $0x890] sm:$0xff]
    %v2391 = vld [vmem:[#allocation4 + $0x898] sm:$0xff]
    %v2392 = vld [vmem:[#allocation4 + $0x8a0] sm:$0xff]
    %v2393 = vld [vmem:[#allocation4 + $0x8a8] sm:$0xff]
    %v2394 = vld [vmem:[#allocation4 + $0x8b0] sm:$0xff]
    %v2395 = vld [vmem:[#allocation4 + $0x8b8] sm:$0xff]
    %v2396 = vld [vmem:[#allocation4 + $0x8c0] sm:$0xff]
    %v2397 = vld [vmem:[#allocation4 + $0x8c8] sm:$0xff]
    %v2398 = vld [vmem:[#allocation4 + $0x8d0] sm:$0xff]
    %v2399 = vld [vmem:[#allocation4 + $0x8d8] sm:$0xff]
    %v2400 = vld [vmem:[#allocation4 + $0x8e0] sm:$0xff]
    %v2401 = vld [vmem:[#allocation4 + $0x8e8] sm:$0xff]
    %v2402 = vld [vmem:[#allocation4 + $0x8f0] sm:$0xff]
    %v2403 = vld [vmem:[#allocation4 + $0x8f8] sm:$0xff]
    %v2404 = vld [vmem:[#allocation4 + $0x900] sm:$0xff]
    %v2405 = vld [vmem:[#allocation4 + $0x908] sm:$0xff]
    %v2406 = vld [vmem:[#allocation4 + $0x910] sm:$0xff]
    %v2407 = vld [vmem:[#allocation4 + $0x918] sm:$0xff]
    %v2408 = vld [vmem:[#allocation4 + $0x920] sm:$0xff]
    %v2409 = vld [vmem:[#allocation4 + $0x928] sm:$0xff]
    %v2410 = vld [vmem:[#allocation4 + $0x930] sm:$0xff]
    %v2411 = vld [vmem:[#allocation4 + $0x938] sm:$0xff]
    %v2412 = vld [vmem:[#allocation4 + $0x940] sm:$0xff]
    %v2413 = vld [vmem:[#allocation4 + $0x948] sm:$0xff]
    %v2414 = vld [vmem:[#allocation4 + $0x950] sm:$0xff]
    %v2415 = vld [vmem:[#allocation4 + $0x958] sm:$0xff]
    %v2416 = vld [vmem:[#allocation4 + $0x960] sm:$0xff]
    %v2417 = vld [vmem:[#allocation4 + $0x968] sm:$0xff]
    %v2418 = vld [vmem:[#allocation4 + $0x970] sm:$0xff]
    %v2419 = vld [vmem:[#allocation4 + $0x978] sm:$0xff]
    %v2420 = vld [vmem:[#allocation4 + $0x980] sm:$0xff]
    %v2421 = vld [vmem:[#allocation4 + $0x988] sm:$0xff]
    %v2422 = vld [vmem:[#allocation4 + $0x990] sm:$0xff]
    %v2423 = vld [vmem:[#allocation4 + $0x998] sm:$0xff]
    %v2424 = vld [vmem:[#allocation4 + $0x9a0] sm:$0xff]
    %v2425 = vld [vmem:[#allocation4 + $0x9a8] sm:$0xff]
    %v2426 = vld [vmem:[#allocation4 + $0x9b0] sm:$0xff]
    %v2427 = vld [vmem:[#allocation4 + $0x9b8] sm:$0xff]
    %v2428 = vld [vmem:[#allocation4 + $0x9c0] sm:$0xff]
    %v2429 = vld [vmem:[#allocation4 + $0x9c8] sm:$0xff]
    %v2430 = vld [vmem:[#allocation4 + $0x9d0] sm:$0xff]
    %v2431 = vld [vmem:[#allocation4 + $0x9d8] sm:$0xff]
    %v2432 = vld [vmem:[#allocation4 + $0x9e0] sm:$0xff]
    %v2433 = vld [vmem:[#allocation4 + $0x9e8] sm:$0xff]
    %v2434 = vld [vmem:[#allocation4 + $0x9f0] sm:$0xff]
    %v2435 = vld [vmem:[#allocation4 + $0x9f8] sm:$0xff]
    %v2436 = vld [vmem:[#allocation4 + $0xa00] sm:$0xff]
    %v2437 = vld [vmem:[#allocation4 + $0xa08] sm:$0xff]
    %v2438 = vld [vmem:[#allocation4 + $0xa10] sm:$0xff]
    %v2439 = vld [vmem:[#allocation4 + $0xa18] sm:$0xff]
    %v2440 = vld [vmem:[#allocation4 + $0xa20] sm:$0xff]
    %v2441 = vld [vmem:[#allocation4 + $0xa28] sm:$0xff]
    %v2442 = vld [vmem:[#allocation4 + $0xa30] sm:$0xff]
    %v2443 = vld [vmem:[#allocation4 + $0xa38] sm:$0xff]
    %v2444 = vld [vmem:[#allocation4 + $0xa40] sm:$0xff]
    %v2445 = vld [vmem:[#allocation4 + $0xa48] sm:$0xff]
    %v2446 = vld [vmem:[#allocation4 + $0xa50] sm:$0xff]
    %v2447 = vld [vmem:[#allocation4 + $0xa58] sm:$0xff]
    %v2448 = vld [vmem:[#allocation4 + $0xa60] sm:$0xff]
    %v2449 = vld [vmem:[#allocation4 + $0xa68] sm:$0xff]
    %v2450 = vld [vmem:[#allocation4 + $0xa70] sm:$0xff]
    %v2451 = vld [vmem:[#allocation4 + $0xa78] sm:$0xff]
    %v2452 = vld [vmem:[#allocation4 + $0xa80] sm:$0xff]
    %v2453 = vld [vmem:[#allocation4 + $0xa88] sm:$0xff]
    %v2454 = vld [vmem:[#allocation4 + $0xa90] sm:$0xff]
    %v2455 = vld [vmem:[#allocation4 + $0xa98] sm:$0xff]
    %v2456 = vld [vmem:[#allocation4 + $0xaa0] sm:$0xff]
    %v2457 = vld [vmem:[#allocation4 + $0xaa8] sm:$0xff]
    %v2458 = vld [vmem:[#allocation4 + $0xab0] sm:$0xff]
    %v2459 = vld [vmem:[#allocation4 + $0xab8] sm:$0xff]
    %v2460 = vld [vmem:[#allocation4 + $0xac0] sm:$0xff]
    %v2461 = vld [vmem:[#allocation4 + $0xac8] sm:$0xff]
    %v2462 = vld [vmem:[#allocation4 + $0xad0] sm:$0xff]
    %v2463 = vld [vmem:[#allocation4 + $0xad8] sm:$0xff]
    %v2464 = vld [vmem:[#allocation4 + $0xae0] sm:$0xff]
    %v2465 = vld [vmem:[#allocation4 + $0xae8] sm:$0xff]
    %v2466 = vld [vmem:[#allocation4 + $0xaf0] sm:$0xff]
    %v2467 = vld [vmem:[#allocation4 + $0xaf8] sm:$0xff]
    %v2468 = vld [vmem:[#allocation4 + $0xb00] sm:$0xff]
    %v2469 = vld [vmem:[#allocation4 + $0xb08] sm:$0xff]
    %v2470 = vld [vmem:[#allocation4 + $0xb10] sm:$0xff]
    %v2471 = vld [vmem:[#allocation4 + $0xb18] sm:$0xff]
    %v2472 = vld [vmem:[#allocation4 + $0xb20] sm:$0xff]
    %v2473 = vld [vmem:[#allocation4 + $0xb28] sm:$0xff]
    %v2474 = vld [vmem:[#allocation4 + $0xb30] sm:$0xff]
    %v2475 = vld [vmem:[#allocation4 + $0xb38] sm:$0xff]
    %v2476 = vld [vmem:[#allocation4 + $0xb40] sm:$0xff]
    %v2477 = vld [vmem:[#allocation4 + $0xb48] sm:$0xff]
    %v2478 = vld [vmem:[#allocation4 + $0xb50] sm:$0xff]
    %v2479 = vld [vmem:[#allocation4 + $0xb58] sm:$0xff]
    %v2480 = vld [vmem:[#allocation4 + $0xb60] sm:$0xff]
    %v2481 = vld [vmem:[#allocation4 + $0xb68] sm:$0xff]
    %v2482 = vld [vmem:[#allocation4 + $0xb70] sm:$0xff]
    %v2483 = vld [vmem:[#allocation4 + $0xb78] sm:$0xff]
    %v2484 = vld [vmem:[#allocation4 + $0xb80] sm:$0xff]
    %v2485 = vld [vmem:[#allocation4 + $0xb88] sm:$0xff]
    %v2486 = vld [vmem:[#allocation4 + $0xb90] sm:$0xff]
    %v2487 = vld [vmem:[#allocation4 + $0xb98] sm:$0xff]
    %v2488 = vld [vmem:[#allocation4 + $0xba0] sm:$0xff]
    %v2489 = vld [vmem:[#allocation4 + $0xba8] sm:$0xff]
    %v2490 = vld [vmem:[#allocation4 + $0xbb0] sm:$0xff]
    %v2491 = vld [vmem:[#allocation4 + $0xbb8] sm:$0xff]
    %v2492 = vld [vmem:[#allocation4 + $0xbc0] sm:$0xff]
    %v2493 = vld [vmem:[#allocation4 + $0xbc8] sm:$0xff]
    %v2494 = vld [vmem:[#allocation4 + $0xbd0] sm:$0xff]
    %v2495 = vld [vmem:[#allocation4 + $0xbd8] sm:$0xff]
    %v2496 = vld [vmem:[#allocation4 + $0xbe0] sm:$0xff]
    %v2497 = vld [vmem:[#allocation4 + $0xbe8] sm:$0xff]
    %v2498 = vld [vmem:[#allocation4 + $0xbf0] sm:$0xff]
    %v2499 = vld [vmem:[#allocation4 + $0xbf8] sm:$0xff]
    %v2500 = vld [vmem:[#allocation4 + $0xc00] sm:$0xff]
    %v2501 = vld [vmem:[#allocation4 + $0xc08] sm:$0xff]
    %v2502 = vld [vmem:[#allocation4 + $0xc10] sm:$0xff]
    %v2503 = vld [vmem:[#allocation4 + $0xc18] sm:$0xff]
    %v2504 = vld [vmem:[#allocation4 + $0xc20] sm:$0xff]
    %v2505 = vld [vmem:[#allocation4 + $0xc28] sm:$0xff]
    %v2506 = vld [vmem:[#allocation4 + $0xc30] sm:$0xff]
    %v2507 = vld [vmem:[#allocation4 + $0xc38] sm:$0xff]
    %v2508 = vld [vmem:[#allocation4 + $0xc40] sm:$0xff]
    %v2509 = vld [vmem:[#allocation4 + $0xc48] sm:$0xff]
    %v2510 = vld [vmem:[#allocation4 + $0xc50] sm:$0xff]
    %v2511 = vld [vmem:[#allocation4 + $0xc58] sm:$0xff]
    %v2512 = vld [vmem:[#allocation4 + $0xc60] sm:$0xff]
    %v2513 = vld [vmem:[#allocation4 + $0xc68] sm:$0xff]
    %v2514 = vld [vmem:[#allocation4 + $0xc70] sm:$0xff]
    %v2515 = vld [vmem:[#allocation4 + $0xc78] sm:$0xff]
    %v2516 = vld [vmem:[#allocation4 + $0xc80] sm:$0xff]
    %v2517 = vld [vmem:[#allocation4 + $0xc88] sm:$0xff]
    %v2518 = vld [vmem:[#allocation4 + $0xc90] sm:$0xff]
    %v2519 = vld [vmem:[#allocation4 + $0xc98] sm:$0xff]
    %v2520 = vld [vmem:[#allocation4 + $0xca0] sm:$0xff]
    %v2521 = vld [vmem:[#allocation4 + $0xca8] sm:$0xff]
    %v2522 = vld [vmem:[#allocation4 + $0xcb0] sm:$0xff]
    %v2523 = vld [vmem:[#allocation4 + $0xcb8] sm:$0xff]
    %v2524 = vld [vmem:[#allocation4 + $0xcc0] sm:$0xff]
    %v2525 = vld [vmem:[#allocation4 + $0xcc8] sm:$0xff]
    %v2526 = vld [vmem:[#allocation4 + $0xcd0] sm:$0xff]
    %v2527 = vld [vmem:[#allocation4 + $0xcd8] sm:$0xff]
    %v2528 = vld [vmem:[#allocation4 + $0xce0] sm:$0xff]
    %v2529 = vld [vmem:[#allocation4 + $0xce8] sm:$0xff]
    %v2530 = vld [vmem:[#allocation4 + $0xcf0] sm:$0xff]
    %v2531 = vld [vmem:[#allocation4 + $0xcf8] sm:$0xff]
    %v2532 = vld [vmem:[#allocation4 + $0xd00] sm:$0xff]
    %v2533 = vld [vmem:[#allocation4 + $0xd08] sm:$0xff]
    %v2534 = vld [vmem:[#allocation4 + $0xd10] sm:$0xff]
    %v2535 = vld [vmem:[#allocation4 + $0xd18] sm:$0xff]
    %v2536 = vld [vmem:[#allocation4 + $0xd20] sm:$0xff]
    %v2537 = vld [vmem:[#allocation4 + $0xd28] sm:$0xff]
    %v2538 = vld [vmem:[#allocation4 + $0xd30] sm:$0xff]
    %v2539 = vld [vmem:[#allocation4 + $0xd38] sm:$0xff]
    %v2540 = vld [vmem:[#allocation4 + $0xd40] sm:$0xff]
    %v2541 = vld [vmem:[#allocation4 + $0xd48] sm:$0xff]
    %v2542 = vld [vmem:[#allocation4 + $0xd50] sm:$0xff]
    %v2543 = vld [vmem:[#allocation4 + $0xd58] sm:$0xff]
    %v2544 = vld [vmem:[#allocation4 + $0xd60] sm:$0xff]
    %v2545 = vld [vmem:[#allocation4 + $0xd68] sm:$0xff]
    %v2546 = vld [vmem:[#allocation4 + $0xd70] sm:$0xff]
    %v2547 = vld [vmem:[#allocation4 + $0xd78] sm:$0xff]
    %v2548 = vld [vmem:[#allocation4 + $0xd80] sm:$0xff]
    %v2549 = vld [vmem:[#allocation4 + $0xd88] sm:$0xff]
    %v2550 = vld [vmem:[#allocation4 + $0xd90] sm:$0xff]
    %v2551 = vld [vmem:[#allocation4 + $0xd98] sm:$0xff]
    %v2552 = vld [vmem:[#allocation4 + $0xda0] sm:$0xff]
    %v2553 = vld [vmem:[#allocation4 + $0xda8] sm:$0xff]
    %v2554 = vld [vmem:[#allocation4 + $0xdb0] sm:$0xff]
    %v2555 = vld [vmem:[#allocation4 + $0xdb8] sm:$0xff]
    %v2556 = vld [vmem:[#allocation4 + $0xdc0] sm:$0xff]
    %v2557 = vld [vmem:[#allocation4 + $0xdc8] sm:$0xff]
    %v2558 = vld [vmem:[#allocation4 + $0xdd0] sm:$0xff]
    %v2559 = vld [vmem:[#allocation4 + $0xdd8] sm:$0xff]
    %v2560 = vld [vmem:[#allocation4 + $0xde0] sm:$0xff]
    %v2561 = vld [vmem:[#allocation4 + $0xde8] sm:$0xff]
    %v2562 = vld [vmem:[#allocation4 + $0xdf0] sm:$0xff]
    %v2563 = vld [vmem:[#allocation4 + $0xdf8] sm:$0xff]
    %v2564 = vld [vmem:[#allocation4 + $0xe00] sm:$0xff]
    %v2565 = vld [vmem:[#allocation4 + $0xe08] sm:$0xff]
    %v2566 = vld [vmem:[#allocation4 + $0xe10] sm:$0xff]
    %v2567 = vld [vmem:[#allocation4 + $0xe18] sm:$0xff]
    %v2568 = vld [vmem:[#allocation4 + $0xe20] sm:$0xff]
    %v2569 = vld [vmem:[#allocation4 + $0xe28] sm:$0xff]
    %v2570 = vld [vmem:[#allocation4 + $0xe30] sm:$0xff]
    %v2571 = vld [vmem:[#allocation4 + $0xe38] sm:$0xff]
    %v2572 = vld [vmem:[#allocation4 + $0xe40] sm:$0xff]
    %v2573 = vld [vmem:[#allocation4 + $0xe48] sm:$0xff]
    %v2574 = vld [vmem:[#allocation4 + $0xe50] sm:$0xff]
    %v2575 = vld [vmem:[#allocation4 + $0xe58] sm:$0xff]
    %v2576 = vld [vmem:[#allocation4 + $0xe60] sm:$0xff]
    %v2577 = vld [vmem:[#allocation4 + $0xe68] sm:$0xff]
    %v2578 = vld [vmem:[#allocation4 + $0xe70] sm:$0xff]
    %v2579 = vld [vmem:[#allocation4 + $0xe78] sm:$0xff]
    %v2580 = vld [vmem:[#allocation4 + $0xe80] sm:$0xff]
    %v2581 = vld [vmem:[#allocation4 + $0xe88] sm:$0xff]
    %v2582 = vld [vmem:[#allocation4 + $0xe90] sm:$0xff]
    %v2583 = vld [vmem:[#allocation4 + $0xe98] sm:$0xff]
    %v2584 = vld [vmem:[#allocation4 + $0xea0] sm:$0xff]
    %v2585 = vld [vmem:[#allocation4 + $0xea8] sm:$0xff]
    %v2586 = vld [vmem:[#allocation4 + $0xeb0] sm:$0xff]
    %v2587 = vld [vmem:[#allocation4 + $0xeb8] sm:$0xff]
    %v2588 = vld [vmem:[#allocation4 + $0xec0] sm:$0xff]
    %v2589 = vld [vmem:[#allocation4 + $0xec8] sm:$0xff]
    %v2590 = vld [vmem:[#allocation4 + $0xed0] sm:$0xff]
    %v2591 = vld [vmem:[#allocation4 + $0xed8] sm:$0xff]
    %v2592 = vld [vmem:[#allocation4 + $0xee0] sm:$0xff]
    %v2593 = vld [vmem:[#allocation4 + $0xee8] sm:$0xff]
    %v2594 = vld [vmem:[#allocation4 + $0xef0] sm:$0xff]
    %v2595 = vld [vmem:[#allocation4 + $0xef8] sm:$0xff]
    %v2596 = vld [vmem:[#allocation4 + $0xf00] sm:$0xff]
    %v2597 = vld [vmem:[#allocation4 + $0xf08] sm:$0xff]
    %v2598 = vld [vmem:[#allocation4 + $0xf10] sm:$0xff]
    %v2599 = vld [vmem:[#allocation4 + $0xf18] sm:$0xff]
    %v2600 = vld [vmem:[#allocation4 + $0xf20] sm:$0xff]
    %v2601 = vld [vmem:[#allocation4 + $0xf28] sm:$0xff]
    %v2602 = vld [vmem:[#allocation4 + $0xf30] sm:$0xff]
    %v2603 = vld [vmem:[#allocation4 + $0xf38] sm:$0xff]
    %v2604 = vld [vmem:[#allocation4 + $0xf40] sm:$0xff]
    %v2605 = vld [vmem:[#allocation4 + $0xf48] sm:$0xff]
    %v2606 = vld [vmem:[#allocation4 + $0xf50] sm:$0xff]
    %v2607 = vld [vmem:[#allocation4 + $0xf58] sm:$0xff]
    %v2608 = vld [vmem:[#allocation4 + $0xf60] sm:$0xff]
    %v2609 = vld [vmem:[#allocation4 + $0xf68] sm:$0xff]
    %v2610 = vld [vmem:[#allocation4 + $0xf70] sm:$0xff]
    %v2611 = vld [vmem:[#allocation4 + $0xf78] sm:$0xff]
    %v2612 = vld [vmem:[#allocation4 + $0xf80] sm:$0xff]
    %v2613 = vld [vmem:[#allocation4 + $0xf88] sm:$0xff]
    %v2614 = vld [vmem:[#allocation4 + $0xf90] sm:$0xff]
    %v2615 = vld [vmem:[#allocation4 + $0xf98] sm:$0xff]
    %v2616 = vld [vmem:[#allocation4 + $0xfa0] sm:$0xff]
    %v2617 = vld [vmem:[#allocation4 + $0xfa8] sm:$0xff]
    %v2618 = vld [vmem:[#allocation4 + $0xfb0] sm:$0xff]
    %v2619 = vld [vmem:[#allocation4 + $0xfb8] sm:$0xff]
    %v2620 = vld [vmem:[#allocation4 + $0xfc0] sm:$0xff]
    %v2621 = vld [vmem:[#allocation4 + $0xfc8] sm:$0xff]
    %v2622 = vld [vmem:[#allocation4 + $0xfd0] sm:$0xff]
    %v2623 = vld [vmem:[#allocation4 + $0xfd8] sm:$0xff]
    %v2624 = vld [vmem:[#allocation4 + $0xfe0] sm:$0xff]
    %v2625 = vld [vmem:[#allocation4 + $0xfe8] sm:$0xff]
    %v2626 = vld [vmem:[#allocation4 + $0xff0] sm:$0xff]
    %v2627 = vld [vmem:[#allocation4 + $0xff8] sm:$0xff]
    %s2628 = scalar_lea.vmem [#allocation9], 2
    %v2629 = vld [vmem:[%s2628] ss:$8 sm:$0xf]
    %v2630 = vld [vmem:[%s2628] ss:$8 sm:$0xf0]
    %v2631 = vor.u32 %v2629, %v2630
    %v2633 = vlaneseq
    %v2634 = vshrl.u32 %v2633, 7
    %v2635 = vsub.s32 0, %v2634
    %v2636 = vrot.slane %v2631, %v2635
    %v2637 = vlaneseq
    %v2638 = vshrl.u32 %v2637, 7
    %v2639 = vsub.s32 1, %v2638
    %v2640 = vrot.slane %v2631, %v2639
    %v2641 = vlaneseq
    %v2642 = vshrl.u32 %v2641, 7
    %v2643 = vsub.s32 2, %v2642
    %v2644 = vrot.slane %v2631, %v2643
    %v2645 = vlaneseq
    %v2646 = vshrl.u32 %v2645, 7
    %v2647 = vsub.s32 3, %v2646
    %v2648 = vrot.slane %v2631, %v2647
    %v2649 = vlaneseq
    %v2650 = vshrl.u32 %v2649, 7
    %v2651 = vsub.s32 4, %v2650
    %v2652 = vrot.slane %v2631, %v2651
    %v2653 = vlaneseq
    %v2654 = vshrl.u32 %v2653, 7
    %v2655 = vsub.s32 5, %v2654
    %v2656 = vrot.slane %v2631, %v2655
    %v2657 = vlaneseq
    %v2658 = vshrl.u32 %v2657, 7
    %v2659 = vsub.s32 6, %v2658
    %v2660 = vrot.slane %v2631, %v2659
    %v2661 = vlaneseq
    %v2662 = vshrl.u32 %v2661, 7
    %v2663 = vsub.s32 7, %v2662
    %v2664 = vrot.slane %v2631, %v2663
    %2673 = vmatprep.subr.bf16.mxu0 %v2117
    %2674 = vmatpush1.bf16.msra.mxu0 %v2116
    %2675 = vmatprep.subr.bf16.mxu0 %v2125
    %2676 = vmatpush1.bf16.msra.mxu0 %v2124
    %2677 = vmatprep.subr.bf16.mxu0 %v2133
    %2678 = vmatpush1.bf16.msra.mxu0 %v2132
    %2679 = vmatprep.subr.bf16.mxu0 %v2141
    %2680 = vmatpush1.bf16.msra.mxu0 %v2140
    %2681 = vmatprep.subr.bf16.mxu0 %v2149
    %2682 = vmatpush1.bf16.msra.mxu0 %v2148
    %2683 = vmatprep.subr.bf16.mxu0 %v2157
    %2684 = vmatpush1.bf16.msra.mxu0 %v2156
    %2685 = vmatprep.subr.bf16.mxu0 %v2165
    %2686 = vmatpush1.bf16.msra.mxu0 %v2164
    %2687 = vmatprep.subr.bf16.mxu0 %v2173
    %2688 = vmatpush1.bf16.msra.mxu0 %v2172
    %2689 = vmatprep.subr.bf16.mxu0 %v2181
    %2690 = vmatpush1.bf16.msra.mxu0 %v2180
    %2691 = vmatprep.subr.bf16.mxu0 %v2189
    %2692 = vmatpush1.bf16.msra.mxu0 %v2188
    %2693 = vmatprep.subr.bf16.mxu0 %v2197
    %2694 = vmatpush1.bf16.msra.mxu0 %v2196
    %2695 = vmatprep.subr.bf16.mxu0 %v2205
    %2696 = vmatpush1.bf16.msra.mxu0 %v2204
    %2697 = vmatprep.subr.bf16.mxu0 %v2213
    %2698 = vmatpush1.bf16.msra.mxu0 %v2212
    %2699 = vmatprep.subr.bf16.mxu0 %v2221
    %2700 = vmatpush1.bf16.msra.mxu0 %v2220
    %2701 = vmatprep.subr.bf16.mxu0 %v2229
    %2702 = vmatpush1.bf16.msra.mxu0 %v2228
    %2703 = vmatprep.subr.bf16.mxu0 %v2237
    %2704 = vmatpush1.bf16.msra.mxu0 %v2236
    %2705 = vmatprep.mubr.bf16.mxu0 %v2109
    %2706 = vmatmul.mubr.bf16.gmra.mrb[0].mxu0 %v2108
    %v2707 = vpop.f32.mrb[0].mxu0
    %v2708 = vadd.f32 %v2636, %v2707
    %v2709 = vpop.f32.mrb[0].mxu0
    %v2710 = vadd.f32 %v2640, %v2709
    %v2711 = vpop.f32.mrb[0].mxu0
    %v2712 = vpop.f32.mrb[0].mxu0
    %2713 = vdwg.mxu0
    %2714 = vmatprep.subr.bf16.mxu0 %v2245
    %2715 = vmatpush1.bf16.msra.mxu0 %v2244
    %2716 = vmatprep.subr.bf16.mxu0 %v2253
    %2717 = vmatpush1.bf16.msra.mxu0 %v2252
    %2718 = vmatprep.subr.bf16.mxu0 %v2261
    %2719 = vmatpush1.bf16.msra.mxu0 %v2260
    %2720 = vmatprep.subr.bf16.mxu0 %v2269
    %2721 = vmatpush1.bf16.msra.mxu0 %v2268
    %2722 = vmatprep.subr.bf16.mxu0 %v2277
    %2723 = vmatpush1.bf16.msra.mxu0 %v2276
    %2724 = vmatprep.subr.bf16.mxu0 %v2285
    %2725 = vmatpush1.bf16.msra.mxu0 %v2284
    %2726 = vmatprep.subr.bf16.mxu0 %v2293
    %2727 = vmatpush1.bf16.msra.mxu0 %v2292
    %2728 = vmatprep.subr.bf16.mxu0 %v2301
    %2729 = vmatpush1.bf16.msra.mxu0 %v2300
    %2730 = vmatprep.subr.bf16.mxu0 %v2309
    %2731 = vmatpush1.bf16.msra.mxu0 %v2308
    %2732 = vmatprep.subr.bf16.mxu0 %v2317
    %2733 = vmatpush1.bf16.msra.mxu0 %v2316
    %2734 = vmatprep.subr.bf16.mxu0 %v2325
    %2735 = vmatpush1.bf16.msra.mxu0 %v2324
    %2736 = vmatprep.subr.bf16.mxu0 %v2333
    %2737 = vmatpush1.bf16.msra.mxu0 %v2332
    %2738 = vmatprep.subr.bf16.mxu0 %v2341
    %2739 = vmatpush1.bf16.msra.mxu0 %v2340
    %2740 = vmatprep.subr.bf16.mxu0 %v2349
    %2741 = vmatpush1.bf16.msra.mxu0 %v2348
    %2742 = vmatprep.subr.bf16.mxu0 %v2357
    %2743 = vmatpush1.bf16.msra.mxu0 %v2356
    %2744 = vmatprep.subr.bf16.mxu0 %v2365
    %2745 = vmatpush1.bf16.msra.mxu0 %v2364
    %2746 = vmatprep.mubr.bf16.mxu0 %v2111
    %2747 = vmatmul.mubr.bf16.gmra.mrb[0].mxu0 %v2110
    %v2748 = vpop.f32.mrb[0].mxu0
    %v2749 = vadd.f32 %v2708, %v2748
    %v2750 = vpop.f32.mrb[0].mxu0
    %v2751 = vadd.f32 %v2710, %v2750
    %v2752 = vpop.f32.mrb[0].mxu0
    %v2753 = vpop.f32.mrb[0].mxu0
    %2754 = vdwg.mxu0
    %2755 = vmatprep.subr.bf16.mxu0 %v2373
    %2756 = vmatpush1.bf16.msra.mxu0 %v2372
    %2757 = vmatprep.subr.bf16.mxu0 %v2381
    %2758 = vmatpush1.bf16.msra.mxu0 %v2380
    %2759 = vmatprep.subr.bf16.mxu0 %v2389
    %2760 = vmatpush1.bf16.msra.mxu0 %v2388
    %2761 = vmatprep.subr.bf16.mxu0 %v2397
    %2762 = vmatpush1.bf16.msra.mxu0 %v2396
    %2763 = vmatprep.subr.bf16.mxu0 %v2405
    %2764 = vmatpush1.bf16.msra.mxu0 %v2404
    %2765 = vmatprep.subr.bf16.mxu0 %v2413
    %2766 = vmatpush1.bf16.msra.mxu0 %v2412
    %2767 = vmatprep.subr.bf16.mxu0 %v2421
    %2768 = vmatpush1.bf16.msra.mxu0 %v2420
    %2769 = vmatprep.subr.bf16.mxu0 %v2429
    %2770 = vmatpush1.bf16.msra.mxu0 %v2428
    %2771 = vmatprep.subr.bf16.mxu0 %v2437
    %2772 = vmatpush1.bf16.msra.mxu0 %v2436
    %2773 = vmatprep.subr.bf16.mxu0 %v2445
    %2774 = vmatpush1.bf16.msra.mxu0 %v2444
    %2775 = vmatprep.subr.bf16.mxu0 %v2453
    %2776 = vmatpush1.bf16.msra.mxu0 %v2452
    %2777 = vmatprep.subr.bf16.mxu0 %v2461
    %2778 = vmatpush1.bf16.msra.mxu0 %v2460
    %2779 = vmatprep.subr.bf16.mxu0 %v2469
    %2780 = vmatpush1.bf16.msra.mxu0 %v2468
    %2781 = vmatprep.subr.bf16.mxu0 %v2477
    %2782 = vmatpush1.bf16.msra.mxu0 %v2476
    %2783 = vmatprep.subr.bf16.mxu0 %v2485
    %2784 = vmatpush1.bf16.msra.mxu0 %v2484
    %2785 = vmatprep.subr.bf16.mxu0 %v2493
    %2786 = vmatpush1.bf16.msra.mxu0 %v2492
    %2787 = vmatprep.mubr.bf16.mxu0 %v2113
    %2788 = vmatmul.mubr.bf16.gmra.mrb[0].mxu0 %v2112
    %v2789 = vpop.f32.mrb[0].mxu0
    %v2790 = vadd.f32 %v2749, %v2789
    %v2791 = vpop.f32.mrb[0].mxu0
    %v2792 = vadd.f32 %v2751, %v2791
    %v2793 = vpop.f32.mrb[0].mxu0
    %v2794 = vpop.f32.mrb[0].mxu0
    %2795 = vdwg.mxu0
    %2796 = vmatprep.subr.bf16.mxu0 %v2501
    %2797 = vmatpush1.bf16.msra.mxu0 %v2500
    %2798 = vmatprep.subr.bf16.mxu0 %v2509
    %2799 = vmatpush1.bf16.msra.mxu0 %v2508
    %2800 = vmatprep.subr.bf16.mxu0 %v2517
    %2801 = vmatpush1.bf16.msra.mxu0 %v2516
    %2802 = vmatprep.subr.bf16.mxu0 %v2525
    %2803 = vmatpush1.bf16.msra.mxu0 %v2524
    %2804 = vmatprep.subr.bf16.mxu0 %v2533
    %2805 = vmatpush1.bf16.msra.mxu0 %v2532
    %2806 = vmatprep.subr.bf16.mxu0 %v2541
    %2807 = vmatpush1.bf16.msra.mxu0 %v2540
    %2808 = vmatprep.subr.bf16.mxu0 %v2549
    %2809 = vmatpush1.bf16.msra.mxu0 %v2548
    %2810 = vmatprep.subr.bf16.mxu0 %v2557
    %2811 = vmatpush1.bf16.msra.mxu0 %v2556
    %2812 = vmatprep.subr.bf16.mxu0 %v2565
    %2813 = vmatpush1.bf16.msra.mxu0 %v2564
    %2814 = vmatprep.subr.bf16.mxu0 %v2573
    %2815 = vmatpush1.bf16.msra.mxu0 %v2572
    %2816 = vmatprep.subr.bf16.mxu0 %v2581
    %2817 = vmatpush1.bf16.msra.mxu0 %v2580
    %2818 = vmatprep.subr.bf16.mxu0 %v2589
    %2819 = vmatpush1.bf16.msra.mxu0 %v2588
    %2820 = vmatprep.subr.bf16.mxu0 %v2597
    %2821 = vmatpush1.bf16.msra.mxu0 %v2596
    %2822 = vmatprep.subr.bf16.mxu0 %v2605
    %2823 = vmatpush1.bf16.msra.mxu0 %v2604
    %2824 = vmatprep.subr.bf16.mxu0 %v2613
    %2825 = vmatpush1.bf16.msra.mxu0 %v2612
    %2826 = vmatprep.subr.bf16.mxu0 %v2621
    %2827 = vmatpush1.bf16.msra.mxu0 %v2620
    %2828 = vmatprep.mubr.bf16.mxu0 %v2115
    %2829 = vmatmul.mubr.bf16.gmra.mrb[0].mxu0 %v2114
    %v2830 = vpop.f32.mrb[0].mxu0
    %v2831 = vadd.f32 %v2790, %v2830
    %v2832 = vpop.f32.mrb[0].mxu0
    %v2833 = vadd.f32 %v2792, %v2832
    %v2834 = vpop.f32.mrb[0].mxu0
    %v2835 = vpop.f32.mrb[0].mxu0
    %2836 = vdwg.mxu0
    %2837 = vmatprep.subr.bf16.mxu0 %v2119
    %2838 = vmatpush1.bf16.msra.mxu0 %v2118
    %2839 = vmatprep.subr.bf16.mxu0 %v2127
    %2840 = vmatpush1.bf16.msra.mxu0 %v2126
    %2841 = vmatprep.subr.bf16.mxu0 %v2135
    %2842 = vmatpush1.bf16.msra.mxu0 %v2134
    %2843 = vmatprep.subr.bf16.mxu0 %v2143
    %2844 = vmatpush1.bf16.msra.mxu0 %v2142
    %2845 = vmatprep.subr.bf16.mxu0 %v2151
    %2846 = vmatpush1.bf16.msra.mxu0 %v2150
    %2847 = vmatprep.subr.bf16.mxu0 %v2159
    %2848 = vmatpush1.bf16.msra.mxu0 %v2158
    %2849 = vmatprep.subr.bf16.mxu0 %v2167
    %2850 = vmatpush1.bf16.msra.mxu0 %v2166
    %2851 = vmatprep.subr.bf16.mxu0 %v2175
    %2852 = vmatpush1.bf16.msra.mxu0 %v2174
    %2853 = vmatprep.subr.bf16.mxu0 %v2183
    %2854 = vmatpush1.bf16.msra.mxu0 %v2182
    %2855 = vmatprep.subr.bf16.mxu0 %v2191
    %2856 = vmatpush1.bf16.msra.mxu0 %v2190
    %2857 = vmatprep.subr.bf16.mxu0 %v2199
    %2858 = vmatpush1.bf16.msra.mxu0 %v2198
    %2859 = vmatprep.subr.bf16.mxu0 %v2207
    %2860 = vmatpush1.bf16.msra.mxu0 %v2206
    %2861 = vmatprep.subr.bf16.mxu0 %v2215
    %2862 = vmatpush1.bf16.msra.mxu0 %v2214
    %2863 = vmatprep.subr.bf16.mxu0 %v2223
    %2864 = vmatpush1.bf16.msra.mxu0 %v2222
    %2865 = vmatprep.subr.bf16.mxu0 %v2231
    %2866 = vmatpush1.bf16.msra.mxu0 %v2230
    %2867 = vmatprep.subr.bf16.mxu0 %v2239
    %2868 = vmatpush1.bf16.msra.mxu0 %v2238
    %2869 = vmatprep.mubr.bf16.mxu0 %v2109
    %2870 = vmatmul.mubr.bf16.gmra.mrb[0].mxu0 %v2108
    %v2871 = vpop.f32.mrb[0].mxu0
    %v2872 = vadd.f32 %v2644, %v2871
    %v2873 = vpop.f32.mrb[0].mxu0
    %v2874 = vadd.f32 %v2648, %v2873
    %v2875 = vpop.f32.mrb[0].mxu0
    %v2876 = vpop.f32.mrb[0].mxu0
    %2877 = vdwg.mxu0
    %2878 = vmatprep.subr.bf16.mxu0 %v2247
    %2879 = vmatpush1.bf16.msra.mxu0 %v2246
    %2880 = vmatprep.subr.bf16.mxu0 %v2255
    %2881 = vmatpush1.bf16.msra.mxu0 %v2254
    %2882 = vmatprep.subr.bf16.mxu0 %v2263
    %2883 = vmatpush1.bf16.msra.mxu0 %v2262
    %2884 = vmatprep.subr.bf16.mxu0 %v2271
    %2885 = vmatpush1.bf16.msra.mxu0 %v2270
    %2886 = vmatprep.subr.bf16.mxu0 %v2279
    %2887 = vmatpush1.bf16.msra.mxu0 %v2278
    %2888 = vmatprep.subr.bf16.mxu0 %v2287
    %2889 = vmatpush1.bf16.msra.mxu0 %v2286
    %2890 = vmatprep.subr.bf16.mxu0 %v2295
    %2891 = vmatpush1.bf16.msra.mxu0 %v2294
    %2892 = vmatprep.subr.bf16.mxu0 %v2303
    %2893 = vmatpush1.bf16.msra.mxu0 %v2302
    %2894 = vmatprep.subr.bf16.mxu0 %v2311
    %2895 = vmatpush1.bf16.msra.mxu0 %v2310
    %2896 = vmatprep.subr.bf16.mxu0 %v2319
    %2897 = vmatpush1.bf16.msra.mxu0 %v2318
    %2898 = vmatprep.subr.bf16.mxu0 %v2327
    %2899 = vmatpush1.bf16.msra.mxu0 %v2326
    %2900 = vmatprep.subr.bf16.mxu0 %v2335
    %2901 = vmatpush1.bf16.msra.mxu0 %v2334
    %2902 = vmatprep.subr.bf16.mxu0 %v2343
    %2903 = vmatpush1.bf16.msra.mxu0 %v2342
    %2904 = vmatprep.subr.bf16.mxu0 %v2351
    %2905 = vmatpush1.bf16.msra.mxu0 %v2350
    %2906 = vmatprep.subr.bf16.mxu0 %v2359
    %2907 = vmatpush1.bf16.msra.mxu0 %v2358
    %2908 = vmatprep.subr.bf16.mxu0 %v2367
    %2909 = vmatpush1.bf16.msra.mxu0 %v2366
    %2910 = vmatprep.mubr.bf16.mxu0 %v2111
    %2911 = vmatmul.mubr.bf16.gmra.mrb[0].mxu0 %v2110
    %v2912 = vpop.f32.mrb[0].mxu0
    %v2913 = vadd.f32 %v2872, %v2912
    %v2914 = vpop.f32.mrb[0].mxu0
    %v2915 = vadd.f32 %v2874, %v2914
    %v2916 = vpop.f32.mrb[0].mxu0
    %v2917 = vpop.f32.mrb[0].mxu0
    %2918 = vdwg.mxu0
    %2919 = vmatprep.subr.bf16.mxu0 %v2375
    %2920 = vmatpush1.bf16.msra.mxu0 %v2374
    %2921 = vmatprep.subr.bf16.mxu0 %v2383
    %2922 = vmatpush1.bf16.msra.mxu0 %v2382
    %2923 = vmatprep.subr.bf16.mxu0 %v2391
    %2924 = vmatpush1.bf16.msra.mxu0 %v2390
    %2925 = vmatprep.subr.bf16.mxu0 %v2399
    %2926 = vmatpush1.bf16.msra.mxu0 %v2398
    %2927 = vmatprep.subr.bf16.mxu0 %v2407
    %2928 = vmatpush1.bf16.msra.mxu0 %v2406
    %2929 = vmatprep.subr.bf16.mxu0 %v2415
    %2930 = vmatpush1.bf16.msra.mxu0 %v2414
    %2931 = vmatprep.subr.bf16.mxu0 %v2423
    %2932 = vmatpush1.bf16.msra.mxu0 %v2422
    %2933 = vmatprep.subr.bf16.mxu0 %v2431
    %2934 = vmatpush1.bf16.msra.mxu0 %v2430
    %2935 = vmatprep.subr.bf16.mxu0 %v2439
    %2936 = vmatpush1.bf16.msra.mxu0 %v2438
    %2937 = vmatprep.subr.bf16.mxu0 %v2447
    %2938 = vmatpush1.bf16.msra.mxu0 %v2446
    %2939 = vmatprep.subr.bf16.mxu0 %v2455
    %2940 = vmatpush1.bf16.msra.mxu0 %v2454
    %2941 = vmatprep.subr.bf16.mxu0 %v2463
    %2942 = vmatpush1.bf16.msra.mxu0 %v2462
    %2943 = vmatprep.subr.bf16.mxu0 %v2471
    %2944 = vmatpush1.bf16.msra.mxu0 %v2470
    %2945 = vmatprep.subr.bf16.mxu0 %v2479
    %2946 = vmatpush1.bf16.msra.mxu0 %v2478
    %2947 = vmatprep.subr.bf16.mxu0 %v2487
    %2948 = vmatpush1.bf16.msra.mxu0 %v2486
    %2949 = vmatprep.subr.bf16.mxu0 %v2495
    %2950 = vmatpush1.bf16.msra.mxu0 %v2494
    %2951 = vmatprep.mubr.bf16.mxu0 %v2113
    %2952 = vmatmul.mubr.bf16.gmra.mrb[0].mxu0 %v2112
    %v2953 = vpop.f32.mrb[0].mxu0
    %v2954 = vadd.f32 %v2913, %v2953
    %v2955 = vpop.f32.mrb[0].mxu0
    %v2956 = vadd.f32 %v2915, %v2955
    %v2957 = vpop.f32.mrb[0].mxu0
    %v2958 = vpop.f32.mrb[0].mxu0
    %2959 = vdwg.mxu0
    %2960 = vmatprep.subr.bf16.mxu0 %v2503
    %2961 = vmatpush1.bf16.msra.mxu0 %v2502
    %2962 = vmatprep.subr.bf16.mxu0 %v2511
    %2963 = vmatpush1.bf16.msra.mxu0 %v2510
    %2964 = vmatprep.subr.bf16.mxu0 %v2519
    %2965 = vmatpush1.bf16.msra.mxu0 %v2518
    %2966 = vmatprep.subr.bf16.mxu0 %v2527
    %2967 = vmatpush1.bf16.msra.mxu0 %v2526
    %2968 = vmatprep.subr.bf16.mxu0 %v2535
    %2969 = vmatpush1.bf16.msra.mxu0 %v2534
    %2970 = vmatprep.subr.bf16.mxu0 %v2543
    %2971 = vmatpush1.bf16.msra.mxu0 %v2542
    %2972 = vmatprep.subr.bf16.mxu0 %v2551
    %2973 = vmatpush1.bf16.msra.mxu0 %v2550
    %2974 = vmatprep.subr.bf16.mxu0 %v2559
    %2975 = vmatpush1.bf16.msra.mxu0 %v2558
    %2976 = vmatprep.subr.bf16.mxu0 %v2567
    %2977 = vmatpush1.bf16.msra.mxu0 %v2566
    %2978 = vmatprep.subr.bf16.mxu0 %v2575
    %2979 = vmatpush1.bf16.msra.mxu0 %v2574
    %2980 = vmatprep.subr.bf16.mxu0 %v2583
    %2981 = vmatpush1.bf16.msra.mxu0 %v2582
    %2982 = vmatprep.subr.bf16.mxu0 %v2591
    %2983 = vmatpush1.bf16.msra.mxu0 %v2590
    %2984 = vmatprep.subr.bf16.mxu0 %v2599
    %2985 = vmatpush1.bf16.msra.mxu0 %v2598
    %2986 = vmatprep.subr.bf16.mxu0 %v2607
    %2987 = vmatpush1.bf16.msra.mxu0 %v2606
    %2988 = vmatprep.subr.bf16.mxu0 %v2615
    %2989 = vmatpush1.bf16.msra.mxu0 %v2614
    %2990 = vmatprep.subr.bf16.mxu0 %v2623
    %2991 = vmatpush1.bf16.msra.mxu0 %v2622
    %2992 = vmatprep.mubr.bf16.mxu0 %v2115
    %2993 = vmatmul.mubr.bf16.gmra.mrb[0].mxu0 %v2114
    %v2994 = vpop.f32.mrb[0].mxu0
    %v2995 = vadd.f32 %v2954, %v2994
    %v2996 = vpop.f32.mrb[0].mxu0
    %v2997 = vadd.f32 %v2956, %v2996
    %v2998 = vpop.f32.mrb[0].mxu0
    %v2999 = vpop.f32.mrb[0].mxu0
    %3000 = vdwg.mxu0
    %3001 = vmatprep.subr.bf16.mxu0 %v2121
    %3002 = vmatpush1.bf16.msra.mxu0 %v2120
    %3003 = vmatprep.subr.bf16.mxu0 %v2129
    %3004 = vmatpush1.bf16.msra.mxu0 %v2128
    %3005 = vmatprep.subr.bf16.mxu0 %v2137
    %3006 = vmatpush1.bf16.msra.mxu0 %v2136
    %3007 = vmatprep.subr.bf16.mxu0 %v2145
    %3008 = vmatpush1.bf16.msra.mxu0 %v2144
    %3009 = vmatprep.subr.bf16.mxu0 %v2153
    %3010 = vmatpush1.bf16.msra.mxu0 %v2152
    %3011 = vmatprep.subr.bf16.mxu0 %v2161
    %3012 = vmatpush1.bf16.msra.mxu0 %v2160
    %3013 = vmatprep.subr.bf16.mxu0 %v2169
    %3014 = vmatpush1.bf16.msra.mxu0 %v2168
    %3015 = vmatprep.subr.bf16.mxu0 %v2177
    %3016 = vmatpush1.bf16.msra.mxu0 %v2176
    %3017 = vmatprep.subr.bf16.mxu0 %v2185
    %3018 = vmatpush1.bf16.msra.mxu0 %v2184
    %3019 = vmatprep.subr.bf16.mxu0 %v2193
    %3020 = vmatpush1.bf16.msra.mxu0 %v2192
    %3021 = vmatprep.subr.bf16.mxu0 %v2201
    %3022 = vmatpush1.bf16.msra.mxu0 %v2200
    %3023 = vmatprep.subr.bf16.mxu0 %v2209
    %3024 = vmatpush1.bf16.msra.mxu0 %v2208
    %3025 = vmatprep.subr.bf16.mxu0 %v2217
    %3026 = vmatpush1.bf16.msra.mxu0 %v2216
    %3027 = vmatprep.subr.bf16.mxu0 %v2225
    %3028 = vmatpush1.bf16.msra.mxu0 %v2224
    %3029 = vmatprep.subr.bf16.mxu0 %v2233
    %3030 = vmatpush1.bf16.msra.mxu0 %v2232
    %3031 = vmatprep.subr.bf16.mxu0 %v2241
    %3032 = vmatpush1.bf16.msra.mxu0 %v2240
    %3033 = vmatprep.mubr.bf16.mxu0 %v2109
    %3034 = vmatmul.mubr.bf16.gmra.mrb[0].mxu0 %v2108
    %v3035 = vpop.f32.mrb[0].mxu0
    %v3036 = vadd.f32 %v2652, %v3035
    %v3037 = vpop.f32.mrb[0].mxu0
    %v3038 = vadd.f32 %v2656, %v3037
    %v3039 = vpop.f32.mrb[0].mxu0
    %v3040 = vpop.f32.mrb[0].mxu0
    %3041 = vdwg.mxu0
    %3042 = vmatprep.subr.bf16.mxu0 %v2249
    %3043 = vmatpush1.bf16.msra.mxu0 %v2248
    %3044 = vmatprep.subr.bf16.mxu0 %v2257
    %3045 = vmatpush1.bf16.msra.mxu0 %v2256
    %3046 = vmatprep.subr.bf16.mxu0 %v2265
    %3047 = vmatpush1.bf16.msra.mxu0 %v2264
    %3048 = vmatprep.subr.bf16.mxu0 %v2273
    %3049 = vmatpush1.bf16.msra.mxu0 %v2272
    %3050 = vmatprep.subr.bf16.mxu0 %v2281
    %3051 = vmatpush1.bf16.msra.mxu0 %v2280
    %3052 = vmatprep.subr.bf16.mxu0 %v2289
    %3053 = vmatpush1.bf16.msra.mxu0 %v2288
    %3054 = vmatprep.subr.bf16.mxu0 %v2297
    %3055 = vmatpush1.bf16.msra.mxu0 %v2296
    %3056 = vmatprep.subr.bf16.mxu0 %v2305
    %3057 = vmatpush1.bf16.msra.mxu0 %v2304
    %3058 = vmatprep.subr.bf16.mxu0 %v2313
    %3059 = vmatpush1.bf16.msra.mxu0 %v2312
    %3060 = vmatprep.subr.bf16.mxu0 %v2321
    %3061 = vmatpush1.bf16.msra.mxu0 %v2320
    %3062 = vmatprep.subr.bf16.mxu0 %v2329
    %3063 = vmatpush1.bf16.msra.mxu0 %v2328
    %3064 = vmatprep.subr.bf16.mxu0 %v2337
    %3065 = vmatpush1.bf16.msra.mxu0 %v2336
    %3066 = vmatprep.subr.bf16.mxu0 %v2345
    %3067 = vmatpush1.bf16.msra.mxu0 %v2344
    %3068 = vmatprep.subr.bf16.mxu0 %v2353
    %3069 = vmatpush1.bf16.msra.mxu0 %v2352
    %3070 = vmatprep.subr.bf16.mxu0 %v2361
    %3071 = vmatpush1.bf16.msra.mxu0 %v2360
    %3072 = vmatprep.subr.bf16.mxu0 %v2369
    %3073 = vmatpush1.bf16.msra.mxu0 %v2368
    %3074 = vmatprep.mubr.bf16.mxu0 %v2111
    %3075 = vmatmul.mubr.bf16.gmra.mrb[0].mxu0 %v2110
    %v3076 = vpop.f32.mrb[0].mxu0
    %v3077 = vadd.f32 %v3036, %v3076
    %v3078 = vpop.f32.mrb[0].mxu0
    %v3079 = vadd.f32 %v3038, %v3078
    %v3080 = vpop.f32.mrb[0].mxu0
    %v3081 = vpop.f32.mrb[0].mxu0
    %3082 = vdwg.mxu0
    %3083 = vmatprep.subr.bf16.mxu0 %v2377
    %3084 = vmatpush1.bf16.msra.mxu0 %v2376
    %3085 = vmatprep.subr.bf16.mxu0 %v2385
    %3086 = vmatpush1.bf16.msra.mxu0 %v2384
    %3087 = vmatprep.subr.bf16.mxu0 %v2393
    %3088 = vmatpush1.bf16.msra.mxu0 %v2392
    %3089 = vmatprep.subr.bf16.mxu0 %v2401
    %3090 = vmatpush1.bf16.msra.mxu0 %v2400
    %3091 = vmatprep.subr.bf16.mxu0 %v2409
    %3092 = vmatpush1.bf16.msra.mxu0 %v2408
    %3093 = vmatprep.subr.bf16.mxu0 %v2417
    %3094 = vmatpush1.bf16.msra.mxu0 %v2416
    %3095 = vmatprep.subr.bf16.mxu0 %v2425
    %3096 = vmatpush1.bf16.msra.mxu0 %v2424
    %3097 = vmatprep.subr.bf16.mxu0 %v2433
    %3098 = vmatpush1.bf16.msra.mxu0 %v2432
    %3099 = vmatprep.subr.bf16.mxu0 %v2441
    %3100 = vmatpush1.bf16.msra.mxu0 %v2440
    %3101 = vmatprep.subr.bf16.mxu0 %v2449
    %3102 = vmatpush1.bf16.msra.mxu0 %v2448
    %3103 = vmatprep.subr.bf16.mxu0 %v2457
    %3104 = vmatpush1.bf16.msra.mxu0 %v2456
    %3105 = vmatprep.subr.bf16.mxu0 %v2465
    %3106 = vmatpush1.bf16.msra.mxu0 %v2464
    %3107 = vmatprep.subr.bf16.mxu0 %v2473
    %3108 = vmatpush1.bf16.msra.mxu0 %v2472
    %3109 = vmatprep.subr.bf16.mxu0 %v2481
    %3110 = vmatpush1.bf16.msra.mxu0 %v2480
    %3111 = vmatprep.subr.bf16.mxu0 %v2489
    %3112 = vmatpush1.bf16.msra.mxu0 %v2488
    %3113 = vmatprep.subr.bf16.mxu0 %v2497
    %3114 = vmatpush1.bf16.msra.mxu0 %v2496
    %3115 = vmatprep.mubr.bf16.mxu0 %v2113
    %3116 = vmatmul.mubr.bf16.gmra.mrb[0].mxu0 %v2112
    %v3117 = vpop.f32.mrb[0].mxu0
    %v3118 = vadd.f32 %v3077, %v3117
    %v3119 = vpop.f32.mrb[0].mxu0
    %v3120 = vadd.f32 %v3079, %v3119
    %v3121 = vpop.f32.mrb[0].mxu0
    %v3122 = vpop.f32.mrb[0].mxu0
    %3123 = vdwg.mxu0
    %3124 = vmatprep.subr.bf16.mxu0 %v2505
    %3125 = vmatpush1.bf16.msra.mxu0 %v2504
    %3126 = vmatprep.subr.bf16.mxu0 %v2513
    %3127 = vmatpush1.bf16.msra.mxu0 %v2512
    %3128 = vmatprep.subr.bf16.mxu0 %v2521
    %3129 = vmatpush1.bf16.msra.mxu0 %v2520
    %3130 = vmatprep.subr.bf16.mxu0 %v2529
    %3131 = vmatpush1.bf16.msra.mxu0 %v2528
    %3132 = vmatprep.subr.bf16.mxu0 %v2537
    %3133 = vmatpush1.bf16.msra.mxu0 %v2536
    %3134 = vmatprep.subr.bf16.mxu0 %v2545
    %3135 = vmatpush1.bf16.msra.mxu0 %v2544
    %3136 = vmatprep.subr.bf16.mxu0 %v2553
    %3137 = vmatpush1.bf16.msra.mxu0 %v2552
    %3138 = vmatprep.subr.bf16.mxu0 %v2561
    %3139 = vmatpush1.bf16.msra.mxu0 %v2560
    %3140 = vmatprep.subr.bf16.mxu0 %v2569
    %3141 = vmatpush1.bf16.msra.mxu0 %v2568
    %3142 = vmatprep.subr.bf16.mxu0 %v2577
    %3143 = vmatpush1.bf16.msra.mxu0 %v2576
    %3144 = vmatprep.subr.bf16.mxu0 %v2585
    %3145 = vmatpush1.bf16.msra.mxu0 %v2584
    %3146 = vmatprep.subr.bf16.mxu0 %v2593
    %3147 = vmatpush1.bf16.msra.mxu0 %v2592
    %3148 = vmatprep.subr.bf16.mxu0 %v2601
    %3149 = vmatpush1.bf16.msra.mxu0 %v2600
    %3150 = vmatprep.subr.bf16.mxu0 %v2609
    %3151 = vmatpush1.bf16.msra.mxu0 %v2608
    %3152 = vmatprep.subr.bf16.mxu0 %v2617
    %3153 = vmatpush1.bf16.msra.mxu0 %v2616
    %3154 = vmatprep.subr.bf16.mxu0 %v2625
    %3155 = vmatpush1.bf16.msra.mxu0 %v2624
    %3156 = vmatprep.mubr.bf16.mxu0 %v2115
    %3157 = vmatmul.mubr.bf16.gmra.mrb[0].mxu0 %v2114
    %v3158 = vpop.f32.mrb[0].mxu0
    %v3159 = vadd.f32 %v3118, %v3158
    %v3160 = vpop.f32.mrb[0].mxu0
    %v3161 = vadd.f32 %v3120, %v3160
    %v3162 = vpop.f32.mrb[0].mxu0
    %v3163 = vpop.f32.mrb[0].mxu0
    %3164 = vdwg.mxu0
    %3165 = vmatprep.subr.bf16.mxu0 %v2123
    %3166 = vmatpush1.bf16.msra.mxu0 %v2122
    %3167 = vmatprep.subr.bf16.mxu0 %v2131
    %3168 = vmatpush1.bf16.msra.mxu0 %v2130
    %3169 = vmatprep.subr.bf16.mxu0 %v2139
    %3170 = vmatpush1.bf16.msra.mxu0 %v2138
    %3171 = vmatprep.subr.bf16.mxu0 %v2147
    %3172 = vmatpush1.bf16.msra.mxu0 %v2146
    %3173 = vmatprep.subr.bf16.mxu0 %v2155
    %3174 = vmatpush1.bf16.msra.mxu0 %v2154
    %3175 = vmatprep.subr.bf16.mxu0 %v2163
    %3176 = vmatpush1.bf16.msra.mxu0 %v2162
    %3177 = vmatprep.subr.bf16.mxu0 %v2171
    %3178 = vmatpush1.bf16.msra.mxu0 %v2170
    %3179 = vmatprep.subr.bf16.mxu0 %v2179
    %3180 = vmatpush1.bf16.msra.mxu0 %v2178
    %3181 = vmatprep.subr.bf16.mxu0 %v2187
    %3182 = vmatpush1.bf16.msra.mxu0 %v2186
    %3183 = vmatprep.subr.bf16.mxu0 %v2195
    %3184 = vmatpush1.bf16.msra.mxu0 %v2194
    %3185 = vmatprep.subr.bf16.mxu0 %v2203
    %3186 = vmatpush1.bf16.msra.mxu0 %v2202
    %3187 = vmatprep.subr.bf16.mxu0 %v2211
    %3188 = vmatpush1.bf16.msra.mxu0 %v2210
    %3189 = vmatprep.subr.bf16.mxu0 %v2219
    %3190 = vmatpush1.bf16.msra.mxu0 %v2218
    %3191 = vmatprep.subr.bf16.mxu0 %v2227
    %3192 = vmatpush1.bf16.msra.mxu0 %v2226
    %3193 = vmatprep.subr.bf16.mxu0 %v2235
    %3194 = vmatpush1.bf16.msra.mxu0 %v2234
    %3195 = vmatprep.subr.bf16.mxu0 %v2243
    %3196 = vmatpush1.bf16.msra.mxu0 %v2242
    %3197 = vmatprep.mubr.bf16.mxu0 %v2109
    %3198 = vmatmul.mubr.bf16.gmra.mrb[0].mxu0 %v2108
    %v3199 = vpop.f32.mrb[0].mxu0
    %v3200 = vadd.f32 %v2660, %v3199
    %v3201 = vpop.f32.mrb[0].mxu0
    %v3202 = vadd.f32 %v2664, %v3201
    %v3203 = vpop.f32.mrb[0].mxu0
    %v3204 = vpop.f32.mrb[0].mxu0
    %3205 = vdwg.mxu0
    %3206 = vmatprep.subr.bf16.mxu0 %v2251
    %3207 = vmatpush1.bf16.msra.mxu0 %v2250
    %3208 = vmatprep.subr.bf16.mxu0 %v2259
    %3209 = vmatpush1.bf16.msra.mxu0 %v2258
    %3210 = vmatprep.subr.bf16.mxu0 %v2267
    %3211 = vmatpush1.bf16.msra.mxu0 %v2266
    %3212 = vmatprep.subr.bf16.mxu0 %v2275
    %3213 = vmatpush1.bf16.msra.mxu0 %v2274
    %3214 = vmatprep.subr.bf16.mxu0 %v2283
    %3215 = vmatpush1.bf16.msra.mxu0 %v2282
    %3216 = vmatprep.subr.bf16.mxu0 %v2291
    %3217 = vmatpush1.bf16.msra.mxu0 %v2290
    %3218 = vmatprep.subr.bf16.mxu0 %v2299
    %3219 = vmatpush1.bf16.msra.mxu0 %v2298
    %3220 = vmatprep.subr.bf16.mxu0 %v2307
    %3221 = vmatpush1.bf16.msra.mxu0 %v2306
    %3222 = vmatprep.subr.bf16.mxu0 %v2315
    %3223 = vmatpush1.bf16.msra.mxu0 %v2314
    %3224 = vmatprep.subr.bf16.mxu0 %v2323
    %3225 = vmatpush1.bf16.msra.mxu0 %v2322
    %3226 = vmatprep.subr.bf16.mxu0 %v2331
    %3227 = vmatpush1.bf16.msra.mxu0 %v2330
    %3228 = vmatprep.subr.bf16.mxu0 %v2339
    %3229 = vmatpush1.bf16.msra.mxu0 %v2338
    %3230 = vmatprep.subr.bf16.mxu0 %v2347
    %3231 = vmatpush1.bf16.msra.mxu0 %v2346
    %3232 = vmatprep.subr.bf16.mxu0 %v2355
    %3233 = vmatpush1.bf16.msra.mxu0 %v2354
    %3234 = vmatprep.subr.bf16.mxu0 %v2363
    %3235 = vmatpush1.bf16.msra.mxu0 %v2362
    %3236 = vmatprep.subr.bf16.mxu0 %v2371
    %3237 = vmatpush1.bf16.msra.mxu0 %v2370
    %3238 = vmatprep.mubr.bf16.mxu0 %v2111
    %3239 = vmatmul.mubr.bf16.gmra.mrb[0].mxu0 %v2110
    %v3240 = vpop.f32.mrb[0].mxu0
    %v3241 = vadd.f32 %v3200, %v3240
    %v3242 = vpop.f32.mrb[0].mxu0
    %v3243 = vadd.f32 %v3202, %v3242
    %v3244 = vpop.f32.mrb[0].mxu0
    %v3245 = vpop.f32.mrb[0].mxu0
    %3246 = vdwg.mxu0
    %3247 = vmatprep.subr.bf16.mxu0 %v2379
    %3248 = vmatpush1.bf16.msra.mxu0 %v2378
    %3249 = vmatprep.subr.bf16.mxu0 %v2387
    %3250 = vmatpush1.bf16.msra.mxu0 %v2386
    %3251 = vmatprep.subr.bf16.mxu0 %v2395
    %3252 = vmatpush1.bf16.msra.mxu0 %v2394
    %3253 = vmatprep.subr.bf16.mxu0 %v2403
    %3254 = vmatpush1.bf16.msra.mxu0 %v2402
    %3255 = vmatprep.subr.bf16.mxu0 %v2411
    %3256 = vmatpush1.bf16.msra.mxu0 %v2410
    %3257 = vmatprep.subr.bf16.mxu0 %v2419
    %3258 = vmatpush1.bf16.msra.mxu0 %v2418
    %3259 = vmatprep.subr.bf16.mxu0 %v2427
    %3260 = vmatpush1.bf16.msra.mxu0 %v2426
    %3261 = vmatprep.subr.bf16.mxu0 %v2435
    %3262 = vmatpush1.bf16.msra.mxu0 %v2434
    %3263 = vmatprep.subr.bf16.mxu0 %v2443
    %3264 = vmatpush1.bf16.msra.mxu0 %v2442
    %3265 = vmatprep.subr.bf16.mxu0 %v2451
    %3266 = vmatpush1.bf16.msra.mxu0 %v2450
    %3267 = vmatprep.subr.bf16.mxu0 %v2459
    %3268 = vmatpush1.bf16.msra.mxu0 %v2458
    %3269 = vmatprep.subr.bf16.mxu0 %v2467
    %3270 = vmatpush1.bf16.msra.mxu0 %v2466
    %3271 = vmatprep.subr.bf16.mxu0 %v2475
    %3272 = vmatpush1.bf16.msra.mxu0 %v2474
    %3273 = vmatprep.subr.bf16.mxu0 %v2483
    %3274 = vmatpush1.bf16.msra.mxu0 %v2482
    %3275 = vmatprep.subr.bf16.mxu0 %v2491
    %3276 = vmatpush1.bf16.msra.mxu0 %v2490
    %3277 = vmatprep.subr.bf16.mxu0 %v2499
    %3278 = vmatpush1.bf16.msra.mxu0 %v2498
    %3279 = vmatprep.mubr.bf16.mxu0 %v2113
    %3280 = vmatmul.mubr.bf16.gmra.mrb[0].mxu0 %v2112
    %v3281 = vpop.f32.mrb[0].mxu0
    %v3282 = vadd.f32 %v3241, %v3281
    %v3283 = vpop.f32.mrb[0].mxu0
    %v3284 = vadd.f32 %v3243, %v3283
    %v3285 = vpop.f32.mrb[0].mxu0
    %v3286 = vpop.f32.mrb[0].mxu0
    %3287 = vdwg.mxu0
    %3288 = vmatprep.subr.bf16.mxu0 %v2507
    %3289 = vmatpush1.bf16.msra.mxu0 %v2506
    %3290 = vmatprep.subr.bf16.mxu0 %v2515
    %3291 = vmatpush1.bf16.msra.mxu0 %v2514
    %3292 = vmatprep.subr.bf16.mxu0 %v2523
    %3293 = vmatpush1.bf16.msra.mxu0 %v2522
    %3294 = vmatprep.subr.bf16.mxu0 %v2531
    %3295 = vmatpush1.bf16.msra.mxu0 %v2530
    %3296 = vmatprep.subr.bf16.mxu0 %v2539
    %3297 = vmatpush1.bf16.msra.mxu0 %v2538
    %3298 = vmatprep.subr.bf16.mxu0 %v2547
    %3299 = vmatpush1.bf16.msra.mxu0 %v2546
    %3300 = vmatprep.subr.bf16.mxu0 %v2555
    %3301 = vmatpush1.bf16.msra.mxu0 %v2554
    %3302 = vmatprep.subr.bf16.mxu0 %v2563
    %3303 = vmatpush1.bf16.msra.mxu0 %v2562
    %3304 = vmatprep.subr.bf16.mxu0 %v2571
    %3305 = vmatpush1.bf16.msra.mxu0 %v2570
    %3306 = vmatprep.subr.bf16.mxu0 %v2579
    %3307 = vmatpush1.bf16.msra.mxu0 %v2578
    %3308 = vmatprep.subr.bf16.mxu0 %v2587
    %3309 = vmatpush1.bf16.msra.mxu0 %v2586
    %3310 = vmatprep.subr.bf16.mxu0 %v2595
    %3311 = vmatpush1.bf16.msra.mxu0 %v2594
    %3312 = vmatprep.subr.bf16.mxu0 %v2603
    %3313 = vmatpush1.bf16.msra.mxu0 %v2602
    %3314 = vmatprep.subr.bf16.mxu0 %v2611
    %3315 = vmatpush1.bf16.msra.mxu0 %v2610
    %3316 = vmatprep.subr.bf16.mxu0 %v2619
    %3317 = vmatpush1.bf16.msra.mxu0 %v2618
    %3318 = vmatprep.subr.bf16.mxu0 %v2627
    %3319 = vmatpush1.bf16.msra.mxu0 %v2626
    %3320 = vmatprep.mubr.bf16.mxu0 %v2115
    %3321 = vmatmul.mubr.bf16.gmra.mrb[0].mxu0 %v2114
    %v3322 = vpop.f32.mrb[0].mxu0
    %v3323 = vadd.f32 %v3282, %v3322
    %v3324 = vpop.f32.mrb[0].mxu0
    %v3325 = vadd.f32 %v3284, %v3324
    %v3326 = vpop.f32.mrb[0].mxu0
    %v3327 = vpop.f32.mrb[0].mxu0
    %3328 = vdwg.mxu0
    %v3329 = vmax.f32 %v2831, 0.0
    %v3330 = vmax.f32 %v2833, 0.0
    %v3331 = vmax.f32 %v2995, 0.0
    %v3332 = vmax.f32 %v2997, 0.0
    %v3333 = vmax.f32 %v3159, 0.0
    %v3334 = vmax.f32 %v3161, 0.0
    %v3335 = vmax.f32 %v3323, 0.0
    %v3336 = vmax.f32 %v3325, 0.0
    %s3337 = sshll.u32 %s874, 4
    %3338 = dma.done %s135, %s3337
    %v3339 = vpack.c.bf16 %v3329, %v3329
    %v3340 = vpack.c.bf16 %v3330, %v3330
    %v3341 = vpack.c.bf16 %v3331, %v3331
    %v3342 = vpack.c.bf16 %v3332, %v3332
    %v3343 = vpack.c.bf16 %v3333, %v3333
    %v3344 = vpack.c.bf16 %v3334, %v3334
    %v3345 = vpack.c.bf16 %v3335, %v3335
    %v3346 = vpack.c.bf16 %v3336, %v3336
    %v3347 = vld [vmem:[#allocation5] sm:$0xff]
    %v3348 = vld [vmem:[#allocation5 + $0x8] sm:$0xff]
    %v3349 = vld [vmem:[#allocation5 + $0x10] sm:$0xff]
    %v3350 = vld [vmem:[#allocation5 + $0x18] sm:$0xff]
    %v3351 = vld [vmem:[#allocation5 + $0x20] sm:$0xff]
    %v3352 = vld [vmem:[#allocation5 + $0x28] sm:$0xff]
    %v3353 = vld [vmem:[#allocation5 + $0x30] sm:$0xff]
    %v3354 = vld [vmem:[#allocation5 + $0x38] sm:$0xff]
    %v3355 = vld [vmem:[#allocation5 + $0x40] sm:$0xff]
    %v3356 = vld [vmem:[#allocation5 + $0x48] sm:$0xff]
    %v3357 = vld [vmem:[#allocation5 + $0x50] sm:$0xff]
    %v3358 = vld [vmem:[#allocation5 + $0x58] sm:$0xff]
    %v3359 = vld [vmem:[#allocation5 + $0x60] sm:$0xff]
    %v3360 = vld [vmem:[#allocation5 + $0x68] sm:$0xff]
    %v3361 = vld [vmem:[#allocation5 + $0x70] sm:$0xff]
    %v3362 = vld [vmem:[#allocation5 + $0x78] sm:$0xff]
    %v3363 = vld [vmem:[#allocation5 + $0x80] sm:$0xff]
    %v3364 = vld [vmem:[#allocation5 + $0x88] sm:$0xff]
    %v3365 = vld [vmem:[#allocation5 + $0x90] sm:$0xff]
    %v3366 = vld [vmem:[#allocation5 + $0x98] sm:$0xff]
    %v3367 = vld [vmem:[#allocation5 + $0xa0] sm:$0xff]
    %v3368 = vld [vmem:[#allocation5 + $0xa8] sm:$0xff]
    %v3369 = vld [vmem:[#allocation5 + $0xb0] sm:$0xff]
    %v3370 = vld [vmem:[#allocation5 + $0xb8] sm:$0xff]
    %v3371 = vld [vmem:[#allocation5 + $0xc0] sm:$0xff]
    %v3372 = vld [vmem:[#allocation5 + $0xc8] sm:$0xff]
    %v3373 = vld [vmem:[#allocation5 + $0xd0] sm:$0xff]
    %v3374 = vld [vmem:[#allocation5 + $0xd8] sm:$0xff]
    %v3375 = vld [vmem:[#allocation5 + $0xe0] sm:$0xff]
    %v3376 = vld [vmem:[#allocation5 + $0xe8] sm:$0xff]
    %v3377 = vld [vmem:[#allocation5 + $0xf0] sm:$0xff]
    %v3378 = vld [vmem:[#allocation5 + $0xf8] sm:$0xff]
    %v3379 = vld [vmem:[#allocation5 + $0x100] sm:$0xff]
    %v3380 = vld [vmem:[#allocation5 + $0x108] sm:$0xff]
    %v3381 = vld [vmem:[#allocation5 + $0x110] sm:$0xff]
    %v3382 = vld [vmem:[#allocation5 + $0x118] sm:$0xff]
    %v3383 = vld [vmem:[#allocation5 + $0x120] sm:$0xff]
    %v3384 = vld [vmem:[#allocation5 + $0x128] sm:$0xff]
    %v3385 = vld [vmem:[#allocation5 + $0x130] sm:$0xff]
    %v3386 = vld [vmem:[#allocation5 + $0x138] sm:$0xff]
    %v3387 = vld [vmem:[#allocation5 + $0x140] sm:$0xff]
    %v3388 = vld [vmem:[#allocation5 + $0x148] sm:$0xff]
    %v3389 = vld [vmem:[#allocation5 + $0x150] sm:$0xff]
    %v3390 = vld [vmem:[#allocation5 + $0x158] sm:$0xff]
    %v3391 = vld [vmem:[#allocation5 + $0x160] sm:$0xff]
    %v3392 = vld [vmem:[#allocation5 + $0x168] sm:$0xff]
    %v3393 = vld [vmem:[#allocation5 + $0x170] sm:$0xff]
    %v3394 = vld [vmem:[#allocation5 + $0x178] sm:$0xff]
    %v3395 = vld [vmem:[#allocation5 + $0x180] sm:$0xff]
    %v3396 = vld [vmem:[#allocation5 + $0x188] sm:$0xff]
    %v3397 = vld [vmem:[#allocation5 + $0x190] sm:$0xff]
    %v3398 = vld [vmem:[#allocation5 + $0x198] sm:$0xff]
    %v3399 = vld [vmem:[#allocation5 + $0x1a0] sm:$0xff]
    %v3400 = vld [vmem:[#allocation5 + $0x1a8] sm:$0xff]
    %v3401 = vld [vmem:[#allocation5 + $0x1b0] sm:$0xff]
    %v3402 = vld [vmem:[#allocation5 + $0x1b8] sm:$0xff]
    %v3403 = vld [vmem:[#allocation5 + $0x1c0] sm:$0xff]
    %v3404 = vld [vmem:[#allocation5 + $0x1c8] sm:$0xff]
    %v3405 = vld [vmem:[#allocation5 + $0x1d0] sm:$0xff]
    %v3406 = vld [vmem:[#allocation5 + $0x1d8] sm:$0xff]
    %v3407 = vld [vmem:[#allocation5 + $0x1e0] sm:$0xff]
    %v3408 = vld [vmem:[#allocation5 + $0x1e8] sm:$0xff]
    %v3409 = vld [vmem:[#allocation5 + $0x1f0] sm:$0xff]
    %v3410 = vld [vmem:[#allocation5 + $0x1f8] sm:$0xff]
    %v3411 = vld [vmem:[#allocation5 + $0x200] sm:$0xff]
    %v3412 = vld [vmem:[#allocation5 + $0x208] sm:$0xff]
    %v3413 = vld [vmem:[#allocation5 + $0x210] sm:$0xff]
    %v3414 = vld [vmem:[#allocation5 + $0x218] sm:$0xff]
    %v3415 = vld [vmem:[#allocation5 + $0x220] sm:$0xff]
    %v3416 = vld [vmem:[#allocation5 + $0x228] sm:$0xff]
    %v3417 = vld [vmem:[#allocation5 + $0x230] sm:$0xff]
    %v3418 = vld [vmem:[#allocation5 + $0x238] sm:$0xff]
    %v3419 = vld [vmem:[#allocation5 + $0x240] sm:$0xff]
    %v3420 = vld [vmem:[#allocation5 + $0x248] sm:$0xff]
    %v3421 = vld [vmem:[#allocation5 + $0x250] sm:$0xff]
    %v3422 = vld [vmem:[#allocation5 + $0x258] sm:$0xff]
    %v3423 = vld [vmem:[#allocation5 + $0x260] sm:$0xff]
    %v3424 = vld [vmem:[#allocation5 + $0x268] sm:$0xff]
    %v3425 = vld [vmem:[#allocation5 + $0x270] sm:$0xff]
    %v3426 = vld [vmem:[#allocation5 + $0x278] sm:$0xff]
    %v3427 = vld [vmem:[#allocation5 + $0x280] sm:$0xff]
    %v3428 = vld [vmem:[#allocation5 + $0x288] sm:$0xff]
    %v3429 = vld [vmem:[#allocation5 + $0x290] sm:$0xff]
    %v3430 = vld [vmem:[#allocation5 + $0x298] sm:$0xff]
    %v3431 = vld [vmem:[#allocation5 + $0x2a0] sm:$0xff]
    %v3432 = vld [vmem:[#allocation5 + $0x2a8] sm:$0xff]
    %v3433 = vld [vmem:[#allocation5 + $0x2b0] sm:$0xff]
    %v3434 = vld [vmem:[#allocation5 + $0x2b8] sm:$0xff]
    %v3435 = vld [vmem:[#allocation5 + $0x2c0] sm:$0xff]
    %v3436 = vld [vmem:[#allocation5 + $0x2c8] sm:$0xff]
    %v3437 = vld [vmem:[#allocation5 + $0x2d0] sm:$0xff]
    %v3438 = vld [vmem:[#allocation5 + $0x2d8] sm:$0xff]
    %v3439 = vld [vmem:[#allocation5 + $0x2e0] sm:$0xff]
    %v3440 = vld [vmem:[#allocation5 + $0x2e8] sm:$0xff]
    %v3441 = vld [vmem:[#allocation5 + $0x2f0] sm:$0xff]
    %v3442 = vld [vmem:[#allocation5 + $0x2f8] sm:$0xff]
    %v3443 = vld [vmem:[#allocation5 + $0x300] sm:$0xff]
    %v3444 = vld [vmem:[#allocation5 + $0x308] sm:$0xff]
    %v3445 = vld [vmem:[#allocation5 + $0x310] sm:$0xff]
    %v3446 = vld [vmem:[#allocation5 + $0x318] sm:$0xff]
    %v3447 = vld [vmem:[#allocation5 + $0x320] sm:$0xff]
    %v3448 = vld [vmem:[#allocation5 + $0x328] sm:$0xff]
    %v3449 = vld [vmem:[#allocation5 + $0x330] sm:$0xff]
    %v3450 = vld [vmem:[#allocation5 + $0x338] sm:$0xff]
    %v3451 = vld [vmem:[#allocation5 + $0x340] sm:$0xff]
    %v3452 = vld [vmem:[#allocation5 + $0x348] sm:$0xff]
    %v3453 = vld [vmem:[#allocation5 + $0x350] sm:$0xff]
    %v3454 = vld [vmem:[#allocation5 + $0x358] sm:$0xff]
    %v3455 = vld [vmem:[#allocation5 + $0x360] sm:$0xff]
    %v3456 = vld [vmem:[#allocation5 + $0x368] sm:$0xff]
    %v3457 = vld [vmem:[#allocation5 + $0x370] sm:$0xff]
    %v3458 = vld [vmem:[#allocation5 + $0x378] sm:$0xff]
    %v3459 = vld [vmem:[#allocation5 + $0x380] sm:$0xff]
    %v3460 = vld [vmem:[#allocation5 + $0x388] sm:$0xff]
    %v3461 = vld [vmem:[#allocation5 + $0x390] sm:$0xff]
    %v3462 = vld [vmem:[#allocation5 + $0x398] sm:$0xff]
    %v3463 = vld [vmem:[#allocation5 + $0x3a0] sm:$0xff]
    %v3464 = vld [vmem:[#allocation5 + $0x3a8] sm:$0xff]
    %v3465 = vld [vmem:[#allocation5 + $0x3b0] sm:$0xff]
    %v3466 = vld [vmem:[#allocation5 + $0x3b8] sm:$0xff]
    %v3467 = vld [vmem:[#allocation5 + $0x3c0] sm:$0xff]
    %v3468 = vld [vmem:[#allocation5 + $0x3c8] sm:$0xff]
    %v3469 = vld [vmem:[#allocation5 + $0x3d0] sm:$0xff]
    %v3470 = vld [vmem:[#allocation5 + $0x3d8] sm:$0xff]
    %v3471 = vld [vmem:[#allocation5 + $0x3e0] sm:$0xff]
    %v3472 = vld [vmem:[#allocation5 + $0x3e8] sm:$0xff]
    %v3473 = vld [vmem:[#allocation5 + $0x3f0] sm:$0xff]
    %v3474 = vld [vmem:[#allocation5 + $0x3f8] sm:$0xff]
    %v3475 = vld [vmem:[#allocation5 + $0x400] sm:$0xff]
    %v3476 = vld [vmem:[#allocation5 + $0x408] sm:$0xff]
    %v3477 = vld [vmem:[#allocation5 + $0x410] sm:$0xff]
    %v3478 = vld [vmem:[#allocation5 + $0x418] sm:$0xff]
    %v3479 = vld [vmem:[#allocation5 + $0x420] sm:$0xff]
    %v3480 = vld [vmem:[#allocation5 + $0x428] sm:$0xff]
    %v3481 = vld [vmem:[#allocation5 + $0x430] sm:$0xff]
    %v3482 = vld [vmem:[#allocation5 + $0x438] sm:$0xff]
    %v3483 = vld [vmem:[#allocation5 + $0x440] sm:$0xff]
    %v3484 = vld [vmem:[#allocation5 + $0x448] sm:$0xff]
    %v3485 = vld [vmem:[#allocation5 + $0x450] sm:$0xff]
    %v3486 = vld [vmem:[#allocation5 + $0x458] sm:$0xff]
    %v3487 = vld [vmem:[#allocation5 + $0x460] sm:$0xff]
    %v3488 = vld [vmem:[#allocation5 + $0x468] sm:$0xff]
    %v3489 = vld [vmem:[#allocation5 + $0x470] sm:$0xff]
    %v3490 = vld [vmem:[#allocation5 + $0x478] sm:$0xff]
    %v3491 = vld [vmem:[#allocation5 + $0x480] sm:$0xff]
    %v3492 = vld [vmem:[#allocation5 + $0x488] sm:$0xff]
    %v3493 = vld [vmem:[#allocation5 + $0x490] sm:$0xff]
    %v3494 = vld [vmem:[#allocation5 + $0x498] sm:$0xff]
    %v3495 = vld [vmem:[#allocation5 + $0x4a0] sm:$0xff]
    %v3496 = vld [vmem:[#allocation5 + $0x4a8] sm:$0xff]
    %v3497 = vld [vmem:[#allocation5 + $0x4b0] sm:$0xff]
    %v3498 = vld [vmem:[#allocation5 + $0x4b8] sm:$0xff]
    %v3499 = vld [vmem:[#allocation5 + $0x4c0] sm:$0xff]
    %v3500 = vld [vmem:[#allocation5 + $0x4c8] sm:$0xff]
    %v3501 = vld [vmem:[#allocation5 + $0x4d0] sm:$0xff]
    %v3502 = vld [vmem:[#allocation5 + $0x4d8] sm:$0xff]
    %v3503 = vld [vmem:[#allocation5 + $0x4e0] sm:$0xff]
    %v3504 = vld [vmem:[#allocation5 + $0x4e8] sm:$0xff]
    %v3505 = vld [vmem:[#allocation5 + $0x4f0] sm:$0xff]
    %v3506 = vld [vmem:[#allocation5 + $0x4f8] sm:$0xff]
    %v3507 = vld [vmem:[#allocation5 + $0x500] sm:$0xff]
    %v3508 = vld [vmem:[#allocation5 + $0x508] sm:$0xff]
    %v3509 = vld [vmem:[#allocation5 + $0x510] sm:$0xff]
    %v3510 = vld [vmem:[#allocation5 + $0x518] sm:$0xff]
    %v3511 = vld [vmem:[#allocation5 + $0x520] sm:$0xff]
    %v3512 = vld [vmem:[#allocation5 + $0x528] sm:$0xff]
    %v3513 = vld [vmem:[#allocation5 + $0x530] sm:$0xff]
    %v3514 = vld [vmem:[#allocation5 + $0x538] sm:$0xff]
    %v3515 = vld [vmem:[#allocation5 + $0x540] sm:$0xff]
    %v3516 = vld [vmem:[#allocation5 + $0x548] sm:$0xff]
    %v3517 = vld [vmem:[#allocation5 + $0x550] sm:$0xff]
    %v3518 = vld [vmem:[#allocation5 + $0x558] sm:$0xff]
    %v3519 = vld [vmem:[#allocation5 + $0x560] sm:$0xff]
    %v3520 = vld [vmem:[#allocation5 + $0x568] sm:$0xff]
    %v3521 = vld [vmem:[#allocation5 + $0x570] sm:$0xff]
    %v3522 = vld [vmem:[#allocation5 + $0x578] sm:$0xff]
    %v3523 = vld [vmem:[#allocation5 + $0x580] sm:$0xff]
    %v3524 = vld [vmem:[#allocation5 + $0x588] sm:$0xff]
    %v3525 = vld [vmem:[#allocation5 + $0x590] sm:$0xff]
    %v3526 = vld [vmem:[#allocation5 + $0x598] sm:$0xff]
    %v3527 = vld [vmem:[#allocation5 + $0x5a0] sm:$0xff]
    %v3528 = vld [vmem:[#allocation5 + $0x5a8] sm:$0xff]
    %v3529 = vld [vmem:[#allocation5 + $0x5b0] sm:$0xff]
    %v3530 = vld [vmem:[#allocation5 + $0x5b8] sm:$0xff]
    %v3531 = vld [vmem:[#allocation5 + $0x5c0] sm:$0xff]
    %v3532 = vld [vmem:[#allocation5 + $0x5c8] sm:$0xff]
    %v3533 = vld [vmem:[#allocation5 + $0x5d0] sm:$0xff]
    %v3534 = vld [vmem:[#allocation5 + $0x5d8] sm:$0xff]
    %v3535 = vld [vmem:[#allocation5 + $0x5e0] sm:$0xff]
    %v3536 = vld [vmem:[#allocation5 + $0x5e8] sm:$0xff]
    %v3537 = vld [vmem:[#allocation5 + $0x5f0] sm:$0xff]
    %v3538 = vld [vmem:[#allocation5 + $0x5f8] sm:$0xff]
    %v3539 = vld [vmem:[#allocation5 + $0x600] sm:$0xff]
    %v3540 = vld [vmem:[#allocation5 + $0x608] sm:$0xff]
    %v3541 = vld [vmem:[#allocation5 + $0x610] sm:$0xff]
    %v3542 = vld [vmem:[#allocation5 + $0x618] sm:$0xff]
    %v3543 = vld [vmem:[#allocation5 + $0x620] sm:$0xff]
    %v3544 = vld [vmem:[#allocation5 + $0x628] sm:$0xff]
    %v3545 = vld [vmem:[#allocation5 + $0x630] sm:$0xff]
    %v3546 = vld [vmem:[#allocation5 + $0x638] sm:$0xff]
    %v3547 = vld [vmem:[#allocation5 + $0x640] sm:$0xff]
    %v3548 = vld [vmem:[#allocation5 + $0x648] sm:$0xff]
    %v3549 = vld [vmem:[#allocation5 + $0x650] sm:$0xff]
    %v3550 = vld [vmem:[#allocation5 + $0x658] sm:$0xff]
    %v3551 = vld [vmem:[#allocation5 + $0x660] sm:$0xff]
    %v3552 = vld [vmem:[#allocation5 + $0x668] sm:$0xff]
    %v3553 = vld [vmem:[#allocation5 + $0x670] sm:$0xff]
    %v3554 = vld [vmem:[#allocation5 + $0x678] sm:$0xff]
    %v3555 = vld [vmem:[#allocation5 + $0x680] sm:$0xff]
    %v3556 = vld [vmem:[#allocation5 + $0x688] sm:$0xff]
    %v3557 = vld [vmem:[#allocation5 + $0x690] sm:$0xff]
    %v3558 = vld [vmem:[#allocation5 + $0x698] sm:$0xff]
    %v3559 = vld [vmem:[#allocation5 + $0x6a0] sm:$0xff]
    %v3560 = vld [vmem:[#allocation5 + $0x6a8] sm:$0xff]
    %v3561 = vld [vmem:[#allocation5 + $0x6b0] sm:$0xff]
    %v3562 = vld [vmem:[#allocation5 + $0x6b8] sm:$0xff]
    %v3563 = vld [vmem:[#allocation5 + $0x6c0] sm:$0xff]
    %v3564 = vld [vmem:[#allocation5 + $0x6c8] sm:$0xff]
    %v3565 = vld [vmem:[#allocation5 + $0x6d0] sm:$0xff]
    %v3566 = vld [vmem:[#allocation5 + $0x6d8] sm:$0xff]
    %v3567 = vld [vmem:[#allocation5 + $0x6e0] sm:$0xff]
    %v3568 = vld [vmem:[#allocation5 + $0x6e8] sm:$0xff]
    %v3569 = vld [vmem:[#allocation5 + $0x6f0] sm:$0xff]
    %v3570 = vld [vmem:[#allocation5 + $0x6f8] sm:$0xff]
    %v3571 = vld [vmem:[#allocation5 + $0x700] sm:$0xff]
    %v3572 = vld [vmem:[#allocation5 + $0x708] sm:$0xff]
    %v3573 = vld [vmem:[#allocation5 + $0x710] sm:$0xff]
    %v3574 = vld [vmem:[#allocation5 + $0x718] sm:$0xff]
    %v3575 = vld [vmem:[#allocation5 + $0x720] sm:$0xff]
    %v3576 = vld [vmem:[#allocation5 + $0x728] sm:$0xff]
    %v3577 = vld [vmem:[#allocation5 + $0x730] sm:$0xff]
    %v3578 = vld [vmem:[#allocation5 + $0x738] sm:$0xff]
    %v3579 = vld [vmem:[#allocation5 + $0x740] sm:$0xff]
    %v3580 = vld [vmem:[#allocation5 + $0x748] sm:$0xff]
    %v3581 = vld [vmem:[#allocation5 + $0x750] sm:$0xff]
    %v3582 = vld [vmem:[#allocation5 + $0x758] sm:$0xff]
    %v3583 = vld [vmem:[#allocation5 + $0x760] sm:$0xff]
    %v3584 = vld [vmem:[#allocation5 + $0x768] sm:$0xff]
    %v3585 = vld [vmem:[#allocation5 + $0x770] sm:$0xff]
    %v3586 = vld [vmem:[#allocation5 + $0x778] sm:$0xff]
    %v3587 = vld [vmem:[#allocation5 + $0x780] sm:$0xff]
    %v3588 = vld [vmem:[#allocation5 + $0x788] sm:$0xff]
    %v3589 = vld [vmem:[#allocation5 + $0x790] sm:$0xff]
    %v3590 = vld [vmem:[#allocation5 + $0x798] sm:$0xff]
    %v3591 = vld [vmem:[#allocation5 + $0x7a0] sm:$0xff]
    %v3592 = vld [vmem:[#allocation5 + $0x7a8] sm:$0xff]
    %v3593 = vld [vmem:[#allocation5 + $0x7b0] sm:$0xff]
    %v3594 = vld [vmem:[#allocation5 + $0x7b8] sm:$0xff]
    %v3595 = vld [vmem:[#allocation5 + $0x7c0] sm:$0xff]
    %v3596 = vld [vmem:[#allocation5 + $0x7c8] sm:$0xff]
    %v3597 = vld [vmem:[#allocation5 + $0x7d0] sm:$0xff]
    %v3598 = vld [vmem:[#allocation5 + $0x7d8] sm:$0xff]
    %v3599 = vld [vmem:[#allocation5 + $0x7e0] sm:$0xff]
    %v3600 = vld [vmem:[#allocation5 + $0x7e8] sm:$0xff]
    %v3601 = vld [vmem:[#allocation5 + $0x7f0] sm:$0xff]
    %v3602 = vld [vmem:[#allocation5 + $0x7f8] sm:$0xff]
    %v3603 = vld [vmem:[#allocation5 + $0x800] sm:$0xff]
    %v3604 = vld [vmem:[#allocation5 + $0x808] sm:$0xff]
    %v3605 = vld [vmem:[#allocation5 + $0x810] sm:$0xff]
    %v3606 = vld [vmem:[#allocation5 + $0x818] sm:$0xff]
    %v3607 = vld [vmem:[#allocation5 + $0x820] sm:$0xff]
    %v3608 = vld [vmem:[#allocation5 + $0x828] sm:$0xff]
    %v3609 = vld [vmem:[#allocation5 + $0x830] sm:$0xff]
    %v3610 = vld [vmem:[#allocation5 + $0x838] sm:$0xff]
    %v3611 = vld [vmem:[#allocation5 + $0x840] sm:$0xff]
    %v3612 = vld [vmem:[#allocation5 + $0x848] sm:$0xff]
    %v3613 = vld [vmem:[#allocation5 + $0x850] sm:$0xff]
    %v3614 = vld [vmem:[#allocation5 + $0x858] sm:$0xff]
    %v3615 = vld [vmem:[#allocation5 + $0x860] sm:$0xff]
    %v3616 = vld [vmem:[#allocation5 + $0x868] sm:$0xff]
    %v3617 = vld [vmem:[#allocation5 + $0x870] sm:$0xff]
    %v3618 = vld [vmem:[#allocation5 + $0x878] sm:$0xff]
    %v3619 = vld [vmem:[#allocation5 + $0x880] sm:$0xff]
    %v3620 = vld [vmem:[#allocation5 + $0x888] sm:$0xff]
    %v3621 = vld [vmem:[#allocation5 + $0x890] sm:$0xff]
    %v3622 = vld [vmem:[#allocation5 + $0x898] sm:$0xff]
    %v3623 = vld [vmem:[#allocation5 + $0x8a0] sm:$0xff]
    %v3624 = vld [vmem:[#allocation5 + $0x8a8] sm:$0xff]
    %v3625 = vld [vmem:[#allocation5 + $0x8b0] sm:$0xff]
    %v3626 = vld [vmem:[#allocation5 + $0x8b8] sm:$0xff]
    %v3627 = vld [vmem:[#allocation5 + $0x8c0] sm:$0xff]
    %v3628 = vld [vmem:[#allocation5 + $0x8c8] sm:$0xff]
    %v3629 = vld [vmem:[#allocation5 + $0x8d0] sm:$0xff]
    %v3630 = vld [vmem:[#allocation5 + $0x8d8] sm:$0xff]
    %v3631 = vld [vmem:[#allocation5 + $0x8e0] sm:$0xff]
    %v3632 = vld [vmem:[#allocation5 + $0x8e8] sm:$0xff]
    %v3633 = vld [vmem:[#allocation5 + $0x8f0] sm:$0xff]
    %v3634 = vld [vmem:[#allocation5 + $0x8f8] sm:$0xff]
    %v3635 = vld [vmem:[#allocation5 + $0x900] sm:$0xff]
    %v3636 = vld [vmem:[#allocation5 + $0x908] sm:$0xff]
    %v3637 = vld [vmem:[#allocation5 + $0x910] sm:$0xff]
    %v3638 = vld [vmem:[#allocation5 + $0x918] sm:$0xff]
    %v3639 = vld [vmem:[#allocation5 + $0x920] sm:$0xff]
    %v3640 = vld [vmem:[#allocation5 + $0x928] sm:$0xff]
    %v3641 = vld [vmem:[#allocation5 + $0x930] sm:$0xff]
    %v3642 = vld [vmem:[#allocation5 + $0x938] sm:$0xff]
    %v3643 = vld [vmem:[#allocation5 + $0x940] sm:$0xff]
    %v3644 = vld [vmem:[#allocation5 + $0x948] sm:$0xff]
    %v3645 = vld [vmem:[#allocation5 + $0x950] sm:$0xff]
    %v3646 = vld [vmem:[#allocation5 + $0x958] sm:$0xff]
    %v3647 = vld [vmem:[#allocation5 + $0x960] sm:$0xff]
    %v3648 = vld [vmem:[#allocation5 + $0x968] sm:$0xff]
    %v3649 = vld [vmem:[#allocation5 + $0x970] sm:$0xff]
    %v3650 = vld [vmem:[#allocation5 + $0x978] sm:$0xff]
    %v3651 = vld [vmem:[#allocation5 + $0x980] sm:$0xff]
    %v3652 = vld [vmem:[#allocation5 + $0x988] sm:$0xff]
    %v3653 = vld [vmem:[#allocation5 + $0x990] sm:$0xff]
    %v3654 = vld [vmem:[#allocation5 + $0x998] sm:$0xff]
    %v3655 = vld [vmem:[#allocation5 + $0x9a0] sm:$0xff]
    %v3656 = vld [vmem:[#allocation5 + $0x9a8] sm:$0xff]
    %v3657 = vld [vmem:[#allocation5 + $0x9b0] sm:$0xff]
    %v3658 = vld [vmem:[#allocation5 + $0x9b8] sm:$0xff]
    %v3659 = vld [vmem:[#allocation5 + $0x9c0] sm:$0xff]
    %v3660 = vld [vmem:[#allocation5 + $0x9c8] sm:$0xff]
    %v3661 = vld [vmem:[#allocation5 + $0x9d0] sm:$0xff]
    %v3662 = vld [vmem:[#allocation5 + $0x9d8] sm:$0xff]
    %v3663 = vld [vmem:[#allocation5 + $0x9e0] sm:$0xff]
    %v3664 = vld [vmem:[#allocation5 + $0x9e8] sm:$0xff]
    %v3665 = vld [vmem:[#allocation5 + $0x9f0] sm:$0xff]
    %v3666 = vld [vmem:[#allocation5 + $0x9f8] sm:$0xff]
    %v3667 = vld [vmem:[#allocation5 + $0xa00] sm:$0xff]
    %v3668 = vld [vmem:[#allocation5 + $0xa08] sm:$0xff]
    %v3669 = vld [vmem:[#allocation5 + $0xa10] sm:$0xff]
    %v3670 = vld [vmem:[#allocation5 + $0xa18] sm:$0xff]
    %v3671 = vld [vmem:[#allocation5 + $0xa20] sm:$0xff]
    %v3672 = vld [vmem:[#allocation5 + $0xa28] sm:$0xff]
    %v3673 = vld [vmem:[#allocation5 + $0xa30] sm:$0xff]
    %v3674 = vld [vmem:[#allocation5 + $0xa38] sm:$0xff]
    %v3675 = vld [vmem:[#allocation5 + $0xa40] sm:$0xff]
    %v3676 = vld [vmem:[#allocation5 + $0xa48] sm:$0xff]
    %v3677 = vld [vmem:[#allocation5 + $0xa50] sm:$0xff]
    %v3678 = vld [vmem:[#allocation5 + $0xa58] sm:$0xff]
    %v3679 = vld [vmem:[#allocation5 + $0xa60] sm:$0xff]
    %v3680 = vld [vmem:[#allocation5 + $0xa68] sm:$0xff]
    %v3681 = vld [vmem:[#allocation5 + $0xa70] sm:$0xff]
    %v3682 = vld [vmem:[#allocation5 + $0xa78] sm:$0xff]
    %v3683 = vld [vmem:[#allocation5 + $0xa80] sm:$0xff]
    %v3684 = vld [vmem:[#allocation5 + $0xa88] sm:$0xff]
    %v3685 = vld [vmem:[#allocation5 + $0xa90] sm:$0xff]
    %v3686 = vld [vmem:[#allocation5 + $0xa98] sm:$0xff]
    %v3687 = vld [vmem:[#allocation5 + $0xaa0] sm:$0xff]
    %v3688 = vld [vmem:[#allocation5 + $0xaa8] sm:$0xff]
    %v3689 = vld [vmem:[#allocation5 + $0xab0] sm:$0xff]
    %v3690 = vld [vmem:[#allocation5 + $0xab8] sm:$0xff]
    %v3691 = vld [vmem:[#allocation5 + $0xac0] sm:$0xff]
    %v3692 = vld [vmem:[#allocation5 + $0xac8] sm:$0xff]
    %v3693 = vld [vmem:[#allocation5 + $0xad0] sm:$0xff]
    %v3694 = vld [vmem:[#allocation5 + $0xad8] sm:$0xff]
    %v3695 = vld [vmem:[#allocation5 + $0xae0] sm:$0xff]
    %v3696 = vld [vmem:[#allocation5 + $0xae8] sm:$0xff]
    %v3697 = vld [vmem:[#allocation5 + $0xaf0] sm:$0xff]
    %v3698 = vld [vmem:[#allocation5 + $0xaf8] sm:$0xff]
    %v3699 = vld [vmem:[#allocation5 + $0xb00] sm:$0xff]
    %v3700 = vld [vmem:[#allocation5 + $0xb08] sm:$0xff]
    %v3701 = vld [vmem:[#allocation5 + $0xb10] sm:$0xff]
    %v3702 = vld [vmem:[#allocation5 + $0xb18] sm:$0xff]
    %v3703 = vld [vmem:[#allocation5 + $0xb20] sm:$0xff]
    %v3704 = vld [vmem:[#allocation5 + $0xb28] sm:$0xff]
    %v3705 = vld [vmem:[#allocation5 + $0xb30] sm:$0xff]
    %v3706 = vld [vmem:[#allocation5 + $0xb38] sm:$0xff]
    %v3707 = vld [vmem:[#allocation5 + $0xb40] sm:$0xff]
    %v3708 = vld [vmem:[#allocation5 + $0xb48] sm:$0xff]
    %v3709 = vld [vmem:[#allocation5 + $0xb50] sm:$0xff]
    %v3710 = vld [vmem:[#allocation5 + $0xb58] sm:$0xff]
    %v3711 = vld [vmem:[#allocation5 + $0xb60] sm:$0xff]
    %v3712 = vld [vmem:[#allocation5 + $0xb68] sm:$0xff]
    %v3713 = vld [vmem:[#allocation5 + $0xb70] sm:$0xff]
    %v3714 = vld [vmem:[#allocation5 + $0xb78] sm:$0xff]
    %v3715 = vld [vmem:[#allocation5 + $0xb80] sm:$0xff]
    %v3716 = vld [vmem:[#allocation5 + $0xb88] sm:$0xff]
    %v3717 = vld [vmem:[#allocation5 + $0xb90] sm:$0xff]
    %v3718 = vld [vmem:[#allocation5 + $0xb98] sm:$0xff]
    %v3719 = vld [vmem:[#allocation5 + $0xba0] sm:$0xff]
    %v3720 = vld [vmem:[#allocation5 + $0xba8] sm:$0xff]
    %v3721 = vld [vmem:[#allocation5 + $0xbb0] sm:$0xff]
    %v3722 = vld [vmem:[#allocation5 + $0xbb8] sm:$0xff]
    %v3723 = vld [vmem:[#allocation5 + $0xbc0] sm:$0xff]
    %v3724 = vld [vmem:[#allocation5 + $0xbc8] sm:$0xff]
    %v3725 = vld [vmem:[#allocation5 + $0xbd0] sm:$0xff]
    %v3726 = vld [vmem:[#allocation5 + $0xbd8] sm:$0xff]
    %v3727 = vld [vmem:[#allocation5 + $0xbe0] sm:$0xff]
    %v3728 = vld [vmem:[#allocation5 + $0xbe8] sm:$0xff]
    %v3729 = vld [vmem:[#allocation5 + $0xbf0] sm:$0xff]
    %v3730 = vld [vmem:[#allocation5 + $0xbf8] sm:$0xff]
    %v3731 = vld [vmem:[#allocation5 + $0xc00] sm:$0xff]
    %v3732 = vld [vmem:[#allocation5 + $0xc08] sm:$0xff]
    %v3733 = vld [vmem:[#allocation5 + $0xc10] sm:$0xff]
    %v3734 = vld [vmem:[#allocation5 + $0xc18] sm:$0xff]
    %v3735 = vld [vmem:[#allocation5 + $0xc20] sm:$0xff]
    %v3736 = vld [vmem:[#allocation5 + $0xc28] sm:$0xff]
    %v3737 = vld [vmem:[#allocation5 + $0xc30] sm:$0xff]
    %v3738 = vld [vmem:[#allocation5 + $0xc38] sm:$0xff]
    %v3739 = vld [vmem:[#allocation5 + $0xc40] sm:$0xff]
    %v3740 = vld [vmem:[#allocation5 + $0xc48] sm:$0xff]
    %v3741 = vld [vmem:[#allocation5 + $0xc50] sm:$0xff]
    %v3742 = vld [vmem:[#allocation5 + $0xc58] sm:$0xff]
    %v3743 = vld [vmem:[#allocation5 + $0xc60] sm:$0xff]
    %v3744 = vld [vmem:[#allocation5 + $0xc68] sm:$0xff]
    %v3745 = vld [vmem:[#allocation5 + $0xc70] sm:$0xff]
    %v3746 = vld [vmem:[#allocation5 + $0xc78] sm:$0xff]
    %v3747 = vld [vmem:[#allocation5 + $0xc80] sm:$0xff]
    %v3748 = vld [vmem:[#allocation5 + $0xc88] sm:$0xff]
    %v3749 = vld [vmem:[#allocation5 + $0xc90] sm:$0xff]
    %v3750 = vld [vmem:[#allocation5 + $0xc98] sm:$0xff]
    %v3751 = vld [vmem:[#allocation5 + $0xca0] sm:$0xff]
    %v3752 = vld [vmem:[#allocation5 + $0xca8] sm:$0xff]
    %v3753 = vld [vmem:[#allocation5 + $0xcb0] sm:$0xff]
    %v3754 = vld [vmem:[#allocation5 + $0xcb8] sm:$0xff]
    %v3755 = vld [vmem:[#allocation5 + $0xcc0] sm:$0xff]
    %v3756 = vld [vmem:[#allocation5 + $0xcc8] sm:$0xff]
    %v3757 = vld [vmem:[#allocation5 + $0xcd0] sm:$0xff]
    %v3758 = vld [vmem:[#allocation5 + $0xcd8] sm:$0xff]
    %v3759 = vld [vmem:[#allocation5 + $0xce0] sm:$0xff]
    %v3760 = vld [vmem:[#allocation5 + $0xce8] sm:$0xff]
    %v3761 = vld [vmem:[#allocation5 + $0xcf0] sm:$0xff]
    %v3762 = vld [vmem:[#allocation5 + $0xcf8] sm:$0xff]
    %v3763 = vld [vmem:[#allocation5 + $0xd00] sm:$0xff]
    %v3764 = vld [vmem:[#allocation5 + $0xd08] sm:$0xff]
    %v3765 = vld [vmem:[#allocation5 + $0xd10] sm:$0xff]
    %v3766 = vld [vmem:[#allocation5 + $0xd18] sm:$0xff]
    %v3767 = vld [vmem:[#allocation5 + $0xd20] sm:$0xff]
    %v3768 = vld [vmem:[#allocation5 + $0xd28] sm:$0xff]
    %v3769 = vld [vmem:[#allocation5 + $0xd30] sm:$0xff]
    %v3770 = vld [vmem:[#allocation5 + $0xd38] sm:$0xff]
    %v3771 = vld [vmem:[#allocation5 + $0xd40] sm:$0xff]
    %v3772 = vld [vmem:[#allocation5 + $0xd48] sm:$0xff]
    %v3773 = vld [vmem:[#allocation5 + $0xd50] sm:$0xff]
    %v3774 = vld [vmem:[#allocation5 + $0xd58] sm:$0xff]
    %v3775 = vld [vmem:[#allocation5 + $0xd60] sm:$0xff]
    %v3776 = vld [vmem:[#allocation5 + $0xd68] sm:$0xff]
    %v3777 = vld [vmem:[#allocation5 + $0xd70] sm:$0xff]
    %v3778 = vld [vmem:[#allocation5 + $0xd78] sm:$0xff]
    %v3779 = vld [vmem:[#allocation5 + $0xd80] sm:$0xff]
    %v3780 = vld [vmem:[#allocation5 + $0xd88] sm:$0xff]
    %v3781 = vld [vmem:[#allocation5 + $0xd90] sm:$0xff]
    %v3782 = vld [vmem:[#allocation5 + $0xd98] sm:$0xff]
    %v3783 = vld [vmem:[#allocation5 + $0xda0] sm:$0xff]
    %v3784 = vld [vmem:[#allocation5 + $0xda8] sm:$0xff]
    %v3785 = vld [vmem:[#allocation5 + $0xdb0] sm:$0xff]
    %v3786 = vld [vmem:[#allocation5 + $0xdb8] sm:$0xff]
    %v3787 = vld [vmem:[#allocation5 + $0xdc0] sm:$0xff]
    %v3788 = vld [vmem:[#allocation5 + $0xdc8] sm:$0xff]
    %v3789 = vld [vmem:[#allocation5 + $0xdd0] sm:$0xff]
    %v3790 = vld [vmem:[#allocation5 + $0xdd8] sm:$0xff]
    %v3791 = vld [vmem:[#allocation5 + $0xde0] sm:$0xff]
    %v3792 = vld [vmem:[#allocation5 + $0xde8] sm:$0xff]
    %v3793 = vld [vmem:[#allocation5 + $0xdf0] sm:$0xff]
    %v3794 = vld [vmem:[#allocation5 + $0xdf8] sm:$0xff]
    %v3795 = vld [vmem:[#allocation5 + $0xe00] sm:$0xff]
    %v3796 = vld [vmem:[#allocation5 + $0xe08] sm:$0xff]
    %v3797 = vld [vmem:[#allocation5 + $0xe10] sm:$0xff]
    %v3798 = vld [vmem:[#allocation5 + $0xe18] sm:$0xff]
    %v3799 = vld [vmem:[#allocation5 + $0xe20] sm:$0xff]
    %v3800 = vld [vmem:[#allocation5 + $0xe28] sm:$0xff]
    %v3801 = vld [vmem:[#allocation5 + $0xe30] sm:$0xff]
    %v3802 = vld [vmem:[#allocation5 + $0xe38] sm:$0xff]
    %v3803 = vld [vmem:[#allocation5 + $0xe40] sm:$0xff]
    %v3804 = vld [vmem:[#allocation5 + $0xe48] sm:$0xff]
    %v3805 = vld [vmem:[#allocation5 + $0xe50] sm:$0xff]
    %v3806 = vld [vmem:[#allocation5 + $0xe58] sm:$0xff]
    %v3807 = vld [vmem:[#allocation5 + $0xe60] sm:$0xff]
    %v3808 = vld [vmem:[#allocation5 + $0xe68] sm:$0xff]
    %v3809 = vld [vmem:[#allocation5 + $0xe70] sm:$0xff]
    %v3810 = vld [vmem:[#allocation5 + $0xe78] sm:$0xff]
    %v3811 = vld [vmem:[#allocation5 + $0xe80] sm:$0xff]
    %v3812 = vld [vmem:[#allocation5 + $0xe88] sm:$0xff]
    %v3813 = vld [vmem:[#allocation5 + $0xe90] sm:$0xff]
    %v3814 = vld [vmem:[#allocation5 + $0xe98] sm:$0xff]
    %v3815 = vld [vmem:[#allocation5 + $0xea0] sm:$0xff]
    %v3816 = vld [vmem:[#allocation5 + $0xea8] sm:$0xff]
    %v3817 = vld [vmem:[#allocation5 + $0xeb0] sm:$0xff]
    %v3818 = vld [vmem:[#allocation5 + $0xeb8] sm:$0xff]
    %v3819 = vld [vmem:[#allocation5 + $0xec0] sm:$0xff]
    %v3820 = vld [vmem:[#allocation5 + $0xec8] sm:$0xff]
    %v3821 = vld [vmem:[#allocation5 + $0xed0] sm:$0xff]
    %v3822 = vld [vmem:[#allocation5 + $0xed8] sm:$0xff]
    %v3823 = vld [vmem:[#allocation5 + $0xee0] sm:$0xff]
    %v3824 = vld [vmem:[#allocation5 + $0xee8] sm:$0xff]
    %v3825 = vld [vmem:[#allocation5 + $0xef0] sm:$0xff]
    %v3826 = vld [vmem:[#allocation5 + $0xef8] sm:$0xff]
    %v3827 = vld [vmem:[#allocation5 + $0xf00] sm:$0xff]
    %v3828 = vld [vmem:[#allocation5 + $0xf08] sm:$0xff]
    %v3829 = vld [vmem:[#allocation5 + $0xf10] sm:$0xff]
    %v3830 = vld [vmem:[#allocation5 + $0xf18] sm:$0xff]
    %v3831 = vld [vmem:[#allocation5 + $0xf20] sm:$0xff]
    %v3832 = vld [vmem:[#allocation5 + $0xf28] sm:$0xff]
    %v3833 = vld [vmem:[#allocation5 + $0xf30] sm:$0xff]
    %v3834 = vld [vmem:[#allocation5 + $0xf38] sm:$0xff]
    %v3835 = vld [vmem:[#allocation5 + $0xf40] sm:$0xff]
    %v3836 = vld [vmem:[#allocation5 + $0xf48] sm:$0xff]
    %v3837 = vld [vmem:[#allocation5 + $0xf50] sm:$0xff]
    %v3838 = vld [vmem:[#allocation5 + $0xf58] sm:$0xff]
    %v3839 = vld [vmem:[#allocation5 + $0xf60] sm:$0xff]
    %v3840 = vld [vmem:[#allocation5 + $0xf68] sm:$0xff]
    %v3841 = vld [vmem:[#allocation5 + $0xf70] sm:$0xff]
    %v3842 = vld [vmem:[#allocation5 + $0xf78] sm:$0xff]
    %v3843 = vld [vmem:[#allocation5 + $0xf80] sm:$0xff]
    %v3844 = vld [vmem:[#allocation5 + $0xf88] sm:$0xff]
    %v3845 = vld [vmem:[#allocation5 + $0xf90] sm:$0xff]
    %v3846 = vld [vmem:[#allocation5 + $0xf98] sm:$0xff]
    %v3847 = vld [vmem:[#allocation5 + $0xfa0] sm:$0xff]
    %v3848 = vld [vmem:[#allocation5 + $0xfa8] sm:$0xff]
    %v3849 = vld [vmem:[#allocation5 + $0xfb0] sm:$0xff]
    %v3850 = vld [vmem:[#allocation5 + $0xfb8] sm:$0xff]
    %v3851 = vld [vmem:[#allocation5 + $0xfc0] sm:$0xff]
    %v3852 = vld [vmem:[#allocation5 + $0xfc8] sm:$0xff]
    %v3853 = vld [vmem:[#allocation5 + $0xfd0] sm:$0xff]
    %v3854 = vld [vmem:[#allocation5 + $0xfd8] sm:$0xff]
    %v3855 = vld [vmem:[#allocation5 + $0xfe0] sm:$0xff]
    %v3856 = vld [vmem:[#allocation5 + $0xfe8] sm:$0xff]
    %v3857 = vld [vmem:[#allocation5 + $0xff0] sm:$0xff]
    %v3858 = vld [vmem:[#allocation5 + $0xff8] sm:$0xff]
    %s3859 = scalar_lea.vmem [#allocation9], 3
    %v3860 = vld [vmem:[%s3859] ss:$8 sm:$0xf]
    %v3861 = vld [vmem:[%s3859] ss:$8 sm:$0xf0]
    %v3862 = vor.u32 %v3860, %v3861
    %v3864 = vlaneseq
    %v3865 = vshrl.u32 %v3864, 7
    %v3866 = vsub.s32 0, %v3865
    %v3867 = vrot.slane %v3862, %v3866
    %v3868 = vlaneseq
    %v3869 = vshrl.u32 %v3868, 7
    %v3870 = vsub.s32 1, %v3869
    %v3871 = vrot.slane %v3862, %v3870
    %v3872 = vlaneseq
    %v3873 = vshrl.u32 %v3872, 7
    %v3874 = vsub.s32 2, %v3873
    %v3875 = vrot.slane %v3862, %v3874
    %v3876 = vlaneseq
    %v3877 = vshrl.u32 %v3876, 7
    %v3878 = vsub.s32 3, %v3877
    %v3879 = vrot.slane %v3862, %v3878
    %v3880 = vlaneseq
    %v3881 = vshrl.u32 %v3880, 7
    %v3882 = vsub.s32 4, %v3881
    %v3883 = vrot.slane %v3862, %v3882
    %v3884 = vlaneseq
    %v3885 = vshrl.u32 %v3884, 7
    %v3886 = vsub.s32 5, %v3885
    %v3887 = vrot.slane %v3862, %v3886
    %v3888 = vlaneseq
    %v3889 = vshrl.u32 %v3888, 7
    %v3890 = vsub.s32 6, %v3889
    %v3891 = vrot.slane %v3862, %v3890
    %v3892 = vlaneseq
    %v3893 = vshrl.u32 %v3892, 7
    %v3894 = vsub.s32 7, %v3893
    %v3895 = vrot.slane %v3862, %v3894
    %3904 = vmatprep.subr.bf16.mxu0 %v3348
    %3905 = vmatpush1.bf16.msra.mxu0 %v3347
    %3906 = vmatprep.subr.bf16.mxu0 %v3356
    %3907 = vmatpush1.bf16.msra.mxu0 %v3355
    %3908 = vmatprep.subr.bf16.mxu0 %v3364
    %3909 = vmatpush1.bf16.msra.mxu0 %v3363
    %3910 = vmatprep.subr.bf16.mxu0 %v3372
    %3911 = vmatpush1.bf16.msra.mxu0 %v3371
    %3912 = vmatprep.subr.bf16.mxu0 %v3380
    %3913 = vmatpush1.bf16.msra.mxu0 %v3379
    %3914 = vmatprep.subr.bf16.mxu0 %v3388
    %3915 = vmatpush1.bf16.msra.mxu0 %v3387
    %3916 = vmatprep.subr.bf16.mxu0 %v3396
    %3917 = vmatpush1.bf16.msra.mxu0 %v3395
    %3918 = vmatprep.subr.bf16.mxu0 %v3404
    %3919 = vmatpush1.bf16.msra.mxu0 %v3403
    %3920 = vmatprep.subr.bf16.mxu0 %v3412
    %3921 = vmatpush1.bf16.msra.mxu0 %v3411
    %3922 = vmatprep.subr.bf16.mxu0 %v3420
    %3923 = vmatpush1.bf16.msra.mxu0 %v3419
    %3924 = vmatprep.subr.bf16.mxu0 %v3428
    %3925 = vmatpush1.bf16.msra.mxu0 %v3427
    %3926 = vmatprep.subr.bf16.mxu0 %v3436
    %3927 = vmatpush1.bf16.msra.mxu0 %v3435
    %3928 = vmatprep.subr.bf16.mxu0 %v3444
    %3929 = vmatpush1.bf16.msra.mxu0 %v3443
    %3930 = vmatprep.subr.bf16.mxu0 %v3452
    %3931 = vmatpush1.bf16.msra.mxu0 %v3451
    %3932 = vmatprep.subr.bf16.mxu0 %v3460
    %3933 = vmatpush1.bf16.msra.mxu0 %v3459
    %3934 = vmatprep.subr.bf16.mxu0 %v3468
    %3935 = vmatpush1.bf16.msra.mxu0 %v3467
    %3936 = vmatprep.mubr.bf16.mxu0 %v3340
    %3937 = vmatmul.mubr.bf16.gmra.mrb[0].mxu0 %v3339
    %v3938 = vpop.f32.mrb[0].mxu0
    %v3939 = vadd.f32 %v3867, %v3938
    %v3940 = vpop.f32.mrb[0].mxu0
    %v3941 = vadd.f32 %v3871, %v3940
    %v3942 = vpop.f32.mrb[0].mxu0
    %v3943 = vpop.f32.mrb[0].mxu0
    %3944 = vdwg.mxu0
    %3945 = vmatprep.subr.bf16.mxu0 %v3476
    %3946 = vmatpush1.bf16.msra.mxu0 %v3475
    %3947 = vmatprep.subr.bf16.mxu0 %v3484
    %3948 = vmatpush1.bf16.msra.mxu0 %v3483
    %3949 = vmatprep.subr.bf16.mxu0 %v3492
    %3950 = vmatpush1.bf16.msra.mxu0 %v3491
    %3951 = vmatprep.subr.bf16.mxu0 %v3500
    %3952 = vmatpush1.bf16.msra.mxu0 %v3499
    %3953 = vmatprep.subr.bf16.mxu0 %v3508
    %3954 = vmatpush1.bf16.msra.mxu0 %v3507
    %3955 = vmatprep.subr.bf16.mxu0 %v3516
    %3956 = vmatpush1.bf16.msra.mxu0 %v3515
    %3957 = vmatprep.subr.bf16.mxu0 %v3524
    %3958 = vmatpush1.bf16.msra.mxu0 %v3523
    %3959 = vmatprep.subr.bf16.mxu0 %v3532
    %3960 = vmatpush1.bf16.msra.mxu0 %v3531
    %3961 = vmatprep.subr.bf16.mxu0 %v3540
    %3962 = vmatpush1.bf16.msra.mxu0 %v3539
    %3963 = vmatprep.subr.bf16.mxu0 %v3548
    %3964 = vmatpush1.bf16.msra.mxu0 %v3547
    %3965 = vmatprep.subr.bf16.mxu0 %v3556
    %3966 = vmatpush1.bf16.msra.mxu0 %v3555
    %3967 = vmatprep.subr.bf16.mxu0 %v3564
    %3968 = vmatpush1.bf16.msra.mxu0 %v3563
    %3969 = vmatprep.subr.bf16.mxu0 %v3572
    %3970 = vmatpush1.bf16.msra.mxu0 %v3571
    %3971 = vmatprep.subr.bf16.mxu0 %v3580
    %3972 = vmatpush1.bf16.msra.mxu0 %v3579
    %3973 = vmatprep.subr.bf16.mxu0 %v3588
    %3974 = vmatpush1.bf16.msra.mxu0 %v3587
    %3975 = vmatprep.subr.bf16.mxu0 %v3596
    %3976 = vmatpush1.bf16.msra.mxu0 %v3595
    %3977 = vmatprep.mubr.bf16.mxu0 %v3342
    %3978 = vmatmul.mubr.bf16.gmra.mrb[0].mxu0 %v3341
    %v3979 = vpop.f32.mrb[0].mxu0
    %v3980 = vadd.f32 %v3939, %v3979
    %v3981 = vpop.f32.mrb[0].mxu0
    %v3982 = vadd.f32 %v3941, %v3981
    %v3983 = vpop.f32.mrb[0].mxu0
    %v3984 = vpop.f32.mrb[0].mxu0
    %3985 = vdwg.mxu0
    %3986 = vmatprep.subr.bf16.mxu0 %v3604
    %3987 = vmatpush1.bf16.msra.mxu0 %v3603
    %3988 = vmatprep.subr.bf16.mxu0 %v3612
    %3989 = vmatpush1.bf16.msra.mxu0 %v3611
    %3990 = vmatprep.subr.bf16.mxu0 %v3620
    %3991 = vmatpush1.bf16.msra.mxu0 %v3619
    %3992 = vmatprep.subr.bf16.mxu0 %v3628
    %3993 = vmatpush1.bf16.msra.mxu0 %v3627
    %3994 = vmatprep.subr.bf16.mxu0 %v3636
    %3995 = vmatpush1.bf16.msra.mxu0 %v3635
    %3996 = vmatprep.subr.bf16.mxu0 %v3644
    %3997 = vmatpush1.bf16.msra.mxu0 %v3643
    %3998 = vmatprep.subr.bf16.mxu0 %v3652
    %3999 = vmatpush1.bf16.msra.mxu0 %v3651
    %4000 = vmatprep.subr.bf16.mxu0 %v3660
    %4001 = vmatpush1.bf16.msra.mxu0 %v3659
    %4002 = vmatprep.subr.bf16.mxu0 %v3668
    %4003 = vmatpush1.bf16.msra.mxu0 %v3667
    %4004 = vmatprep.subr.bf16.mxu0 %v3676
    %4005 = vmatpush1.bf16.msra.mxu0 %v3675
    %4006 = vmatprep.subr.bf16.mxu0 %v3684
    %4007 = vmatpush1.bf16.msra.mxu0 %v3683
    %4008 = vmatprep.subr.bf16.mxu0 %v3692
    %4009 = vmatpush1.bf16.msra.mxu0 %v3691
    %4010 = vmatprep.subr.bf16.mxu0 %v3700
    %4011 = vmatpush1.bf16.msra.mxu0 %v3699
    %4012 = vmatprep.subr.bf16.mxu0 %v3708
    %4013 = vmatpush1.bf16.msra.mxu0 %v3707
    %4014 = vmatprep.subr.bf16.mxu0 %v3716
    %4015 = vmatpush1.bf16.msra.mxu0 %v3715
    %4016 = vmatprep.subr.bf16.mxu0 %v3724
    %4017 = vmatpush1.bf16.msra.mxu0 %v3723
    %4018 = vmatprep.mubr.bf16.mxu0 %v3344
    %4019 = vmatmul.mubr.bf16.gmra.mrb[0].mxu0 %v3343
    %v4020 = vpop.f32.mrb[0].mxu0
    %v4021 = vadd.f32 %v3980, %v4020
    %v4022 = vpop.f32.mrb[0].mxu0
    %v4023 = vadd.f32 %v3982, %v4022
    %v4024 = vpop.f32.mrb[0].mxu0
    %v4025 = vpop.f32.mrb[0].mxu0
    %4026 = vdwg.mxu0
    %4027 = vmatprep.subr.bf16.mxu0 %v3732
    %4028 = vmatpush1.bf16.msra.mxu0 %v3731
    %4029 = vmatprep.subr.bf16.mxu0 %v3740
    %4030 = vmatpush1.bf16.msra.mxu0 %v3739
    %4031 = vmatprep.subr.bf16.mxu0 %v3748
    %4032 = vmatpush1.bf16.msra.mxu0 %v3747
    %4033 = vmatprep.subr.bf16.mxu0 %v3756
    %4034 = vmatpush1.bf16.msra.mxu0 %v3755
    %4035 = vmatprep.subr.bf16.mxu0 %v3764
    %4036 = vmatpush1.bf16.msra.mxu0 %v3763
    %4037 = vmatprep.subr.bf16.mxu0 %v3772
    %4038 = vmatpush1.bf16.msra.mxu0 %v3771
    %4039 = vmatprep.subr.bf16.mxu0 %v3780
    %4040 = vmatpush1.bf16.msra.mxu0 %v3779
    %4041 = vmatprep.subr.bf16.mxu0 %v3788
    %4042 = vmatpush1.bf16.msra.mxu0 %v3787
    %4043 = vmatprep.subr.bf16.mxu0 %v3796
    %4044 = vmatpush1.bf16.msra.mxu0 %v3795
    %4045 = vmatprep.subr.bf16.mxu0 %v3804
    %4046 = vmatpush1.bf16.msra.mxu0 %v3803
    %4047 = vmatprep.subr.bf16.mxu0 %v3812
    %4048 = vmatpush1.bf16.msra.mxu0 %v3811
    %4049 = vmatprep.subr.bf16.mxu0 %v3820
    %4050 = vmatpush1.bf16.msra.mxu0 %v3819
    %4051 = vmatprep.subr.bf16.mxu0 %v3828
    %4052 = vmatpush1.bf16.msra.mxu0 %v3827
    %4053 = vmatprep.subr.bf16.mxu0 %v3836
    %4054 = vmatpush1.bf16.msra.mxu0 %v3835
    %4055 = vmatprep.subr.bf16.mxu0 %v3844
    %4056 = vmatpush1.bf16.msra.mxu0 %v3843
    %4057 = vmatprep.subr.bf16.mxu0 %v3852
    %4058 = vmatpush1.bf16.msra.mxu0 %v3851
    %4059 = vmatprep.mubr.bf16.mxu0 %v3346
    %4060 = vmatmul.mubr.bf16.gmra.mrb[0].mxu0 %v3345
    %v4061 = vpop.f32.mrb[0].mxu0
    %v4062 = vadd.f32 %v4021, %v4061
    %v4063 = vpop.f32.mrb[0].mxu0
    %v4064 = vadd.f32 %v4023, %v4063
    %v4065 = vpop.f32.mrb[0].mxu0
    %v4066 = vpop.f32.mrb[0].mxu0
    %4067 = vdwg.mxu0
    %4068 = vmatprep.subr.bf16.mxu0 %v3350
    %4069 = vmatpush1.bf16.msra.mxu0 %v3349
    %4070 = vmatprep.subr.bf16.mxu0 %v3358
    %4071 = vmatpush1.bf16.msra.mxu0 %v3357
    %4072 = vmatprep.subr.bf16.mxu0 %v3366
    %4073 = vmatpush1.bf16.msra.mxu0 %v3365
    %4074 = vmatprep.subr.bf16.mxu0 %v3374
    %4075 = vmatpush1.bf16.msra.mxu0 %v3373
    %4076 = vmatprep.subr.bf16.mxu0 %v3382
    %4077 = vmatpush1.bf16.msra.mxu0 %v3381
    %4078 = vmatprep.subr.bf16.mxu0 %v3390
    %4079 = vmatpush1.bf16.msra.mxu0 %v3389
    %4080 = vmatprep.subr.bf16.mxu0 %v3398
    %4081 = vmatpush1.bf16.msra.mxu0 %v3397
    %4082 = vmatprep.subr.bf16.mxu0 %v3406
    %4083 = vmatpush1.bf16.msra.mxu0 %v3405
    %4084 = vmatprep.subr.bf16.mxu0 %v3414
    %4085 = vmatpush1.bf16.msra.mxu0 %v3413
    %4086 = vmatprep.subr.bf16.mxu0 %v3422
    %4087 = vmatpush1.bf16.msra.mxu0 %v3421
    %4088 = vmatprep.subr.bf16.mxu0 %v3430
    %4089 = vmatpush1.bf16.msra.mxu0 %v3429
    %4090 = vmatprep.subr.bf16.mxu0 %v3438
    %4091 = vmatpush1.bf16.msra.mxu0 %v3437
    %4092 = vmatprep.subr.bf16.mxu0 %v3446
    %4093 = vmatpush1.bf16.msra.mxu0 %v3445
    %4094 = vmatprep.subr.bf16.mxu0 %v3454
    %4095 = vmatpush1.bf16.msra.mxu0 %v3453
    %4096 = vmatprep.subr.bf16.mxu0 %v3462
    %4097 = vmatpush1.bf16.msra.mxu0 %v3461
    %4098 = vmatprep.subr.bf16.mxu0 %v3470
    %4099 = vmatpush1.bf16.msra.mxu0 %v3469
    %4100 = vmatprep.mubr.bf16.mxu0 %v3340
    %4101 = vmatmul.mubr.bf16.gmra.mrb[0].mxu0 %v3339
    %v4102 = vpop.f32.mrb[0].mxu0
    %v4103 = vadd.f32 %v3875, %v4102
    %v4104 = vpop.f32.mrb[0].mxu0
    %v4105 = vadd.f32 %v3879, %v4104
    %v4106 = vpop.f32.mrb[0].mxu0
    %v4107 = vpop.f32.mrb[0].mxu0
    %4108 = vdwg.mxu0
    %4109 = vmatprep.subr.bf16.mxu0 %v3478
    %4110 = vmatpush1.bf16.msra.mxu0 %v3477
    %4111 = vmatprep.subr.bf16.mxu0 %v3486
    %4112 = vmatpush1.bf16.msra.mxu0 %v3485
    %4113 = vmatprep.subr.bf16.mxu0 %v3494
    %4114 = vmatpush1.bf16.msra.mxu0 %v3493
    %4115 = vmatprep.subr.bf16.mxu0 %v3502
    %4116 = vmatpush1.bf16.msra.mxu0 %v3501
    %4117 = vmatprep.subr.bf16.mxu0 %v3510
    %4118 = vmatpush1.bf16.msra.mxu0 %v3509
    %4119 = vmatprep.subr.bf16.mxu0 %v3518
    %4120 = vmatpush1.bf16.msra.mxu0 %v3517
    %4121 = vmatprep.subr.bf16.mxu0 %v3526
    %4122 = vmatpush1.bf16.msra.mxu0 %v3525
    %4123 = vmatprep.subr.bf16.mxu0 %v3534
    %4124 = vmatpush1.bf16.msra.mxu0 %v3533
    %4125 = vmatprep.subr.bf16.mxu0 %v3542
    %4126 = vmatpush1.bf16.msra.mxu0 %v3541
    %4127 = vmatprep.subr.bf16.mxu0 %v3550
    %4128 = vmatpush1.bf16.msra.mxu0 %v3549
    %4129 = vmatprep.subr.bf16.mxu0 %v3558
    %4130 = vmatpush1.bf16.msra.mxu0 %v3557
    %4131 = vmatprep.subr.bf16.mxu0 %v3566
    %4132 = vmatpush1.bf16.msra.mxu0 %v3565
    %4133 = vmatprep.subr.bf16.mxu0 %v3574
    %4134 = vmatpush1.bf16.msra.mxu0 %v3573
    %4135 = vmatprep.subr.bf16.mxu0 %v3582
    %4136 = vmatpush1.bf16.msra.mxu0 %v3581
    %4137 = vmatprep.subr.bf16.mxu0 %v3590
    %4138 = vmatpush1.bf16.msra.mxu0 %v3589
    %4139 = vmatprep.subr.bf16.mxu0 %v3598
    %4140 = vmatpush1.bf16.msra.mxu0 %v3597
    %4141 = vmatprep.mubr.bf16.mxu0 %v3342
    %4142 = vmatmul.mubr.bf16.gmra.mrb[0].mxu0 %v3341
    %v4143 = vpop.f32.mrb[0].mxu0
    %v4144 = vadd.f32 %v4103, %v4143
    %v4145 = vpop.f32.mrb[0].mxu0
    %v4146 = vadd.f32 %v4105, %v4145
    %v4147 = vpop.f32.mrb[0].mxu0
    %v4148 = vpop.f32.mrb[0].mxu0
    %4149 = vdwg.mxu0
    %4150 = vmatprep.subr.bf16.mxu0 %v3606
    %4151 = vmatpush1.bf16.msra.mxu0 %v3605
    %4152 = vmatprep.subr.bf16.mxu0 %v3614
    %4153 = vmatpush1.bf16.msra.mxu0 %v3613
    %4154 = vmatprep.subr.bf16.mxu0 %v3622
    %4155 = vmatpush1.bf16.msra.mxu0 %v3621
    %4156 = vmatprep.subr.bf16.mxu0 %v3630
    %4157 = vmatpush1.bf16.msra.mxu0 %v3629
    %4158 = vmatprep.subr.bf16.mxu0 %v3638
    %4159 = vmatpush1.bf16.msra.mxu0 %v3637
    %4160 = vmatprep.subr.bf16.mxu0 %v3646
    %4161 = vmatpush1.bf16.msra.mxu0 %v3645
    %4162 = vmatprep.subr.bf16.mxu0 %v3654
    %4163 = vmatpush1.bf16.msra.mxu0 %v3653
    %4164 = vmatprep.subr.bf16.mxu0 %v3662
    %4165 = vmatpush1.bf16.msra.mxu0 %v3661
    %4166 = vmatprep.subr.bf16.mxu0 %v3670
    %4167 = vmatpush1.bf16.msra.mxu0 %v3669
    %4168 = vmatprep.subr.bf16.mxu0 %v3678
    %4169 = vmatpush1.bf16.msra.mxu0 %v3677
    %4170 = vmatprep.subr.bf16.mxu0 %v3686
    %4171 = vmatpush1.bf16.msra.mxu0 %v3685
    %4172 = vmatprep.subr.bf16.mxu0 %v3694
    %4173 = vmatpush1.bf16.msra.mxu0 %v3693
    %4174 = vmatprep.subr.bf16.mxu0 %v3702
    %4175 = vmatpush1.bf16.msra.mxu0 %v3701
    %4176 = vmatprep.subr.bf16.mxu0 %v3710
    %4177 = vmatpush1.bf16.msra.mxu0 %v3709
    %4178 = vmatprep.subr.bf16.mxu0 %v3718
    %4179 = vmatpush1.bf16.msra.mxu0 %v3717
    %4180 = vmatprep.subr.bf16.mxu0 %v3726
    %4181 = vmatpush1.bf16.msra.mxu0 %v3725
    %4182 = vmatprep.mubr.bf16.mxu0 %v3344
    %4183 = vmatmul.mubr.bf16.gmra.mrb[0].mxu0 %v3343
    %v4184 = vpop.f32.mrb[0].mxu0
    %v4185 = vadd.f32 %v4144, %v4184
    %v4186 = vpop.f32.mrb[0].mxu0
    %v4187 = vadd.f32 %v4146, %v4186
    %v4188 = vpop.f32.mrb[0].mxu0
    %v4189 = vpop.f32.mrb[0].mxu0
    %4190 = vdwg.mxu0
    %4191 = vmatprep.subr.bf16.mxu0 %v3734
    %4192 = vmatpush1.bf16.msra.mxu0 %v3733
    %4193 = vmatprep.subr.bf16.mxu0 %v3742
    %4194 = vmatpush1.bf16.msra.mxu0 %v3741
    %4195 = vmatprep.subr.bf16.mxu0 %v3750
    %4196 = vmatpush1.bf16.msra.mxu0 %v3749
    %4197 = vmatprep.subr.bf16.mxu0 %v3758
    %4198 = vmatpush1.bf16.msra.mxu0 %v3757
    %4199 = vmatprep.subr.bf16.mxu0 %v3766
    %4200 = vmatpush1.bf16.msra.mxu0 %v3765
    %4201 = vmatprep.subr.bf16.mxu0 %v3774
    %4202 = vmatpush1.bf16.msra.mxu0 %v3773
    %4203 = vmatprep.subr.bf16.mxu0 %v3782
    %4204 = vmatpush1.bf16.msra.mxu0 %v3781
    %4205 = vmatprep.subr.bf16.mxu0 %v3790
    %4206 = vmatpush1.bf16.msra.mxu0 %v3789
    %4207 = vmatprep.subr.bf16.mxu0 %v3798
    %4208 = vmatpush1.bf16.msra.mxu0 %v3797
    %4209 = vmatprep.subr.bf16.mxu0 %v3806
    %4210 = vmatpush1.bf16.msra.mxu0 %v3805
    %4211 = vmatprep.subr.bf16.mxu0 %v3814
    %4212 = vmatpush1.bf16.msra.mxu0 %v3813
    %4213 = vmatprep.subr.bf16.mxu0 %v3822
    %4214 = vmatpush1.bf16.msra.mxu0 %v3821
    %4215 = vmatprep.subr.bf16.mxu0 %v3830
    %4216 = vmatpush1.bf16.msra.mxu0 %v3829
    %4217 = vmatprep.subr.bf16.mxu0 %v3838
    %4218 = vmatpush1.bf16.msra.mxu0 %v3837
    %4219 = vmatprep.subr.bf16.mxu0 %v3846
    %4220 = vmatpush1.bf16.msra.mxu0 %v3845
    %4221 = vmatprep.subr.bf16.mxu0 %v3854
    %4222 = vmatpush1.bf16.msra.mxu0 %v3853
    %4223 = vmatprep.mubr.bf16.mxu0 %v3346
    %4224 = vmatmul.mubr.bf16.gmra.mrb[0].mxu0 %v3345
    %v4225 = vpop.f32.mrb[0].mxu0
    %v4226 = vadd.f32 %v4185, %v4225
    %v4227 = vpop.f32.mrb[0].mxu0
    %v4228 = vadd.f32 %v4187, %v4227
    %v4229 = vpop.f32.mrb[0].mxu0
    %v4230 = vpop.f32.mrb[0].mxu0
    %4231 = vdwg.mxu0
    %4232 = vmatprep.subr.bf16.mxu0 %v3352
    %4233 = vmatpush1.bf16.msra.mxu0 %v3351
    %4234 = vmatprep.subr.bf16.mxu0 %v3360
    %4235 = vmatpush1.bf16.msra.mxu0 %v3359
    %4236 = vmatprep.subr.bf16.mxu0 %v3368
    %4237 = vmatpush1.bf16.msra.mxu0 %v3367
    %4238 = vmatprep.subr.bf16.mxu0 %v3376
    %4239 = vmatpush1.bf16.msra.mxu0 %v3375
    %4240 = vmatprep.subr.bf16.mxu0 %v3384
    %4241 = vmatpush1.bf16.msra.mxu0 %v3383
    %4242 = vmatprep.subr.bf16.mxu0 %v3392
    %4243 = vmatpush1.bf16.msra.mxu0 %v3391
    %4244 = vmatprep.subr.bf16.mxu0 %v3400
    %4245 = vmatpush1.bf16.msra.mxu0 %v3399
    %4246 = vmatprep.subr.bf16.mxu0 %v3408
    %4247 = vmatpush1.bf16.msra.mxu0 %v3407
    %4248 = vmatprep.subr.bf16.mxu0 %v3416
    %4249 = vmatpush1.bf16.msra.mxu0 %v3415
    %4250 = vmatprep.subr.bf16.mxu0 %v3424
    %4251 = vmatpush1.bf16.msra.mxu0 %v3423
    %4252 = vmatprep.subr.bf16.mxu0 %v3432
    %4253 = vmatpush1.bf16.msra.mxu0 %v3431
    %4254 = vmatprep.subr.bf16.mxu0 %v3440
    %4255 = vmatpush1.bf16.msra.mxu0 %v3439
    %4256 = vmatprep.subr.bf16.mxu0 %v3448
    %4257 = vmatpush1.bf16.msra.mxu0 %v3447
    %4258 = vmatprep.subr.bf16.mxu0 %v3456
    %4259 = vmatpush1.bf16.msra.mxu0 %v3455
    %4260 = vmatprep.subr.bf16.mxu0 %v3464
    %4261 = vmatpush1.bf16.msra.mxu0 %v3463
    %4262 = vmatprep.subr.bf16.mxu0 %v3472
    %4263 = vmatpush1.bf16.msra.mxu0 %v3471
    %4264 = vmatprep.mubr.bf16.mxu0 %v3340
    %4265 = vmatmul.mubr.bf16.gmra.mrb[0].mxu0 %v3339
    %v4266 = vpop.f32.mrb[0].mxu0
    %v4267 = vadd.f32 %v3883, %v4266
    %v4268 = vpop.f32.mrb[0].mxu0
    %v4269 = vadd.f32 %v3887, %v4268
    %v4270 = vpop.f32.mrb[0].mxu0
    %v4271 = vpop.f32.mrb[0].mxu0
    %4272 = vdwg.mxu0
    %4273 = vmatprep.subr.bf16.mxu0 %v3480
    %4274 = vmatpush1.bf16.msra.mxu0 %v3479
    %4275 = vmatprep.subr.bf16.mxu0 %v3488
    %4276 = vmatpush1.bf16.msra.mxu0 %v3487
    %4277 = vmatprep.subr.bf16.mxu0 %v3496
    %4278 = vmatpush1.bf16.msra.mxu0 %v3495
    %4279 = vmatprep.subr.bf16.mxu0 %v3504
    %4280 = vmatpush1.bf16.msra.mxu0 %v3503
    %4281 = vmatprep.subr.bf16.mxu0 %v3512
    %4282 = vmatpush1.bf16.msra.mxu0 %v3511
    %4283 = vmatprep.subr.bf16.mxu0 %v3520
    %4284 = vmatpush1.bf16.msra.mxu0 %v3519
    %4285 = vmatprep.subr.bf16.mxu0 %v3528
    %4286 = vmatpush1.bf16.msra.mxu0 %v3527
    %4287 = vmatprep.subr.bf16.mxu0 %v3536
    %4288 = vmatpush1.bf16.msra.mxu0 %v3535
    %4289 = vmatprep.subr.bf16.mxu0 %v3544
    %4290 = vmatpush1.bf16.msra.mxu0 %v3543
    %4291 = vmatprep.subr.bf16.mxu0 %v3552
    %4292 = vmatpush1.bf16.msra.mxu0 %v3551
    %4293 = vmatprep.subr.bf16.mxu0 %v3560
    %4294 = vmatpush1.bf16.msra.mxu0 %v3559
    %4295 = vmatprep.subr.bf16.mxu0 %v3568
    %4296 = vmatpush1.bf16.msra.mxu0 %v3567
    %4297 = vmatprep.subr.bf16.mxu0 %v3576
    %4298 = vmatpush1.bf16.msra.mxu0 %v3575
    %4299 = vmatprep.subr.bf16.mxu0 %v3584
    %4300 = vmatpush1.bf16.msra.mxu0 %v3583
    %4301 = vmatprep.subr.bf16.mxu0 %v3592
    %4302 = vmatpush1.bf16.msra.mxu0 %v3591
    %4303 = vmatprep.subr.bf16.mxu0 %v3600
    %4304 = vmatpush1.bf16.msra.mxu0 %v3599
    %4305 = vmatprep.mubr.bf16.mxu0 %v3342
    %4306 = vmatmul.mubr.bf16.gmra.mrb[0].mxu0 %v3341
    %v4307 = vpop.f32.mrb[0].mxu0
    %v4308 = vadd.f32 %v4267, %v4307
    %v4309 = vpop.f32.mrb[0].mxu0
    %v4310 = vadd.f32 %v4269, %v4309
    %v4311 = vpop.f32.mrb[0].mxu0
    %v4312 = vpop.f32.mrb[0].mxu0
    %4313 = vdwg.mxu0
    %4314 = vmatprep.subr.bf16.mxu0 %v3608
    %4315 = vmatpush1.bf16.msra.mxu0 %v3607
    %4316 = vmatprep.subr.bf16.mxu0 %v3616
    %4317 = vmatpush1.bf16.msra.mxu0 %v3615
    %4318 = vmatprep.subr.bf16.mxu0 %v3624
    %4319 = vmatpush1.bf16.msra.mxu0 %v3623
    %4320 = vmatprep.subr.bf16.mxu0 %v3632
    %4321 = vmatpush1.bf16.msra.mxu0 %v3631
    %4322 = vmatprep.subr.bf16.mxu0 %v3640
    %4323 = vmatpush1.bf16.msra.mxu0 %v3639
    %4324 = vmatprep.subr.bf16.mxu0 %v3648
    %4325 = vmatpush1.bf16.msra.mxu0 %v3647
    %4326 = vmatprep.subr.bf16.mxu0 %v3656
    %4327 = vmatpush1.bf16.msra.mxu0 %v3655
    %4328 = vmatprep.subr.bf16.mxu0 %v3664
    %4329 = vmatpush1.bf16.msra.mxu0 %v3663
    %4330 = vmatprep.subr.bf16.mxu0 %v3672
    %4331 = vmatpush1.bf16.msra.mxu0 %v3671
    %4332 = vmatprep.subr.bf16.mxu0 %v3680
    %4333 = vmatpush1.bf16.msra.mxu0 %v3679
    %4334 = vmatprep.subr.bf16.mxu0 %v3688
    %4335 = vmatpush1.bf16.msra.mxu0 %v3687
    %4336 = vmatprep.subr.bf16.mxu0 %v3696
    %4337 = vmatpush1.bf16.msra.mxu0 %v3695
    %4338 = vmatprep.subr.bf16.mxu0 %v3704
    %4339 = vmatpush1.bf16.msra.mxu0 %v3703
    %4340 = vmatprep.subr.bf16.mxu0 %v3712
    %4341 = vmatpush1.bf16.msra.mxu0 %v3711
    %4342 = vmatprep.subr.bf16.mxu0 %v3720
    %4343 = vmatpush1.bf16.msra.mxu0 %v3719
    %4344 = vmatprep.subr.bf16.mxu0 %v3728
    %4345 = vmatpush1.bf16.msra.mxu0 %v3727
    %4346 = vmatprep.mubr.bf16.mxu0 %v3344
    %4347 = vmatmul.mubr.bf16.gmra.mrb[0].mxu0 %v3343
    %v4348 = vpop.f32.mrb[0].mxu0
    %v4349 = vadd.f32 %v4308, %v4348
    %v4350 = vpop.f32.mrb[0].mxu0
    %v4351 = vadd.f32 %v4310, %v4350
    %v4352 = vpop.f32.mrb[0].mxu0
    %v4353 = vpop.f32.mrb[0].mxu0
    %4354 = vdwg.mxu0
    %4355 = vmatprep.subr.bf16.mxu0 %v3736
    %4356 = vmatpush1.bf16.msra.mxu0 %v3735
    %4357 = vmatprep.subr.bf16.mxu0 %v3744
    %4358 = vmatpush1.bf16.msra.mxu0 %v3743
    %4359 = vmatprep.subr.bf16.mxu0 %v3752
    %4360 = vmatpush1.bf16.msra.mxu0 %v3751
    %4361 = vmatprep.subr.bf16.mxu0 %v3760
    %4362 = vmatpush1.bf16.msra.mxu0 %v3759
    %4363 = vmatprep.subr.bf16.mxu0 %v3768
    %4364 = vmatpush1.bf16.msra.mxu0 %v3767
    %4365 = vmatprep.subr.bf16.mxu0 %v3776
    %4366 = vmatpush1.bf16.msra.mxu0 %v3775
    %4367 = vmatprep.subr.bf16.mxu0 %v3784
    %4368 = vmatpush1.bf16.msra.mxu0 %v3783
    %4369 = vmatprep.subr.bf16.mxu0 %v3792
    %4370 = vmatpush1.bf16.msra.mxu0 %v3791
    %4371 = vmatprep.subr.bf16.mxu0 %v3800
    %4372 = vmatpush1.bf16.msra.mxu0 %v3799
    %4373 = vmatprep.subr.bf16.mxu0 %v3808
    %4374 = vmatpush1.bf16.msra.mxu0 %v3807
    %4375 = vmatprep.subr.bf16.mxu0 %v3816
    %4376 = vmatpush1.bf16.msra.mxu0 %v3815
    %4377 = vmatprep.subr.bf16.mxu0 %v3824
    %4378 = vmatpush1.bf16.msra.mxu0 %v3823
    %4379 = vmatprep.subr.bf16.mxu0 %v3832
    %4380 = vmatpush1.bf16.msra.mxu0 %v3831
    %4381 = vmatprep.subr.bf16.mxu0 %v3840
    %4382 = vmatpush1.bf16.msra.mxu0 %v3839
    %4383 = vmatprep.subr.bf16.mxu0 %v3848
    %4384 = vmatpush1.bf16.msra.mxu0 %v3847
    %4385 = vmatprep.subr.bf16.mxu0 %v3856
    %4386 = vmatpush1.bf16.msra.mxu0 %v3855
    %4387 = vmatprep.mubr.bf16.mxu0 %v3346
    %4388 = vmatmul.mubr.bf16.gmra.mrb[0].mxu0 %v3345
    %v4389 = vpop.f32.mrb[0].mxu0
    %v4390 = vadd.f32 %v4349, %v4389
    %v4391 = vpop.f32.mrb[0].mxu0
    %v4392 = vadd.f32 %v4351, %v4391
    %v4393 = vpop.f32.mrb[0].mxu0
    %v4394 = vpop.f32.mrb[0].mxu0
    %4395 = vdwg.mxu0
    %4396 = vmatprep.subr.bf16.mxu0 %v3354
    %4397 = vmatpush1.bf16.msra.mxu0 %v3353
    %4398 = vmatprep.subr.bf16.mxu0 %v3362
    %4399 = vmatpush1.bf16.msra.mxu0 %v3361
    %4400 = vmatprep.subr.bf16.mxu0 %v3370
    %4401 = vmatpush1.bf16.msra.mxu0 %v3369
    %4402 = vmatprep.subr.bf16.mxu0 %v3378
    %4403 = vmatpush1.bf16.msra.mxu0 %v3377
    %4404 = vmatprep.subr.bf16.mxu0 %v3386
    %4405 = vmatpush1.bf16.msra.mxu0 %v3385
    %4406 = vmatprep.subr.bf16.mxu0 %v3394
    %4407 = vmatpush1.bf16.msra.mxu0 %v3393
    %4408 = vmatprep.subr.bf16.mxu0 %v3402
    %4409 = vmatpush1.bf16.msra.mxu0 %v3401
    %4410 = vmatprep.subr.bf16.mxu0 %v3410
    %4411 = vmatpush1.bf16.msra.mxu0 %v3409
    %4412 = vmatprep.subr.bf16.mxu0 %v3418
    %4413 = vmatpush1.bf16.msra.mxu0 %v3417
    %4414 = vmatprep.subr.bf16.mxu0 %v3426
    %4415 = vmatpush1.bf16.msra.mxu0 %v3425
    %4416 = vmatprep.subr.bf16.mxu0 %v3434
    %4417 = vmatpush1.bf16.msra.mxu0 %v3433
    %4418 = vmatprep.subr.bf16.mxu0 %v3442
    %4419 = vmatpush1.bf16.msra.mxu0 %v3441
    %4420 = vmatprep.subr.bf16.mxu0 %v3450
    %4421 = vmatpush1.bf16.msra.mxu0 %v3449
    %4422 = vmatprep.subr.bf16.mxu0 %v3458
    %4423 = vmatpush1.bf16.msra.mxu0 %v3457
    %4424 = vmatprep.subr.bf16.mxu0 %v3466
    %4425 = vmatpush1.bf16.msra.mxu0 %v3465
    %4426 = vmatprep.subr.bf16.mxu0 %v3474
    %4427 = vmatpush1.bf16.msra.mxu0 %v3473
    %4428 = vmatprep.mubr.bf16.mxu0 %v3340
    %4429 = vmatmul.mubr.bf16.gmra.mrb[0].mxu0 %v3339
    %v4430 = vpop.f32.mrb[0].mxu0
    %v4431 = vadd.f32 %v3891, %v4430
    %v4432 = vpop.f32.mrb[0].mxu0
    %v4433 = vadd.f32 %v3895, %v4432
    %v4434 = vpop.f32.mrb[0].mxu0
    %v4435 = vpop.f32.mrb[0].mxu0
    %4436 = vdwg.mxu0
    %4437 = vmatprep.subr.bf16.mxu0 %v3482
    %4438 = vmatpush1.bf16.msra.mxu0 %v3481
    %4439 = vmatprep.subr.bf16.mxu0 %v3490
    %4440 = vmatpush1.bf16.msra.mxu0 %v3489
    %4441 = vmatprep.subr.bf16.mxu0 %v3498
    %4442 = vmatpush1.bf16.msra.mxu0 %v3497
    %4443 = vmatprep.subr.bf16.mxu0 %v3506
    %4444 = vmatpush1.bf16.msra.mxu0 %v3505
    %4445 = vmatprep.subr.bf16.mxu0 %v3514
    %4446 = vmatpush1.bf16.msra.mxu0 %v3513
    %4447 = vmatprep.subr.bf16.mxu0 %v3522
    %4448 = vmatpush1.bf16.msra.mxu0 %v3521
    %4449 = vmatprep.subr.bf16.mxu0 %v3530
    %4450 = vmatpush1.bf16.msra.mxu0 %v3529
    %4451 = vmatprep.subr.bf16.mxu0 %v3538
    %4452 = vmatpush1.bf16.msra.mxu0 %v3537
    %4453 = vmatprep.subr.bf16.mxu0 %v3546
    %4454 = vmatpush1.bf16.msra.mxu0 %v3545
    %4455 = vmatprep.subr.bf16.mxu0 %v3554
    %4456 = vmatpush1.bf16.msra.mxu0 %v3553
    %4457 = vmatprep.subr.bf16.mxu0 %v3562
    %4458 = vmatpush1.bf16.msra.mxu0 %v3561
    %4459 = vmatprep.subr.bf16.mxu0 %v3570
    %4460 = vmatpush1.bf16.msra.mxu0 %v3569
    %4461 = vmatprep.subr.bf16.mxu0 %v3578
    %4462 = vmatpush1.bf16.msra.mxu0 %v3577
    %4463 = vmatprep.subr.bf16.mxu0 %v3586
    %4464 = vmatpush1.bf16.msra.mxu0 %v3585
    %4465 = vmatprep.subr.bf16.mxu0 %v3594
    %4466 = vmatpush1.bf16.msra.mxu0 %v3593
    %4467 = vmatprep.subr.bf16.mxu0 %v3602
    %4468 = vmatpush1.bf16.msra.mxu0 %v3601
    %4469 = vmatprep.mubr.bf16.mxu0 %v3342
    %4470 = vmatmul.mubr.bf16.gmra.mrb[0].mxu0 %v3341
    %v4471 = vpop.f32.mrb[0].mxu0
    %v4472 = vadd.f32 %v4431, %v4471
    %v4473 = vpop.f32.mrb[0].mxu0
    %v4474 = vadd.f32 %v4433, %v4473
    %v4475 = vpop.f32.mrb[0].mxu0
    %v4476 = vpop.f32.mrb[0].mxu0
    %4477 = vdwg.mxu0
    %4478 = vmatprep.subr.bf16.mxu0 %v3610
    %4479 = vmatpush1.bf16.msra.mxu0 %v3609
    %4480 = vmatprep.subr.bf16.mxu0 %v3618
    %4481 = vmatpush1.bf16.msra.mxu0 %v3617
    %4482 = vmatprep.subr.bf16.mxu0 %v3626
    %4483 = vmatpush1.bf16.msra.mxu0 %v3625
    %4484 = vmatprep.subr.bf16.mxu0 %v3634
    %4485 = vmatpush1.bf16.msra.mxu0 %v3633
    %4486 = vmatprep.subr.bf16.mxu0 %v3642
    %4487 = vmatpush1.bf16.msra.mxu0 %v3641
    %4488 = vmatprep.subr.bf16.mxu0 %v3650
    %4489 = vmatpush1.bf16.msra.mxu0 %v3649
    %4490 = vmatprep.subr.bf16.mxu0 %v3658
    %4491 = vmatpush1.bf16.msra.mxu0 %v3657
    %4492 = vmatprep.subr.bf16.mxu0 %v3666
    %4493 = vmatpush1.bf16.msra.mxu0 %v3665
    %4494 = vmatprep.subr.bf16.mxu0 %v3674
    %4495 = vmatpush1.bf16.msra.mxu0 %v3673
    %4496 = vmatprep.subr.bf16.mxu0 %v3682
    %4497 = vmatpush1.bf16.msra.mxu0 %v3681
    %4498 = vmatprep.subr.bf16.mxu0 %v3690
    %4499 = vmatpush1.bf16.msra.mxu0 %v3689
    %4500 = vmatprep.subr.bf16.mxu0 %v3698
    %4501 = vmatpush1.bf16.msra.mxu0 %v3697
    %4502 = vmatprep.subr.bf16.mxu0 %v3706
    %4503 = vmatpush1.bf16.msra.mxu0 %v3705
    %4504 = vmatprep.subr.bf16.mxu0 %v3714
    %4505 = vmatpush1.bf16.msra.mxu0 %v3713
    %4506 = vmatprep.subr.bf16.mxu0 %v3722
    %4507 = vmatpush1.bf16.msra.mxu0 %v3721
    %4508 = vmatprep.subr.bf16.mxu0 %v3730
    %4509 = vmatpush1.bf16.msra.mxu0 %v3729
    %4510 = vmatprep.mubr.bf16.mxu0 %v3344
    %4511 = vmatmul.mubr.bf16.gmra.mrb[0].mxu0 %v3343
    %v4512 = vpop.f32.mrb[0].mxu0
    %v4513 = vadd.f32 %v4472, %v4512
    %v4514 = vpop.f32.mrb[0].mxu0
    %v4515 = vadd.f32 %v4474, %v4514
    %v4516 = vpop.f32.mrb[0].mxu0
    %v4517 = vpop.f32.mrb[0].mxu0
    %4518 = vdwg.mxu0
    %4519 = vmatprep.subr.bf16.mxu0 %v3738
    %4520 = vmatpush1.bf16.msra.mxu0 %v3737
    %4521 = vmatprep.subr.bf16.mxu0 %v3746
    %4522 = vmatpush1.bf16.msra.mxu0 %v3745
    %4523 = vmatprep.subr.bf16.mxu0 %v3754
    %4524 = vmatpush1.bf16.msra.mxu0 %v3753
    %4525 = vmatprep.subr.bf16.mxu0 %v3762
    %4526 = vmatpush1.bf16.msra.mxu0 %v3761
    %4527 = vmatprep.subr.bf16.mxu0 %v3770
    %4528 = vmatpush1.bf16.msra.mxu0 %v3769
    %4529 = vmatprep.subr.bf16.mxu0 %v3778
    %4530 = vmatpush1.bf16.msra.mxu0 %v3777
    %4531 = vmatprep.subr.bf16.mxu0 %v3786
    %4532 = vmatpush1.bf16.msra.mxu0 %v3785
    %4533 = vmatprep.subr.bf16.mxu0 %v3794
    %4534 = vmatpush1.bf16.msra.mxu0 %v3793
    %4535 = vmatprep.subr.bf16.mxu0 %v3802
    %4536 = vmatpush1.bf16.msra.mxu0 %v3801
    %4537 = vmatprep.subr.bf16.mxu0 %v3810
    %4538 = vmatpush1.bf16.msra.mxu0 %v3809
    %4539 = vmatprep.subr.bf16.mxu0 %v3818
    %4540 = vmatpush1.bf16.msra.mxu0 %v3817
    %4541 = vmatprep.subr.bf16.mxu0 %v3826
    %4542 = vmatpush1.bf16.msra.mxu0 %v3825
    %4543 = vmatprep.subr.bf16.mxu0 %v3834
    %4544 = vmatpush1.bf16.msra.mxu0 %v3833
    %4545 = vmatprep.subr.bf16.mxu0 %v3842
    %4546 = vmatpush1.bf16.msra.mxu0 %v3841
    %4547 = vmatprep.subr.bf16.mxu0 %v3850
    %4548 = vmatpush1.bf16.msra.mxu0 %v3849
    %4549 = vmatprep.subr.bf16.mxu0 %v3858
    %4550 = vmatpush1.bf16.msra.mxu0 %v3857
    %4551 = vmatprep.mubr.bf16.mxu0 %v3346
    %4552 = vmatmul.mubr.bf16.gmra.mrb[0].mxu0 %v3345
    %v4553 = vpop.f32.mrb[0].mxu0
    %v4554 = vadd.f32 %v4513, %v4553
    %v4555 = vpop.f32.mrb[0].mxu0
    %v4556 = vadd.f32 %v4515, %v4555
    %v4557 = vpop.f32.mrb[0].mxu0
    %v4558 = vpop.f32.mrb[0].mxu0
    %4559 = vdwg.mxu0
    %v4560 = vmax.f32 %v4062, 0.0
    %v4561 = vmax.f32 %v4064, 0.0
    %v4562 = vmax.f32 %v4226, 0.0
    %v4563 = vmax.f32 %v4228, 0.0
    %v4564 = vmax.f32 %v4390, 0.0
    %v4565 = vmax.f32 %v4392, 0.0
    %v4566 = vmax.f32 %v4554, 0.0
    %v4567 = vmax.f32 %v4556, 0.0
    %s4568 = smul.u32 %s873, 2
    %s4569 = sshll.u32 %s4568, 4
    %4570 = dma.done %s170, %s4569
    %v4571 = vpack.c.bf16 %v4560, %v4560
    %v4572 = vpack.c.bf16 %v4561, %v4561
    %v4573 = vpack.c.bf16 %v4562, %v4562
    %v4574 = vpack.c.bf16 %v4563, %v4563
    %v4575 = vpack.c.bf16 %v4564, %v4564
    %v4576 = vpack.c.bf16 %v4565, %v4565
    %v4577 = vpack.c.bf16 %v4566, %v4566
    %v4578 = vpack.c.bf16 %v4567, %v4567
    %v4579 = vld [vmem:[#allocation6] sm:$0xff]
    %v4580 = vld [vmem:[#allocation6 + $0x8] sm:$0xff]
    %v4581 = vld [vmem:[#allocation6 + $0x10] sm:$0xff]
    %v4582 = vld [vmem:[#allocation6 + $0x18] sm:$0xff]
    %v4583 = vld [vmem:[#allocation6 + $0x20] sm:$0xff]
    %v4584 = vld [vmem:[#allocation6 + $0x28] sm:$0xff]
    %v4585 = vld [vmem:[#allocation6 + $0x30] sm:$0xff]
    %v4586 = vld [vmem:[#allocation6 + $0x38] sm:$0xff]
    %v4587 = vld [vmem:[#allocation6 + $0x40] sm:$0xff]
    %v4588 = vld [vmem:[#allocation6 + $0x48] sm:$0xff]
    %v4589 = vld [vmem:[#allocation6 + $0x50] sm:$0xff]
    %v4590 = vld [vmem:[#allocation6 + $0x58] sm:$0xff]
    %v4591 = vld [vmem:[#allocation6 + $0x60] sm:$0xff]
    %v4592 = vld [vmem:[#allocation6 + $0x68] sm:$0xff]
    %v4593 = vld [vmem:[#allocation6 + $0x70] sm:$0xff]
    %v4594 = vld [vmem:[#allocation6 + $0x78] sm:$0xff]
    %v4595 = vld [vmem:[#allocation6 + $0x80] sm:$0xff]
    %v4596 = vld [vmem:[#allocation6 + $0x88] sm:$0xff]
    %v4597 = vld [vmem:[#allocation6 + $0x90] sm:$0xff]
    %v4598 = vld [vmem:[#allocation6 + $0x98] sm:$0xff]
    %v4599 = vld [vmem:[#allocation6 + $0xa0] sm:$0xff]
    %v4600 = vld [vmem:[#allocation6 + $0xa8] sm:$0xff]
    %v4601 = vld [vmem:[#allocation6 + $0xb0] sm:$0xff]
    %v4602 = vld [vmem:[#allocation6 + $0xb8] sm:$0xff]
    %v4603 = vld [vmem:[#allocation6 + $0xc0] sm:$0xff]
    %v4604 = vld [vmem:[#allocation6 + $0xc8] sm:$0xff]
    %v4605 = vld [vmem:[#allocation6 + $0xd0] sm:$0xff]
    %v4606 = vld [vmem:[#allocation6 + $0xd8] sm:$0xff]
    %v4607 = vld [vmem:[#allocation6 + $0xe0] sm:$0xff]
    %v4608 = vld [vmem:[#allocation6 + $0xe8] sm:$0xff]
    %v4609 = vld [vmem:[#allocation6 + $0xf0] sm:$0xff]
    %v4610 = vld [vmem:[#allocation6 + $0xf8] sm:$0xff]
    %v4611 = vld [vmem:[#allocation6 + $0x100] sm:$0xff]
    %v4612 = vld [vmem:[#allocation6 + $0x108] sm:$0xff]
    %v4613 = vld [vmem:[#allocation6 + $0x110] sm:$0xff]
    %v4614 = vld [vmem:[#allocation6 + $0x118] sm:$0xff]
    %v4615 = vld [vmem:[#allocation6 + $0x120] sm:$0xff]
    %v4616 = vld [vmem:[#allocation6 + $0x128] sm:$0xff]
    %v4617 = vld [vmem:[#allocation6 + $0x130] sm:$0xff]
    %v4618 = vld [vmem:[#allocation6 + $0x138] sm:$0xff]
    %v4619 = vld [vmem:[#allocation6 + $0x140] sm:$0xff]
    %v4620 = vld [vmem:[#allocation6 + $0x148] sm:$0xff]
    %v4621 = vld [vmem:[#allocation6 + $0x150] sm:$0xff]
    %v4622 = vld [vmem:[#allocation6 + $0x158] sm:$0xff]
    %v4623 = vld [vmem:[#allocation6 + $0x160] sm:$0xff]
    %v4624 = vld [vmem:[#allocation6 + $0x168] sm:$0xff]
    %v4625 = vld [vmem:[#allocation6 + $0x170] sm:$0xff]
    %v4626 = vld [vmem:[#allocation6 + $0x178] sm:$0xff]
    %v4627 = vld [vmem:[#allocation6 + $0x180] sm:$0xff]
    %v4628 = vld [vmem:[#allocation6 + $0x188] sm:$0xff]
    %v4629 = vld [vmem:[#allocation6 + $0x190] sm:$0xff]
    %v4630 = vld [vmem:[#allocation6 + $0x198] sm:$0xff]
    %v4631 = vld [vmem:[#allocation6 + $0x1a0] sm:$0xff]
    %v4632 = vld [vmem:[#allocation6 + $0x1a8] sm:$0xff]
    %v4633 = vld [vmem:[#allocation6 + $0x1b0] sm:$0xff]
    %v4634 = vld [vmem:[#allocation6 + $0x1b8] sm:$0xff]
    %v4635 = vld [vmem:[#allocation6 + $0x1c0] sm:$0xff]
    %v4636 = vld [vmem:[#allocation6 + $0x1c8] sm:$0xff]
    %v4637 = vld [vmem:[#allocation6 + $0x1d0] sm:$0xff]
    %v4638 = vld [vmem:[#allocation6 + $0x1d8] sm:$0xff]
    %v4639 = vld [vmem:[#allocation6 + $0x1e0] sm:$0xff]
    %v4640 = vld [vmem:[#allocation6 + $0x1e8] sm:$0xff]
    %v4641 = vld [vmem:[#allocation6 + $0x1f0] sm:$0xff]
    %v4642 = vld [vmem:[#allocation6 + $0x1f8] sm:$0xff]
    %v4643 = vld [vmem:[#allocation6 + $0x200] sm:$0xff]
    %v4644 = vld [vmem:[#allocation6 + $0x208] sm:$0xff]
    %v4645 = vld [vmem:[#allocation6 + $0x210] sm:$0xff]
    %v4646 = vld [vmem:[#allocation6 + $0x218] sm:$0xff]
    %v4647 = vld [vmem:[#allocation6 + $0x220] sm:$0xff]
    %v4648 = vld [vmem:[#allocation6 + $0x228] sm:$0xff]
    %v4649 = vld [vmem:[#allocation6 + $0x230] sm:$0xff]
    %v4650 = vld [vmem:[#allocation6 + $0x238] sm:$0xff]
    %v4651 = vld [vmem:[#allocation6 + $0x240] sm:$0xff]
    %v4652 = vld [vmem:[#allocation6 + $0x248] sm:$0xff]
    %v4653 = vld [vmem:[#allocation6 + $0x250] sm:$0xff]
    %v4654 = vld [vmem:[#allocation6 + $0x258] sm:$0xff]
    %v4655 = vld [vmem:[#allocation6 + $0x260] sm:$0xff]
    %v4656 = vld [vmem:[#allocation6 + $0x268] sm:$0xff]
    %v4657 = vld [vmem:[#allocation6 + $0x270] sm:$0xff]
    %v4658 = vld [vmem:[#allocation6 + $0x278] sm:$0xff]
    %v4659 = vld [vmem:[#allocation6 + $0x280] sm:$0xff]
    %v4660 = vld [vmem:[#allocation6 + $0x288] sm:$0xff]
    %v4661 = vld [vmem:[#allocation6 + $0x290] sm:$0xff]
    %v4662 = vld [vmem:[#allocation6 + $0x298] sm:$0xff]
    %v4663 = vld [vmem:[#allocation6 + $0x2a0] sm:$0xff]
    %v4664 = vld [vmem:[#allocation6 + $0x2a8] sm:$0xff]
    %v4665 = vld [vmem:[#allocation6 + $0x2b0] sm:$0xff]
    %v4666 = vld [vmem:[#allocation6 + $0x2b8] sm:$0xff]
    %v4667 = vld [vmem:[#allocation6 + $0x2c0] sm:$0xff]
    %v4668 = vld [vmem:[#allocation6 + $0x2c8] sm:$0xff]
    %v4669 = vld [vmem:[#allocation6 + $0x2d0] sm:$0xff]
    %v4670 = vld [vmem:[#allocation6 + $0x2d8] sm:$0xff]
    %v4671 = vld [vmem:[#allocation6 + $0x2e0] sm:$0xff]
    %v4672 = vld [vmem:[#allocation6 + $0x2e8] sm:$0xff]
    %v4673 = vld [vmem:[#allocation6 + $0x2f0] sm:$0xff]
    %v4674 = vld [vmem:[#allocation6 + $0x2f8] sm:$0xff]
    %v4675 = vld [vmem:[#allocation6 + $0x300] sm:$0xff]
    %v4676 = vld [vmem:[#allocation6 + $0x308] sm:$0xff]
    %v4677 = vld [vmem:[#allocation6 + $0x310] sm:$0xff]
    %v4678 = vld [vmem:[#allocation6 + $0x318] sm:$0xff]
    %v4679 = vld [vmem:[#allocation6 + $0x320] sm:$0xff]
    %v4680 = vld [vmem:[#allocation6 + $0x328] sm:$0xff]
    %v4681 = vld [vmem:[#allocation6 + $0x330] sm:$0xff]
    %v4682 = vld [vmem:[#allocation6 + $0x338] sm:$0xff]
    %v4683 = vld [vmem:[#allocation6 + $0x340] sm:$0xff]
    %v4684 = vld [vmem:[#allocation6 + $0x348] sm:$0xff]
    %v4685 = vld [vmem:[#allocation6 + $0x350] sm:$0xff]
    %v4686 = vld [vmem:[#allocation6 + $0x358] sm:$0xff]
    %v4687 = vld [vmem:[#allocation6 + $0x360] sm:$0xff]
    %v4688 = vld [vmem:[#allocation6 + $0x368] sm:$0xff]
    %v4689 = vld [vmem:[#allocation6 + $0x370] sm:$0xff]
    %v4690 = vld [vmem:[#allocation6 + $0x378] sm:$0xff]
    %v4691 = vld [vmem:[#allocation6 + $0x380] sm:$0xff]
    %v4692 = vld [vmem:[#allocation6 + $0x388] sm:$0xff]
    %v4693 = vld [vmem:[#allocation6 + $0x390] sm:$0xff]
    %v4694 = vld [vmem:[#allocation6 + $0x398] sm:$0xff]
    %v4695 = vld [vmem:[#allocation6 + $0x3a0] sm:$0xff]
    %v4696 = vld [vmem:[#allocation6 + $0x3a8] sm:$0xff]
    %v4697 = vld [vmem:[#allocation6 + $0x3b0] sm:$0xff]
    %v4698 = vld [vmem:[#allocation6 + $0x3b8] sm:$0xff]
    %v4699 = vld [vmem:[#allocation6 + $0x3c0] sm:$0xff]
    %v4700 = vld [vmem:[#allocation6 + $0x3c8] sm:$0xff]
    %v4701 = vld [vmem:[#allocation6 + $0x3d0] sm:$0xff]
    %v4702 = vld [vmem:[#allocation6 + $0x3d8] sm:$0xff]
    %v4703 = vld [vmem:[#allocation6 + $0x3e0] sm:$0xff]
    %v4704 = vld [vmem:[#allocation6 + $0x3e8] sm:$0xff]
    %v4705 = vld [vmem:[#allocation6 + $0x3f0] sm:$0xff]
    %v4706 = vld [vmem:[#allocation6 + $0x3f8] sm:$0xff]
    %s4707 = scalar_lea.vmem [#allocation9], 4
    %v4708 = vld [vmem:[%s4707] ss:$8 sm:$0x3]
    %v4710 = vlaneseq
    %v4711 = vshrl.u32 %v4710, 7
    %v4712 = vsub.s32 0, %v4711
    %v4713 = vrot.slane %v4708, %v4712
    %v4714 = vlaneseq
    %v4715 = vshrl.u32 %v4714, 7
    %v4716 = vsub.s32 1, %v4715
    %v4717 = vrot.slane %v4708, %v4716
    %4720 = vmatprep.subr.bf16.mxu0 %v4580
    %4721 = vmatpush1.bf16.msra.mxu0 %v4579
    %4722 = vmatprep.subr.bf16.mxu0 %v4582
    %4723 = vmatpush1.bf16.msra.mxu0 %v4581
    %4724 = vmatprep.subr.bf16.mxu0 %v4584
    %4725 = vmatpush1.bf16.msra.mxu0 %v4583
    %4726 = vmatprep.subr.bf16.mxu0 %v4586
    %4727 = vmatpush1.bf16.msra.mxu0 %v4585
    %4728 = vmatprep.subr.bf16.mxu0 %v4588
    %4729 = vmatpush1.bf16.msra.mxu0 %v4587
    %4730 = vmatprep.subr.bf16.mxu0 %v4590
    %4731 = vmatpush1.bf16.msra.mxu0 %v4589
    %4732 = vmatprep.subr.bf16.mxu0 %v4592
    %4733 = vmatpush1.bf16.msra.mxu0 %v4591
    %4734 = vmatprep.subr.bf16.mxu0 %v4594
    %4735 = vmatpush1.bf16.msra.mxu0 %v4593
    %4736 = vmatprep.subr.bf16.mxu0 %v4596
    %4737 = vmatpush1.bf16.msra.mxu0 %v4595
    %4738 = vmatprep.subr.bf16.mxu0 %v4598
    %4739 = vmatpush1.bf16.msra.mxu0 %v4597
    %4740 = vmatprep.subr.bf16.mxu0 %v4600
    %4741 = vmatpush1.bf16.msra.mxu0 %v4599
    %4742 = vmatprep.subr.bf16.mxu0 %v4602
    %4743 = vmatpush1.bf16.msra.mxu0 %v4601
    %4744 = vmatprep.subr.bf16.mxu0 %v4604
    %4745 = vmatpush1.bf16.msra.mxu0 %v4603
    %4746 = vmatprep.subr.bf16.mxu0 %v4606
    %4747 = vmatpush1.bf16.msra.mxu0 %v4605
    %4748 = vmatprep.subr.bf16.mxu0 %v4608
    %4749 = vmatpush1.bf16.msra.mxu0 %v4607
    %4750 = vmatprep.subr.bf16.mxu0 %v4610
    %4751 = vmatpush1.bf16.msra.mxu0 %v4609
    %4752 = vmatprep.mubr.bf16.mxu0 %v4572
    %4753 = vmatmul.mubr.bf16.gmra.mrb[0].mxu0 %v4571
    %v4754 = vpop.f32.mrb[0].mxu0
    %v4755 = vadd.f32 %v4713, %v4754
    %v4756 = vpop.f32.mrb[0].mxu0
    %v4757 = vadd.f32 %v4717, %v4756
    %v4758 = vpop.f32.mrb[0].mxu0
    %v4759 = vpop.f32.mrb[0].mxu0
    %4760 = vdwg.mxu0
    %4761 = vmatprep.subr.bf16.mxu0 %v4612
    %4762 = vmatpush1.bf16.msra.mxu0 %v4611
    %4763 = vmatprep.subr.bf16.mxu0 %v4614
    %4764 = vmatpush1.bf16.msra.mxu0 %v4613
    %4765 = vmatprep.subr.bf16.mxu0 %v4616
    %4766 = vmatpush1.bf16.msra.mxu0 %v4615
    %4767 = vmatprep.subr.bf16.mxu0 %v4618
    %4768 = vmatpush1.bf16.msra.mxu0 %v4617
    %4769 = vmatprep.subr.bf16.mxu0 %v4620
    %4770 = vmatpush1.bf16.msra.mxu0 %v4619
    %4771 = vmatprep.subr.bf16.mxu0 %v4622
    %4772 = vmatpush1.bf16.msra.mxu0 %v4621
    %4773 = vmatprep.subr.bf16.mxu0 %v4624
    %4774 = vmatpush1.bf16.msra.mxu0 %v4623
    %4775 = vmatprep.subr.bf16.mxu0 %v4626
    %4776 = vmatpush1.bf16.msra.mxu0 %v4625
    %4777 = vmatprep.subr.bf16.mxu0 %v4628
    %4778 = vmatpush1.bf16.msra.mxu0 %v4627
    %4779 = vmatprep.subr.bf16.mxu0 %v4630
    %4780 = vmatpush1.bf16.msra.mxu0 %v4629
    %4781 = vmatprep.subr.bf16.mxu0 %v4632
    %4782 = vmatpush1.bf16.msra.mxu0 %v4631
    %4783 = vmatprep.subr.bf16.mxu0 %v4634
    %4784 = vmatpush1.bf16.msra.mxu0 %v4633
    %4785 = vmatprep.subr.bf16.mxu0 %v4636
    %4786 = vmatpush1.bf16.msra.mxu0 %v4635
    %4787 = vmatprep.subr.bf16.mxu0 %v4638
    %4788 = vmatpush1.bf16.msra.mxu0 %v4637
    %4789 = vmatprep.subr.bf16.mxu0 %v4640
    %4790 = vmatpush1.bf16.msra.mxu0 %v4639
    %4791 = vmatprep.subr.bf16.mxu0 %v4642
    %4792 = vmatpush1.bf16.msra.mxu0 %v4641
    %4793 = vmatprep.mubr.bf16.mxu0 %v4574
    %4794 = vmatmul.mubr.bf16.gmra.mrb[0].mxu0 %v4573
    %v4795 = vpop.f32.mrb[0].mxu0
    %v4796 = vadd.f32 %v4755, %v4795
    %v4797 = vpop.f32.mrb[0].mxu0
    %v4798 = vadd.f32 %v4757, %v4797
    %v4799 = vpop.f32.mrb[0].mxu0
    %v4800 = vpop.f32.mrb[0].mxu0
    %4801 = vdwg.mxu0
    %4802 = vmatprep.subr.bf16.mxu0 %v4644
    %4803 = vmatpush1.bf16.msra.mxu0 %v4643
    %4804 = vmatprep.subr.bf16.mxu0 %v4646
    %4805 = vmatpush1.bf16.msra.mxu0 %v4645
    %4806 = vmatprep.subr.bf16.mxu0 %v4648
    %4807 = vmatpush1.bf16.msra.mxu0 %v4647
    %4808 = vmatprep.subr.bf16.mxu0 %v4650
    %4809 = vmatpush1.bf16.msra.mxu0 %v4649
    %4810 = vmatprep.subr.bf16.mxu0 %v4652
    %4811 = vmatpush1.bf16.msra.mxu0 %v4651
    %4812 = vmatprep.subr.bf16.mxu0 %v4654
    %4813 = vmatpush1.bf16.msra.mxu0 %v4653
    %4814 = vmatprep.subr.bf16.mxu0 %v4656
    %4815 = vmatpush1.bf16.msra.mxu0 %v4655
    %4816 = vmatprep.subr.bf16.mxu0 %v4658
    %4817 = vmatpush1.bf16.msra.mxu0 %v4657
    %4818 = vmatprep.subr.bf16.mxu0 %v4660
    %4819 = vmatpush1.bf16.msra.mxu0 %v4659
    %4820 = vmatprep.subr.bf16.mxu0 %v4662
    %4821 = vmatpush1.bf16.msra.mxu0 %v4661
    %4822 = vmatprep.subr.bf16.mxu0 %v4664
    %4823 = vmatpush1.bf16.msra.mxu0 %v4663
    %4824 = vmatprep.subr.bf16.mxu0 %v4666
    %4825 = vmatpush1.bf16.msra.mxu0 %v4665
    %4826 = vmatprep.subr.bf16.mxu0 %v4668
    %4827 = vmatpush1.bf16.msra.mxu0 %v4667
    %4828 = vmatprep.subr.bf16.mxu0 %v4670
    %4829 = vmatpush1.bf16.msra.mxu0 %v4669
    %4830 = vmatprep.subr.bf16.mxu0 %v4672
    %4831 = vmatpush1.bf16.msra.mxu0 %v4671
    %4832 = vmatprep.subr.bf16.mxu0 %v4674
    %4833 = vmatpush1.bf16.msra.mxu0 %v4673
    %4834 = vmatprep.mubr.bf16.mxu0 %v4576
    %4835 = vmatmul.mubr.bf16.gmra.mrb[0].mxu0 %v4575
    %v4836 = vpop.f32.mrb[0].mxu0
    %v4837 = vadd.f32 %v4796, %v4836
    %v4838 = vpop.f32.mrb[0].mxu0
    %v4839 = vadd.f32 %v4798, %v4838
    %v4840 = vpop.f32.mrb[0].mxu0
    %v4841 = vpop.f32.mrb[0].mxu0
    %4842 = vdwg.mxu0
    %4843 = vmatprep.subr.bf16.mxu0 %v4676
    %4844 = vmatpush1.bf16.msra.mxu0 %v4675
    %4845 = vmatprep.subr.bf16.mxu0 %v4678
    %4846 = vmatpush1.bf16.msra.mxu0 %v4677
    %4847 = vmatprep.subr.bf16.mxu0 %v4680
    %4848 = vmatpush1.bf16.msra.mxu0 %v4679
    %4849 = vmatprep.subr.bf16.mxu0 %v4682
    %4850 = vmatpush1.bf16.msra.mxu0 %v4681
    %4851 = vmatprep.subr.bf16.mxu0 %v4684
    %4852 = vmatpush1.bf16.msra.mxu0 %v4683
    %4853 = vmatprep.subr.bf16.mxu0 %v4686
    %4854 = vmatpush1.bf16.msra.mxu0 %v4685
    %4855 = vmatprep.subr.bf16.mxu0 %v4688
    %4856 = vmatpush1.bf16.msra.mxu0 %v4687
    %4857 = vmatprep.subr.bf16.mxu0 %v4690
    %4858 = vmatpush1.bf16.msra.mxu0 %v4689
    %4859 = vmatprep.subr.bf16.mxu0 %v4692
    %4860 = vmatpush1.bf16.msra.mxu0 %v4691
    %4861 = vmatprep.subr.bf16.mxu0 %v4694
    %4862 = vmatpush1.bf16.msra.mxu0 %v4693
    %4863 = vmatprep.subr.bf16.mxu0 %v4696
    %4864 = vmatpush1.bf16.msra.mxu0 %v4695
    %4865 = vmatprep.subr.bf16.mxu0 %v4698
    %4866 = vmatpush1.bf16.msra.mxu0 %v4697
    %4867 = vmatprep.subr.bf16.mxu0 %v4700
    %4868 = vmatpush1.bf16.msra.mxu0 %v4699
    %4869 = vmatprep.subr.bf16.mxu0 %v4702
    %4870 = vmatpush1.bf16.msra.mxu0 %v4701
    %4871 = vmatprep.subr.bf16.mxu0 %v4704
    %4872 = vmatpush1.bf16.msra.mxu0 %v4703
    %4873 = vmatprep.subr.bf16.mxu0 %v4706
    %4874 = vmatpush1.bf16.msra.mxu0 %v4705
    %4875 = vmatprep.mubr.bf16.mxu0 %v4578
    %4876 = vmatmul.mubr.bf16.gmra.mrb[0].mxu0 %v4577
    %v4877 = vpop.f32.mrb[0].mxu0
    %v4878 = vadd.f32 %v4837, %v4877
    %v4879 = vpop.f32.mrb[0].mxu0
    %v4880 = vadd.f32 %v4839, %v4879
    %v4881 = vpop.f32.mrb[0].mxu0
    %v4882 = vpop.f32.mrb[0].mxu0
    %4883 = vdwg.mxu0
    %v4884 = vmax.f32 %v4878, 0.0
    %v4885 = vmax.f32 %v4880, 0.0
    %s4886 = smul.u32 4, 32
    %s4887 = smul.u32 %s4886, 1
    %s4888 = sshll.u32 %s4887, 4
    %4889 = dma.done %s205, %s4888
    %v4890 = vpack.c.bf16 %v4884, %v4884
    %v4891 = vpack.c.bf16 %v4885, %v4885
    %v4892 = vld [vmem:[#allocation7] sm:$0xff]
    %v4893 = vld [vmem:[#allocation7 + $0x8] sm:$0xff]
    %v4894 = vld [vmem:[#allocation7 + $0x10] sm:$0xff]
    %v4895 = vld [vmem:[#allocation7 + $0x18] sm:$0xff]
    %v4896 = vld [vmem:[#allocation7 + $0x20] sm:$0xff]
    %v4897 = vld [vmem:[#allocation7 + $0x28] sm:$0xff]
    %v4898 = vld [vmem:[#allocation7 + $0x30] sm:$0xff]
    %v4899 = vld [vmem:[#allocation7 + $0x38] sm:$0xff]
    %v4900 = vld [vmem:[#allocation7 + $0x40] sm:$0xff]
    %v4901 = vld [vmem:[#allocation7 + $0x48] sm:$0xff]
    %v4902 = vld [vmem:[#allocation7 + $0x50] sm:$0xff]
    %v4903 = vld [vmem:[#allocation7 + $0x58] sm:$0xff]
    %v4904 = vld [vmem:[#allocation7 + $0x60] sm:$0xff]
    %v4905 = vld [vmem:[#allocation7 + $0x68] sm:$0xff]
    %v4906 = vld [vmem:[#allocation7 + $0x70] sm:$0xff]
    %v4907 = vld [vmem:[#allocation7 + $0x78] sm:$0xff]
    %v4908 = vld [vmem:[#allocation9 + $0x5] ss:$0 sm:$0xff]
    %4909 = vmatprep.subr.bf16.mxu0 0
    %4910 = vmatpush1.bf16.msra.mxu0 %v4892
    %4911 = vmatprep.subr.bf16.mxu0 0
    %4912 = vmatpush1.bf16.msra.mxu0 %v4893
    %4913 = vmatprep.subr.bf16.mxu0 0
    %4914 = vmatpush1.bf16.msra.mxu0 %v4894
    %4915 = vmatprep.subr.bf16.mxu0 0
    %4916 = vmatpush1.bf16.msra.mxu0 %v4895
    %4917 = vmatprep.subr.bf16.mxu0 0
    %4918 = vmatpush1.bf16.msra.mxu0 %v4896
    %4919 = vmatprep.subr.bf16.mxu0 0
    %4920 = vmatpush1.bf16.msra.mxu0 %v4897
    %4921 = vmatprep.subr.bf16.mxu0 0
    %4922 = vmatpush1.bf16.msra.mxu0 %v4898
    %4923 = vmatprep.subr.bf16.mxu0 0
    %4924 = vmatpush1.bf16.msra.mxu0 %v4899
    %4925 = vmatprep.subr.bf16.mxu0 0
    %4926 = vmatpush1.bf16.msra.mxu0 %v4900
    %4927 = vmatprep.subr.bf16.mxu0 0
    %4928 = vmatpush1.bf16.msra.mxu0 %v4901
    %4929 = vmatprep.subr.bf16.mxu0 0
    %4930 = vmatpush1.bf16.msra.mxu0 %v4902
    %4931 = vmatprep.subr.bf16.mxu0 0
    %4932 = vmatpush1.bf16.msra.mxu0 %v4903
    %4933 = vmatprep.subr.bf16.mxu0 0
    %4934 = vmatpush1.bf16.msra.mxu0 %v4904
    %4935 = vmatprep.subr.bf16.mxu0 0
    %4936 = vmatpush1.bf16.msra.mxu0 %v4905
    %4937 = vmatprep.subr.bf16.mxu0 0
    %4938 = vmatpush1.bf16.msra.mxu0 %v4906
    %4939 = vmatprep.subr.bf16.mxu0 0
    %4940 = vmatpush1.bf16.msra.mxu0 %v4907
    %4941 = vmatprep.mubr.bf16.mxu0 %v4891
    %4942 = vmatmul.mubr.bf16.gmra.mrb[0].mxu0 %v4890
    %v4943 = vpop.f32.mrb[0].mxu0
    %v4944 = vadd.f32 %v4908, %v4943
    %v4945 = vpop.f32.mrb[0].mxu0
    %v4946 = vpop.f32.mrb[0].mxu0
    %v4947 = vpop.f32.mrb[0].mxu0
    %4948 = vdwg.mxu0
    %4949 = vst [vmem:[%s8] sm:$0xff] %v4944
    // Predicated region
    $region18: #{zolf_forward.1} parent=1 // pred_check
      _
    $region19: #{zolf_forward.1} parent=1 // pred_check_branch
      %4951 = sbr.rel (0) target = $region21
    $region20: #{zolf_forward.1} parent=1 // pred_region
      _
    $region21: #{zolf_forward.1} parent=1 // pred_fallthru
      _
    // Predicated region
    $region22: #{zolf_forward.1} parent=1 // pred_check
      _
    $region23: #{zolf_forward.1} parent=1 // pred_check_branch
      %4953 = sbr.rel (0) target = $region25
    $region24: #{zolf_forward.1} parent=1 // pred_region
      _
    $region25: #{zolf_forward.1} parent=1 // pred_fallthru
      _
    %4954 = vsyncpa [#allocation10], 1
  %4955 = vsyncmov [#allocation8]
  %s4956 = vpop.sfrf %4955
  %p4957 = scmp.eq.s32.totalorder %s4956, 0
  %p4958 = pneg %p4957
  %4960 = shalt.err (%p4958)
  %s4961 = scalar_lea.sflag [#allocation8], 1
  %4962 = vsyncmov %s4961
  %s4963 = vpop.sfrf %4962
  %p4964 = scmp.eq.s32.totalorder %s4963, 0
  %p4965 = pneg %p4964
  %4967 = shalt.err (%p4965)
  %s4968 = scalar_lea.sflag [#allocation8], 2
  %4969 = vsyncmov %s4968
  %s4970 = vpop.sfrf %4969
  %p4971 = scmp.eq.s32.totalorder %s4970, 0
  %p4972 = pneg %p4971
  %4974 = shalt.err (%p4972)
  %s4975 = scalar_lea.sflag [#allocation8], 3
  %4976 = vsyncmov %s4975
  %s4977 = vpop.sfrf %4976
  %p4978 = scmp.eq.s32.totalorder %s4977, 0
  %p4979 = pneg %p4978
  %4981 = shalt.err (%p4979)
  %s4982 = scalar_lea.sflag [#allocation8], 4
  %4983 = vsyncmov %s4982
  %s4984 = vpop.sfrf %4983
  %p4985 = scmp.eq.s32.totalorder %s4984, 0
  %p4986 = pneg %p4985
  %4988 = shalt.err (%p4986)
  %s4989 = scalar_lea.sflag [#allocation8], 5
  %4990 = vsyncmov %s4989
  %s4991 = vpop.sfrf %4990
  %p4992 = scmp.eq.s32.totalorder %s4991, 0
  %p4993 = pneg %p4992
  %4995 = shalt.err (%p4993)

</llo_original>
